<compile_context>
chip_gen: v7x
topology: tpu7x:2x2x1
jax: 0.10.0
libtpu: 0.0.40
codegen_flags: <defaults>
</compile_context>

<pallas_src>
import functools

import jax
import jax.numpy as jnp
import numpy as np
from jax import lax
from jax.experimental import pallas as pl
from jax.experimental.pallas import tpu as pltpu


# ----------------------------------------------------------------------------
# Kernel 1: fused QKV projection + one-time head split.
# ----------------------------------------------------------------------------
def _qkv_proj_kernel(num_heads, head_dim,
                     x_ref, wqkv_ref, bqkv_ref, q_ref, k_ref, v_ref):
    H, d = num_heads, head_dim
    C = H * d
    x = x_ref[...].astype(wqkv_ref.dtype)            # bf16 MXU inputs
    qkv = jnp.dot(x, wqkv_ref[...],
                  preferred_element_type=jnp.float32) + bqkv_ref[...]
    # One-time layout plumbing: head h occupies contiguous columns [h*d,(h+1)*d).
    for h in range(H):
        q_ref[h] = qkv[:, h * d:(h + 1) * d].astype(q_ref.dtype)
        k_ref[h] = qkv[:, C + h * d:C + (h + 1) * d].astype(k_ref.dtype)
        v_ref[h] = qkv[:, 2 * C + h * d:2 * C + (h + 1) * d].astype(v_ref.dtype)


# ----------------------------------------------------------------------------
# Kernel 2: per (query-tile i, key-tile j) attention scores, head-softmax,
# lane-dense attention-weight store, row-sum accumulation over key tiles, and
# (on the last key tile) weighted aggregation + 2-layer MLP.
# ----------------------------------------------------------------------------
def _gat_attn_kernel(n_valid, n_pad, tile_k,
                     q_ref, k_ref, v_ref, rel_ref,
                     w1_ref, b1_ref, w2_ref, b2_ref,
                     attn_ref, out_ref,
                     rowsum_ref):
    j = pl.program_id(1)
    nj = pl.num_programs(1)

    @pl.when(j == 0)
    def _init():
        rowsum_ref[...] = jnp.zeros_like(rowsum_ref)

    # Batched per-head scores: one MXU contraction for all heads (bf16 in,
    # f32 accumulation).  scores[h, n, m] = <q_h[n], k_h[m]> + rel[h, n, m]
    s = jnp.einsum('hqd,hkd->hqk', q_ref[...], k_ref[...],
                   preferred_element_type=jnp.float32)          # [H, tq, tk]
    s = s + rel_ref[...]

    # Softmax over the HEAD axis: elementwise over the (tq, tk) tile (the
    # reduction runs over the leading axis -> pure VPU work, no cross-lane XLU).
    m = jnp.max(s, axis=0, keepdims=True)                       # [1, tq, tk]
    p = jnp.exp(s - m)                                          # [H, tq, tk]
    inv = pl.reciprocal(jnp.sum(p, axis=0, keepdims=True), approx=True)
    a = p * inv                                                 # attn weights

    # Lane-dense store (last dim tile_k is a 128-multiple -> unmasked vst).
    attn_ref[...] = a.astype(attn_ref.dtype)

    # Accumulate per-head row sums over key tiles; mask padded key columns.
    if n_valid != n_pad:                                        # static branch
        col = lax.broadcasted_iota(jnp.int32, (1, 1, tile_k), 2) + j * tile_k
        a = jnp.where(col < n_valid, a, 0.0)
    rowsum_ref[...] += jnp.sum(a, axis=2, keepdims=True)        # [H, tq, 1]

    # Finalize on the last key tile: aggregate with v of the QUERY node
    # (as in the reference module) and apply the 2-layer MLP.
    @pl.when(j == nj - 1)
    def _finalize():
        att = jnp.sum(rowsum_ref[...] * v_ref[...], axis=0)     # [tq, d] f32
        h1 = jnp.dot(att.astype(w1_ref.dtype), w1_ref[...],
                     preferred_element_type=jnp.float32) + b1_ref[...]
        h1 = jnp.maximum(h1, 0.0)
        out = jnp.dot(h1.astype(w2_ref.dtype), w2_ref[...],
                      preferred_element_type=jnp.float32) + b2_ref[...]
        out_ref[...] = out.astype(out_ref.dtype)


# ----------------------------------------------------------------------------
# One-time parameter prep (hoisted out of the per-call forward path).
# ----------------------------------------------------------------------------
def prepare_gat_params(params, num_heads, compute_dtype=jnp.bfloat16):
    """Permute projection columns to head-major, fuse QKV, pre-cast to bf16."""
    Wq, bq, Wk, bk, Wv, bv, W1, b1, W2, b2 = params
    C = Wq.shape[0]
    H = num_heads
    d = C // H
    # PyTorch's .view(N, d, H) maps linear column i*H + h -> (head h, chan i);
    # reorder so head h occupies the contiguous column slice [h*d, (h+1)*d).
    perm = (np.arange(d)[None, :] * H + np.arange(H)[:, None]).reshape(-1)

    wqkv = jnp.concatenate(
        [Wq.T[:, perm], Wk.T[:, perm], Wv.T[:, perm]], axis=1)      # [Cin, 3C]
    bqkv = jnp.concatenate([bq[perm], bk[perm], bv[perm]]).reshape(1, 3 * C)

    return {
        "wqkv": wqkv.astype(compute_dtype),
        "bqkv": bqkv.astype(jnp.float32),
        "w1": W1.T.astype(compute_dtype),            # [d, C]
        "b1": b1.reshape(1, C).astype(jnp.float32),
        "w2": W2.T.astype(compute_dtype),            # [C, C]
        "b2": b2.reshape(1, C).astype(jnp.float32),
    }


# ----------------------------------------------------------------------------
# Forward wrapper.
# ----------------------------------------------------------------------------
def gat_layer_pallas(vertex_features, relative_encoding, prepared, num_heads,
                     *, tile_n=128, attn_dtype=jnp.float32,
                     compute_dtype=jnp.bfloat16, attn_head_major=False):
    """GATLayer forward.

    vertex_features:   [N, C_in] f32
    relative_encoding: [N, N, H] f32
    Returns (output [N, C] f32, attention_weights).

    Attention weights are [N, N, H] by default (matches the PyTorch module).
    Set attn_head_major=True to get the kernel-native lane-dense [H, N, N]
    layout and save one HBM transpose pass over the largest output.
    """
    assert tile_n % 128 == 0
    N, C_in = vertex_features.shape
    threeC = prepared["wqkv"].shape[1]
    C = threeC // 3
    H = num_heads
    d = C // H
    assert C % H == 0

    n_pad = int(np.ceil(N / tile_n)) * tile_n
    n_tiles = n_pad // tile_n

    x = vertex_features
    if n_pad != N:
        x = jnp.pad(x, ((0, n_pad - N), (0, 0)))

    # TODO(synk): have the upstream RSE module emit [H, N, N] directly so this
    # transpose (an extra HBM pass over an O(H*N^2) input) disappears.
    rel = jnp.transpose(relative_encoding, (2, 0, 1))                # [H, N, N]
    if n_pad != N:
        rel = jnp.pad(rel, ((0, 0), (0, n_pad - N), (0, n_pad - N)))

    # --- Kernel 1: fused QKV projection + head split ------------------------
    q, k, v = pl.pallas_call(
        functools.partial(_qkv_proj_kernel, H, d),
        out_shape=(
            jax.ShapeDtypeStruct((H, n_pad, d), compute_dtype),      # q
            jax.ShapeDtypeStruct((H, n_pad, d), compute_dtype),      # k
            jax.ShapeDtypeStruct((H, n_pad, d), jnp.float32),        # v
        ),
        grid_spec=pltpu.PrefetchScalarGridSpec(
            num_scalar_prefetch=0,
            grid=(n_tiles,),
            in_specs=[
                pl.BlockSpec((tile_n, C_in), lambda i: (i, 0)),
                pl.BlockSpec((C_in, threeC), lambda i: (0, 0)),
                pl.BlockSpec((1, threeC), lambda i: (0, 0)),
            ],
            out_specs=[
                pl.BlockSpec((H, tile_n, d), lambda i: (0, i, 0)),
                pl.BlockSpec((H, tile_n, d), lambda i: (0, i, 0)),
                pl.BlockSpec((H, tile_n, d), lambda i: (0, i, 0)),
            ],
        ),
        compiler_params=pltpu.CompilerParams(
            dimension_semantics=("parallel",),
            vmem_limit_bytes=32 * 1024 * 1024,
        ),
    )(x, prepared["wqkv"], prepared["bqkv"])

    # --- Kernel 2: tiled attention + head softmax + aggregation + MLP -------
    attn, out = pl.pallas_call(
        functools.partial(_gat_attn_kernel, N, n_pad, tile_n),
        out_shape=(
            jax.ShapeDtypeStruct((H, n_pad, n_pad), attn_dtype),     # attn
            jax.ShapeDtypeStruct((n_pad, C), jnp.float32),           # MLP out
        ),
        grid_spec=pltpu.PrefetchScalarGridSpec(
            num_scalar_prefetch=0,
            grid=(n_tiles, n_tiles),                 # (query tiles, key tiles)
            in_specs=[
                pl.BlockSpec((H, tile_n, d), lambda i, j: (0, i, 0)),   # q
                pl.BlockSpec((H, tile_n, d), lambda i, j: (0, j, 0)),   # k
                pl.BlockSpec((H, tile_n, d), lambda i, j: (0, i, 0)),   # v
                pl.BlockSpec((H, tile_n, tile_n), lambda i, j: (0, i, j)),  # rel
                pl.BlockSpec((d, C), lambda i, j: (0, 0)),              # w1
                pl.BlockSpec((1, C), lambda i, j: (0, 0)),              # b1
                pl.BlockSpec((C, C), lambda i, j: (0, 0)),              # w2
                pl.BlockSpec((1, C), lambda i, j: (0, 0)),              # b2
            ],
            out_specs=[
                pl.BlockSpec((H, tile_n, tile_n), lambda i, j: (0, i, j)),
                pl.BlockSpec((tile_n, C), lambda i, j: (i, 0)),
            ],
            scratch_shapes=[pltpu.VMEM((H, tile_n, 1), jnp.float32)],
        ),
        compiler_params=pltpu.CompilerParams(
            dimension_semantics=("parallel", "arbitrary"),
            vmem_limit_bytes=32 * 1024 * 1024,
        ),
    )(q, k, v, rel,
      prepared["w1"], prepared["b1"], prepared["w2"], prepared["b2"])

    if n_pad != N:
        out = out[:N]
        attn = attn[:, :N, :N]
    if not attn_head_major:
        # Match PyTorch layout [N, N, H]; done outside the kernel (one XLA
        # relayout pass).  Pass attn_head_major=True to skip it.
        attn = jnp.transpose(attn, (1, 2, 0))
    return out, attn


# ----------------------------------------------------------------------------
# Pure-JAX reference that mirrors the PyTorch forward exactly.
# ----------------------------------------------------------------------------
def gat_layer_reference(vertex_features, relative_encoding, params, num_heads):
    Wq, bq, Wk, bk, Wv, bv, W1, b1, W2, b2 = params
    N = vertex_features.shape[0]
    C = Wq.shape[0]
    H = num_heads
    d = C // H

    q = (vertex_features @ Wq.T + bq).reshape(N, d, H)
    k = (vertex_features @ Wk.T + bk).reshape(N, d, H)
    v = (vertex_features @ Wv.T + bv).reshape(N, d, H)

    k_t = jnp.transpose(k, (2, 1, 0))                 # [H, d, N]
    q_p = jnp.transpose(q, (2, 0, 1))                 # [H, N, d]
    scores = jnp.matmul(q_p, k_t)                     # [H, N, N]
    scores = jnp.transpose(scores, (1, 2, 0)) + relative_encoding   # [N, N, H]
    attn = jax.nn.softmax(scores, axis=-1)            # softmax over heads
    v_t = jnp.transpose(v, (0, 2, 1))                 # [N, H, d]
    att_out = jnp.matmul(attn, v_t).sum(axis=1)       # [N, d]
    h1 = jnp.maximum(att_out @ W1.T + b1, 0.0)
    out = h1 @ W2.T + b2
    return out, attn


if __name__ == "__main__":
    N = 8            # num_nodes
    C_IN = 16        # in_channels
    C_OUT = 32       # out_channels
    H = 4            # num_heads
    D = C_OUT // H   # per-head dim

    key = jax.random.PRNGKey(0)
    keys = jax.random.split(key, 12)

    def lin_init(kw, kb, fan_in, fan_out):
        bound = 1.0 / np.sqrt(fan_in)
        W = jax.random.uniform(kw, (fan_out, fan_in), jnp.float32, -bound, bound)
        b = jax.random.uniform(kb, (fan_out,), jnp.float32, -bound, bound)
        return W, b

    Wq, bq = lin_init(keys[0], keys[1], C_IN, C_OUT)
    Wk, bk = lin_init(keys[2], keys[3], C_IN, C_OUT)
    Wv, bv = lin_init(keys[4], keys[5], C_IN, C_OUT)
    W1, b1 = lin_init(keys[6], keys[7], D, C_OUT)
    W2, b2 = lin_init(keys[8], keys[9], C_OUT, C_OUT)
    params = (Wq, bq, Wk, bk, Wv, bv, W1, b1, W2, b2)

    vertex_features = jax.random.normal(keys[10], (N, C_IN), jnp.float32)
    relative_encoding = 0.1 * jax.random.normal(keys[11], (N, N, H), jnp.float32)

    # One-time parameter prep (hoisted out of the forward path).
    prepared = prepare_gat_params(params, H)

    fwd = jax.jit(functools.partial(gat_layer_pallas, num_heads=H))
    out, attn = fwd(vertex_features, relative_encoding, prepared)
    out, attn = jax.block_until_ready((out, attn))

    out_ref, attn_ref = gat_layer_reference(
        vertex_features, relative_encoding, params, H)

    np.testing.assert_allclose(np.asarray(attn), np.asarray(attn_ref),
                               rtol=2e-2, atol=2e-2)
    np.testing.assert_allclose(np.asarray(out), np.asarray(out_ref),
                               rtol=2e-2, atol=2e-2)

    print("KERNEL_OK")
</pallas_src>

<mosaic_0001>
module attributes {stable_mosaic.version = 11 : i64} {
  func.func @_qkv_proj_kernel(%arg0: i32, %arg1: memref<128x16xf32, #tpu.memory_space<vmem>>, %arg2: memref<16x96xbf16, #tpu.memory_space<vmem>>, %arg3: memref<1x96xf32, #tpu.memory_space<vmem>>, %arg4: memref<4x128x8xbf16, #tpu.memory_space<vmem>>, %arg5: memref<4x128x8xbf16, #tpu.memory_space<vmem>>, %arg6: memref<4x128x8xf32, #tpu.memory_space<vmem>>) attributes {dimension_semantics = [#tpu.dimension_semantics<parallel>], iteration_bounds = array<i64: 1>, scalar_prefetch = 0 : i64, scratch_operands = 0 : i64, tpu.core_type = #tpu.core_type<tc>, window_params = [{transform_indices = @transform_0, window_bounds = array<i64: 128, 16>}, {pipeline_mode = #tpu.pipeline_mode<synchronous>, transform_indices = @transform_1, window_bounds = array<i64: 16, 96>}, {pipeline_mode = #tpu.pipeline_mode<synchronous>, transform_indices = @transform_2, window_bounds = array<i64: 1, 96>}, {transform_indices = @transform_3, window_bounds = array<i64: 4, 128, 8>}, {transform_indices = @transform_4, window_bounds = array<i64: 4, 128, 8>}, {transform_indices = @transform_5, window_bounds = array<i64: 4, 128, 8>}]} {
    %c0 = arith.constant 0 : index
    %c0_0 = arith.constant 0 : index
    %0 = vector.load %arg1[%c0, %c0_0] : memref<128x16xf32, #tpu.memory_space<vmem>>, vector<128x16xf32>
    %1 = arith.truncf %0 : vector<128x16xf32> to vector<128x16xbf16>
    %c0_1 = arith.constant 0 : index
    %c0_2 = arith.constant 0 : index
    %2 = vector.load %arg2[%c0_1, %c0_2] : memref<16x96xbf16, #tpu.memory_space<vmem>>, vector<16x96xbf16>
    %cst = arith.constant dense<0.000000e+00> : vector<128x96xf32>
    %3 = tpu.matmul %1, %2, %cst {dimension_numbers = #tpu.dot_dimension_numbers<[1], [0], [0], [1], [0, 0, 1, 1], [], []>} : vector<128x16xbf16>, vector<16x96xbf16>, vector<128x96xf32> -> vector<128x96xf32>
    %c0_3 = arith.constant 0 : index
    %c0_4 = arith.constant 0 : index
    %4 = vector.load %arg3[%c0_3, %c0_4] : memref<1x96xf32, #tpu.memory_space<vmem>>, vector<1x96xf32>
    %5 = vector.broadcast %4 : vector<1x96xf32> to vector<128x96xf32>
    %6 = arith.addf %3, %5 : vector<128x96xf32>
    %7 = vector.extract_strided_slice %6 {offsets = [0, 0], sizes = [128, 8], strides = [1, 1]} : vector<128x96xf32> to vector<128x8xf32>
    %8 = arith.truncf %7 : vector<128x8xf32> to vector<128x8xbf16>
    %c0_5 = arith.constant 0 : index
    %c0_6 = arith.constant 0 : index
    %c0_7 = arith.constant 0 : index
    %9 = vector.load %arg4[%c0_5, %c0_6, %c0_7] : memref<4x128x8xbf16, #tpu.memory_space<vmem>>, vector<1x128x8xbf16>
    %10 = vector.shape_cast %9 : vector<1x128x8xbf16> to vector<128x8xbf16>
    %11 = vector.shape_cast %8 : vector<128x8xbf16> to vector<1x128x8xbf16>
    tpu.vector_store %arg4[%c0_5, %c0_6, %c0_7], %11 {strides = array<i32>} : memref<4x128x8xbf16, #tpu.memory_space<vmem>>, vector<1x128x8xbf16>,
    %12 = vector.extract_strided_slice %6 {offsets = [0, 32], sizes = [128, 8], strides = [1, 1]} : vector<128x96xf32> to vector<128x8xf32>
    %13 = arith.truncf %12 : vector<128x8xf32> to vector<128x8xbf16>
    %c0_8 = arith.constant 0 : index
    %c0_9 = arith.constant 0 : index
    %c0_10 = arith.constant 0 : index
    %14 = vector.load %arg5[%c0_8, %c0_9, %c0_10] : memref<4x128x8xbf16, #tpu.memory_space<vmem>>, vector<1x128x8xbf16>
    %15 = vector.shape_cast %14 : vector<1x128x8xbf16> to vector<128x8xbf16>
    %16 = vector.shape_cast %13 : vector<128x8xbf16> to vector<1x128x8xbf16>
    tpu.vector_store %arg5[%c0_8, %c0_9, %c0_10], %16 {strides = array<i32>} : memref<4x128x8xbf16, #tpu.memory_space<vmem>>, vector<1x128x8xbf16>,
    %17 = vector.extract_strided_slice %6 {offsets = [0, 64], sizes = [128, 8], strides = [1, 1]} : vector<128x96xf32> to vector<128x8xf32>
    %c0_11 = arith.constant 0 : index
    %c0_12 = arith.constant 0 : index
    %c0_13 = arith.constant 0 : index
    %18 = vector.load %arg6[%c0_11, %c0_12, %c0_13] : memref<4x128x8xf32, #tpu.memory_space<vmem>>, vector<1x128x8xf32>
    %19 = vector.shape_cast %18 : vector<1x128x8xf32> to vector<128x8xf32>
    %20 = vector.shape_cast %17 : vector<128x8xf32> to vector<1x128x8xf32>
    tpu.vector_store %arg6[%c0_11, %c0_12, %c0_13], %20 {strides = array<i32>} : memref<4x128x8xf32, #tpu.memory_space<vmem>>, vector<1x128x8xf32>,
    %21 = vector.extract_strided_slice %6 {offsets = [0, 8], sizes = [128, 8], strides = [1, 1]} : vector<128x96xf32> to vector<128x8xf32>
    %22 = arith.truncf %21 : vector<128x8xf32> to vector<128x8xbf16>
    %c1 = arith.constant 1 : index
    %c0_14 = arith.constant 0 : index
    %c0_15 = arith.constant 0 : index
    %23 = vector.load %arg4[%c1, %c0_14, %c0_15] : memref<4x128x8xbf16, #tpu.memory_space<vmem>>, vector<1x128x8xbf16>
    %24 = vector.shape_cast %23 : vector<1x128x8xbf16> to vector<128x8xbf16>
    %25 = vector.shape_cast %22 : vector<128x8xbf16> to vector<1x128x8xbf16>
    tpu.vector_store %arg4[%c1, %c0_14, %c0_15], %25 {strides = array<i32>} : memref<4x128x8xbf16, #tpu.memory_space<vmem>>, vector<1x128x8xbf16>,
    %26 = vector.extract_strided_slice %6 {offsets = [0, 40], sizes = [128, 8], strides = [1, 1]} : vector<128x96xf32> to vector<128x8xf32>
    %27 = arith.truncf %26 : vector<128x8xf32> to vector<128x8xbf16>
    %c1_16 = arith.constant 1 : index
    %c0_17 = arith.constant 0 : index
    %c0_18 = arith.constant 0 : index
    %28 = vector.load %arg5[%c1_16, %c0_17, %c0_18] : memref<4x128x8xbf16, #tpu.memory_space<vmem>>, vector<1x128x8xbf16>
    %29 = vector.shape_cast %28 : vector<1x128x8xbf16> to vector<128x8xbf16>
    %30 = vector.shape_cast %27 : vector<128x8xbf16> to vector<1x128x8xbf16>
    tpu.vector_store %arg5[%c1_16, %c0_17, %c0_18], %30 {strides = array<i32>} : memref<4x128x8xbf16, #tpu.memory_space<vmem>>, vector<1x128x8xbf16>,
    %31 = vector.extract_strided_slice %6 {offsets = [0, 72], sizes = [128, 8], strides = [1, 1]} : vector<128x96xf32> to vector<128x8xf32>
    %c1_19 = arith.constant 1 : index
    %c0_20 = arith.constant 0 : index
    %c0_21 = arith.constant 0 : index
    %32 = vector.load %arg6[%c1_19, %c0_20, %c0_21] : memref<4x128x8xf32, #tpu.memory_space<vmem>>, vector<1x128x8xf32>
    %33 = vector.shape_cast %32 : vector<1x128x8xf32> to vector<128x8xf32>
    %34 = vector.shape_cast %31 : vector<128x8xf32> to vector<1x128x8xf32>
    tpu.vector_store %arg6[%c1_19, %c0_20, %c0_21], %34 {strides = array<i32>} : memref<4x128x8xf32, #tpu.memory_space<vmem>>, vector<1x128x8xf32>,
    %35 = vector.extract_strided_slice %6 {offsets = [0, 16], sizes = [128, 8], strides = [1, 1]} : vector<128x96xf32> to vector<128x8xf32>
    %36 = arith.truncf %35 : vector<128x8xf32> to vector<128x8xbf16>
    %c2 = arith.constant 2 : index
    %c0_22 = arith.constant 0 : index
    %c0_23 = arith.constant 0 : index
    %37 = vector.load %arg4[%c2, %c0_22, %c0_23] : memref<4x128x8xbf16, #tpu.memory_space<vmem>>, vector<1x128x8xbf16>
    %38 = vector.shape_cast %37 : vector<1x128x8xbf16> to vector<128x8xbf16>
    %39 = vector.shape_cast %36 : vector<128x8xbf16> to vector<1x128x8xbf16>
    tpu.vector_store %arg4[%c2, %c0_22, %c0_23], %39 {strides = array<i32>} : memref<4x128x8xbf16, #tpu.memory_space<vmem>>, vector<1x128x8xbf16>,
    %40 = vector.extract_strided_slice %6 {offsets = [0, 48], sizes = [128, 8], strides = [1, 1]} : vector<128x96xf32> to vector<128x8xf32>
    %41 = arith.truncf %40 : vector<128x8xf32> to vector<128x8xbf16>
    %c2_24 = arith.constant 2 : index
    %c0_25 = arith.constant 0 : index
    %c0_26 = arith.constant 0 : index
    %42 = vector.load %arg5[%c2_24, %c0_25, %c0_26] : memref<4x128x8xbf16, #tpu.memory_space<vmem>>, vector<1x128x8xbf16>
    %43 = vector.shape_cast %42 : vector<1x128x8xbf16> to vector<128x8xbf16>
    %44 = vector.shape_cast %41 : vector<128x8xbf16> to vector<1x128x8xbf16>
    tpu.vector_store %arg5[%c2_24, %c0_25, %c0_26], %44 {strides = array<i32>} : memref<4x128x8xbf16, #tpu.memory_space<vmem>>, vector<1x128x8xbf16>,
    %45 = vector.extract_strided_slice %6 {offsets = [0, 80], sizes = [128, 8], strides = [1, 1]} : vector<128x96xf32> to vector<128x8xf32>
    %c2_27 = arith.constant 2 : index
    %c0_28 = arith.constant 0 : index
    %c0_29 = arith.constant 0 : index
    %46 = vector.load %arg6[%c2_27, %c0_28, %c0_29] : memref<4x128x8xf32, #tpu.memory_space<vmem>>, vector<1x128x8xf32>
    %47 = vector.shape_cast %46 : vector<1x128x8xf32> to vector<128x8xf32>
    %48 = vector.shape_cast %45 : vector<128x8xf32> to vector<1x128x8xf32>
    tpu.vector_store %arg6[%c2_27, %c0_28, %c0_29], %48 {strides = array<i32>} : memref<4x128x8xf32, #tpu.memory_space<vmem>>, vector<1x128x8xf32>,
    %49 = vector.extract_strided_slice %6 {offsets = [0, 24], sizes = [128, 8], strides = [1, 1]} : vector<128x96xf32> to vector<128x8xf32>
    %50 = arith.truncf %49 : vector<128x8xf32> to vector<128x8xbf16>
    %c3 = arith.constant 3 : index
    %c0_30 = arith.constant 0 : index
    %c0_31 = arith.constant 0 : index
    %51 = vector.load %arg4[%c3, %c0_30, %c0_31] : memref<4x128x8xbf16, #tpu.memory_space<vmem>>, vector<1x128x8xbf16>
    %52 = vector.shape_cast %51 : vector<1x128x8xbf16> to vector<128x8xbf16>
    %53 = vector.shape_cast %50 : vector<128x8xbf16> to vector<1x128x8xbf16>
    tpu.vector_store %arg4[%c3, %c0_30, %c0_31], %53 {strides = array<i32>} : memref<4x128x8xbf16, #tpu.memory_space<vmem>>, vector<1x128x8xbf16>,
    %54 = vector.extract_strided_slice %6 {offsets = [0, 56], sizes = [128, 8], strides = [1, 1]} : vector<128x96xf32> to vector<128x8xf32>
    %55 = arith.truncf %54 : vector<128x8xf32> to vector<128x8xbf16>
    %c3_32 = arith.constant 3 : index
    %c0_33 = arith.constant 0 : index
    %c0_34 = arith.constant 0 : index
    %56 = vector.load %arg5[%c3_32, %c0_33, %c0_34] : memref<4x128x8xbf16, #tpu.memory_space<vmem>>, vector<1x128x8xbf16>
    %57 = vector.shape_cast %56 : vector<1x128x8xbf16> to vector<128x8xbf16>
    %58 = vector.shape_cast %55 : vector<128x8xbf16> to vector<1x128x8xbf16>
    tpu.vector_store %arg5[%c3_32, %c0_33, %c0_34], %58 {strides = array<i32>} : memref<4x128x8xbf16, #tpu.memory_space<vmem>>, vector<1x128x8xbf16>,
    %59 = vector.extract_strided_slice %6 {offsets = [0, 88], sizes = [128, 8], strides = [1, 1]} : vector<128x96xf32> to vector<128x8xf32>
    %c3_35 = arith.constant 3 : index
    %c0_36 = arith.constant 0 : index
    %c0_37 = arith.constant 0 : index
    %60 = vector.load %arg6[%c3_35, %c0_36, %c0_37] : memref<4x128x8xf32, #tpu.memory_space<vmem>>, vector<1x128x8xf32>
    %61 = vector.shape_cast %60 : vector<1x128x8xf32> to vector<128x8xf32>
    %62 = vector.shape_cast %59 : vector<128x8xf32> to vector<1x128x8xf32>
    tpu.vector_store %arg6[%c3_35, %c0_36, %c0_37], %62 {strides = array<i32>} : memref<4x128x8xf32, #tpu.memory_space<vmem>>, vector<1x128x8xf32>,
    return
  }
  func.func @transform_0(%arg0: i32) -> (i32, i32) {
    %c0_i32 = arith.constant 0 : i32
    %c0_i32_0 = arith.constant 0 : i32
    return %arg0, %c0_i32 : i32, i32
  }
  func.func @transform_1(%arg0: i32) -> (i32, i32) {
    %c0_i32 = arith.constant 0 : i32
    %c0_i32_0 = arith.constant 0 : i32
    %c0_i32_1 = arith.constant 0 : i32
    return %c0_i32, %c0_i32_0 : i32, i32
  }
  func.func @transform_2(%arg0: i32) -> (i32, i32) {
    %c0_i32 = arith.constant 0 : i32
    %c0_i32_0 = arith.constant 0 : i32
    %c0_i32_1 = arith.constant 0 : i32
    return %c0_i32, %c0_i32_0 : i32, i32
  }
  func.func @transform_3(%arg0: i32) -> (i32, i32, i32) {
    %c0_i32 = arith.constant 0 : i32
    %c0_i32_0 = arith.constant 0 : i32
    %c0_i32_1 = arith.constant 0 : i32
    return %c0_i32, %arg0, %c0_i32_0 : i32, i32, i32
  }
  func.func @transform_4(%arg0: i32) -> (i32, i32, i32) {
    %c0_i32 = arith.constant 0 : i32
    %c0_i32_0 = arith.constant 0 : i32
    %c0_i32_1 = arith.constant 0 : i32
    return %c0_i32, %arg0, %c0_i32_0 : i32, i32, i32
  }
  func.func @transform_5(%arg0: i32) -> (i32, i32, i32) {
    %c0_i32 = arith.constant 0 : i32
    %c0_i32_0 = arith.constant 0 : i32
    %c0_i32_1 = arith.constant 0 : i32
    return %c0_i32, %arg0, %c0_i32_0 : i32, i32, i32
  }
}

module attributes {stable_mosaic.version = 11 : i64} {
  func.func @_gat_attn_kernel(%arg0: i32, %arg1: i32, %arg2: memref<4x128x8xbf16, #tpu.memory_space<vmem>>, %arg3: memref<4x128x8xbf16, #tpu.memory_space<vmem>>, %arg4: memref<4x128x8xf32, #tpu.memory_space<vmem>>, %arg5: memref<4x128x128xf32, #tpu.memory_space<vmem>>, %arg6: memref<8x32xbf16, #tpu.memory_space<vmem>>, %arg7: memref<1x32xf32, #tpu.memory_space<vmem>>, %arg8: memref<32x32xbf16, #tpu.memory_space<vmem>>, %arg9: memref<1x32xf32, #tpu.memory_space<vmem>>, %arg10: memref<4x128x128xf32, #tpu.memory_space<vmem>>, %arg11: memref<128x32xf32, #tpu.memory_space<vmem>>, %arg12: memref<4x128x1xf32, #tpu.memory_space<vmem>>) attributes {dimension_semantics = [#tpu.dimension_semantics<parallel>, #tpu.dimension_semantics<arbitrary>], iteration_bounds = array<i64: 1, 1>, scalar_prefetch = 0 : i64, scratch_operands = 1 : i64, tpu.core_type = #tpu.core_type<tc>, window_params = [{transform_indices = @transform_0, window_bounds = array<i64: 4, 128, 8>}, {transform_indices = @transform_1, window_bounds = array<i64: 4, 128, 8>}, {transform_indices = @transform_2, window_bounds = array<i64: 4, 128, 8>}, {transform_indices = @transform_3, window_bounds = array<i64: 4, 128, 128>}, {pipeline_mode = #tpu.pipeline_mode<synchronous>, transform_indices = @transform_4, window_bounds = array<i64: 8, 32>}, {pipeline_mode = #tpu.pipeline_mode<synchronous>, transform_indices = @transform_5, window_bounds = array<i64: 1, 32>}, {pipeline_mode = #tpu.pipeline_mode<synchronous>, transform_indices = @transform_6, window_bounds = array<i64: 32, 32>}, {pipeline_mode = #tpu.pipeline_mode<synchronous>, transform_indices = @transform_7, window_bounds = array<i64: 1, 32>}, {transform_indices = @transform_8, window_bounds = array<i64: 4, 128, 128>}, {transform_indices = @transform_9, window_bounds = array<i64: 128, 32>}]} {
    %c0_i32 = arith.constant 0 : i32
    %0 = arith.cmpi eq, %arg1, %c0_i32 : i32
    %1 = arith.extui %0 : i1 to i32
    %c0_i32_0 = arith.constant 0 : i32
    %2 = arith.cmpi ne, %1, %c0_i32_0 : i32
    scf.if %2 {
      %cst_24 = arith.constant 0.000000e+00 : f32
      %37 = vector.broadcast %cst_24 : f32 to vector<4x128x1xf32>
      %c0_25 = arith.constant 0 : index
      %c0_26 = arith.constant 0 : index
      %c0_27 = arith.constant 0 : index
      %38 = vector.load %arg12[%c0_25, %c0_26, %c0_27] : memref<4x128x1xf32, #tpu.memory_space<vmem>>, vector<4x128x1xf32>
      tpu.vector_store %arg12[%c0_25, %c0_26, %c0_27], %37 {strides = array<i32>} : memref<4x128x1xf32, #tpu.memory_space<vmem>>, vector<4x128x1xf32>,
    } else {
    }
    %c0 = arith.constant 0 : index
    %c0_1 = arith.constant 0 : index
    %c0_2 = arith.constant 0 : index
    %3 = vector.load %arg2[%c0, %c0_1, %c0_2] : memref<4x128x8xbf16, #tpu.memory_space<vmem>>, vector<4x128x8xbf16>
    %c0_3 = arith.constant 0 : index
    %c0_4 = arith.constant 0 : index
    %c0_5 = arith.constant 0 : index
    %4 = vector.load %arg3[%c0_3, %c0_4, %c0_5] : memref<4x128x8xbf16, #tpu.memory_space<vmem>>, vector<4x128x8xbf16>
    "tpu.trace_start"() <{level = 10 : i32, message = "hqd,hkd->hqk"}> : () -> ()
    %cst = arith.constant dense<0.000000e+00> : vector<4x128x128xf32>
    %5 = tpu.matmul %3, %4, %cst {dimension_numbers = #tpu.dot_dimension_numbers<[2], [2], [1], [1], [0, 0, 0, 1, 1, 1], [0], [0]>} : vector<4x128x8xbf16>, vector<4x128x8xbf16>, vector<4x128x128xf32> -> vector<4x128x128xf32>
    "tpu.trace_stop"() : () -> ()
    %c0_6 = arith.constant 0 : index
    %c0_7 = arith.constant 0 : index
    %c0_8 = arith.constant 0 : index
    %6 = vector.load %arg5[%c0_6, %c0_7, %c0_8] : memref<4x128x128xf32, #tpu.memory_space<vmem>>, vector<4x128x128xf32>
    %7 = arith.addf %5, %6 : vector<4x128x128xf32>
    %cst_9 = arith.constant dense<0xFF800000> : vector<128x128xf32>
    %8 = vector.multi_reduction <maximumf>, %7, %cst_9 [0] : vector<4x128x128xf32> to vector<128x128xf32>
    %9 = vector.shape_cast %8 : vector<128x128xf32> to vector<1x128x128xf32>
    %10 = vector.broadcast %9 : vector<1x128x128xf32> to vector<4x128x128xf32>
    %11 = arith.subf %7, %10 : vector<4x128x128xf32>
    %12 = math.exp %11 : vector<4x128x128xf32>
    %cst_10 = arith.constant dense<0.000000e+00> : vector<128x128xf32>
    %13 = vector.multi_reduction <add>, %12, %cst_10 [0] : vector<4x128x128xf32> to vector<128x128xf32>
    %14 = vector.shape_cast %13 : vector<128x128xf32> to vector<1x128x128xf32>
    %15 = tpu.reciprocal %14 {approx = true} : vector<1x128x128xf32> -> vector<1x128x128xf32>
    %16 = vector.broadcast %15 : vector<1x128x128xf32> to vector<4x128x128xf32>
    %17 = arith.mulf %12, %16 : vector<4x128x128xf32>
    %c0_11 = arith.constant 0 : index
    %c0_12 = arith.constant 0 : index
    %c0_13 = arith.constant 0 : index
    %18 = vector.load %arg10[%c0_11, %c0_12, %c0_13] : memref<4x128x128xf32, #tpu.memory_space<vmem>>, vector<4x128x128xf32>
    tpu.vector_store %arg10[%c0_11, %c0_12, %c0_13], %17 {strides = array<i32>} : memref<4x128x128xf32, #tpu.memory_space<vmem>>, vector<4x128x128xf32>,
    %19 = tpu.iota {dimensions = array<i32: 2>} : vector<1x1x128xi32>
    %c128_i32 = arith.constant 128 : i32
    %20 = arith.muli %arg1, %c128_i32 : i32
    %21 = vector.broadcast %20 : i32 to vector<1x1x128xi32>
    %22 = arith.addi %19, %21 : vector<1x1x128xi32>
    %c8_i32 = arith.constant 8 : i32
    %23 = vector.broadcast %c8_i32 : i32 to vector<1x1x128xi32>
    %24 = arith.cmpi slt, %22, %23 : vector<1x1x128xi32>
    %cst_14 = arith.constant 0.000000e+00 : f32
    %25 = vector.shape_cast %24 : vector<1x1x128xi1> to vector<1x1x128xi1>
    %26 = vector.broadcast %25 : vector<1x1x128xi1> to vector<4x128x128xi1>
    %27 = vector.broadcast %cst_14 : f32 to vector<4x128x128xf32>
    %28 = arith.select %26, %17, %27 : vector<4x128x128xi1>, vector<4x128x128xf32>
    %c0_15 = arith.constant 0 : index
    %c0_16 = arith.constant 0 : index
    %c0_17 = arith.constant 0 : index
    %29 = vector.load %arg12[%c0_15, %c0_16, %c0_17] : memref<4x128x1xf32, #tpu.memory_space<vmem>>, vector<4x128x1xf32>
    %cst_18 = arith.constant dense<0.000000e+00> : vector<4x128xf32>
    %30 = vector.multi_reduction <add>, %28, %cst_18 [2] : vector<4x128x128xf32> to vector<4x128xf32>
    %31 = vector.shape_cast %30 : vector<4x128xf32> to vector<4x128x1xf32>
    %32 = arith.addf %29, %31 : vector<4x128x1xf32>
    %c0_19 = arith.constant 0 : index
    %c0_20 = arith.constant 0 : index
    %c0_21 = arith.constant 0 : index
    %33 = vector.load %arg12[%c0_19, %c0_20, %c0_21] : memref<4x128x1xf32, #tpu.memory_space<vmem>>, vector<4x128x1xf32>
    tpu.vector_store %arg12[%c0_19, %c0_20, %c0_21], %32 {strides = array<i32>} : memref<4x128x1xf32, #tpu.memory_space<vmem>>, vector<4x128x1xf32>,
    %c0_i32_22 = arith.constant 0 : i32
    %34 = arith.cmpi eq, %arg1, %c0_i32_22 : i32
    %35 = arith.extui %34 : i1 to i32
    %c0_i32_23 = arith.constant 0 : i32
    %36 = arith.cmpi ne, %35, %c0_i32_23 : i32
    scf.if %36 {
      %c0_24 = arith.constant 0 : index
      %c0_25 = arith.constant 0 : index
      %c0_26 = arith.constant 0 : index
      %37 = vector.load %arg12[%c0_24, %c0_25, %c0_26] : memref<4x128x1xf32, #tpu.memory_space<vmem>>, vector<4x128x1xf32>
      %c0_27 = arith.constant 0 : index
      %c0_28 = arith.constant 0 : index
      %c0_29 = arith.constant 0 : index
      %38 = vector.load %arg4[%c0_27, %c0_28, %c0_29] : memref<4x128x8xf32, #tpu.memory_space<vmem>>, vector<4x128x8xf32>
      %39 = vector.broadcast %37 : vector<4x128x1xf32> to vector<4x128x8xf32>
      %40 = arith.mulf %39, %38 : vector<4x128x8xf32>
      %cst_30 = arith.constant dense<0.000000e+00> : vector<128x8xf32>
      %41 = vector.multi_reduction <add>, %40, %cst_30 [0] : vector<4x128x8xf32> to vector<128x8xf32>
      %42 = arith.truncf %41 : vector<128x8xf32> to vector<128x8xbf16>
      %c0_31 = arith.constant 0 : index
      %c0_32 = arith.constant 0 : index
      %43 = vector.load %arg6[%c0_31, %c0_32] : memref<8x32xbf16, #tpu.memory_space<vmem>>, vector<8x32xbf16>
      %cst_33 = arith.constant dense<0.000000e+00> : vector<128x32xf32>
      %44 = tpu.matmul %42, %43, %cst_33 {dimension_numbers = #tpu.dot_dimension_numbers<[1], [0], [0], [1], [0, 0, 1, 1], [], []>} : vector<128x8xbf16>, vector<8x32xbf16>, vector<128x32xf32> -> vector<128x32xf32>
      %c0_34 = arith.constant 0 : index
      %c0_35 = arith.constant 0 : index
      %45 = vector.load %arg7[%c0_34, %c0_35] : memref<1x32xf32, #tpu.memory_space<vmem>>, vector<1x32xf32>
      %46 = vector.broadcast %45 : vector<1x32xf32> to vector<128x32xf32>
      %47 = arith.addf %44, %46 : vector<128x32xf32>
      %cst_36 = arith.constant 0.000000e+00 : f32
      %48 = vector.broadcast %cst_36 : f32 to vector<128x32xf32>
      %49 = arith.maximumf %47, %48 : vector<128x32xf32>
      %50 = arith.truncf %49 : vector<128x32xf32> to vector<128x32xbf16>
      %c0_37 = arith.constant 0 : index
      %c0_38 = arith.constant 0 : index
      %51 = vector.load %arg8[%c0_37, %c0_38] : memref<32x32xbf16, #tpu.memory_space<vmem>>, vector<32x32xbf16>
      %cst_39 = arith.constant dense<0.000000e+00> : vector<128x32xf32>
      %52 = tpu.matmul %50, %51, %cst_39 {dimension_numbers = #tpu.dot_dimension_numbers<[1], [0], [0], [1], [0, 0, 1, 1], [], []>} : vector<128x32xbf16>, vector<32x32xbf16>, vector<128x32xf32> -> vector<128x32xf32>
      %c0_40 = arith.constant 0 : index
      %c0_41 = arith.constant 0 : index
      %53 = vector.load %arg9[%c0_40, %c0_41] : memref<1x32xf32, #tpu.memory_space<vmem>>, vector<1x32xf32>
      %54 = vector.broadcast %53 : vector<1x32xf32> to vector<128x32xf32>
      %55 = arith.addf %52, %54 : vector<128x32xf32>
      %c0_42 = arith.constant 0 : index
      %c0_43 = arith.constant 0 : index
      %56 = vector.load %arg11[%c0_42, %c0_43] : memref<128x32xf32, #tpu.memory_space<vmem>>, vector<128x32xf32>
      tpu.vector_store %arg11[%c0_42, %c0_43], %55 {strides = array<i32>} : memref<128x32xf32, #tpu.memory_space<vmem>>, vector<128x32xf32>,
    } else {
    }
    return
  }
  func.func @transform_0(%arg0: i32, %arg1: i32) -> (i32, i32, i32) {
    %c0_i32 = arith.constant 0 : i32
    %c0_i32_0 = arith.constant 0 : i32
    %c0_i32_1 = arith.constant 0 : i32
    return %c0_i32, %arg0, %c0_i32_0 : i32, i32, i32
  }
  func.func @transform_1(%arg0: i32, %arg1: i32) -> (i32, i32, i32) {
    %c0_i32 = arith.constant 0 : i32
    %c0_i32_0 = arith.constant 0 : i32
    %c0_i32_1 = arith.constant 0 : i32
    return %c0_i32, %arg1, %c0_i32_0 : i32, i32, i32
  }
  func.func @transform_2(%arg0: i32, %arg1: i32) -> (i32, i32, i32) {
    %c0_i32 = arith.constant 0 : i32
    %c0_i32_0 = arith.constant 0 : i32
    %c0_i32_1 = arith.constant 0 : i32
    return %c0_i32, %arg0, %c0_i32_0 : i32, i32, i32
  }
  func.func @transform_3(%arg0: i32, %arg1: i32) -> (i32, i32, i32) {
    %c0_i32 = arith.constant 0 : i32
    %c0_i32_0 = arith.constant 0 : i32
    return %c0_i32, %arg0, %arg1 : i32, i32, i32
  }
  func.func @transform_4(%arg0: i32, %arg1: i32) -> (i32, i32) {
    %c0_i32 = arith.constant 0 : i32
    %c0_i32_0 = arith.constant 0 : i32
    %c0_i32_1 = arith.constant 0 : i32
    return %c0_i32, %c0_i32_0 : i32, i32
  }
  func.func @transform_5(%arg0: i32, %arg1: i32) -> (i32, i32) {
    %c0_i32 = arith.constant 0 : i32
    %c0_i32_0 = arith.constant 0 : i32
    %c0_i32_1 = arith.constant 0 : i32
    return %c0_i32, %c0_i32_0 : i32, i32
  }
  func.func @transform_6(%arg0: i32, %arg1: i32) -> (i32, i32) {
    %c0_i32 = arith.constant 0 : i32
    %c0_i32_0 = arith.constant 0 : i32
    %c0_i32_1 = arith.constant 0 : i32
    return %c0_i32, %c0_i32_0 : i32, i32
  }
  func.func @transform_7(%arg0: i32, %arg1: i32) -> (i32, i32) {
    %c0_i32 = arith.constant 0 : i32
    %c0_i32_0 = arith.constant 0 : i32
    %c0_i32_1 = arith.constant 0 : i32
    return %c0_i32, %c0_i32_0 : i32, i32
  }
  func.func @transform_8(%arg0: i32, %arg1: i32) -> (i32, i32, i32) {
    %c0_i32 = arith.constant 0 : i32
    %c0_i32_0 = arith.constant 0 : i32
    return %c0_i32, %arg0, %arg1 : i32, i32, i32
  }
  func.func @transform_9(%arg0: i32, %arg1: i32) -> (i32, i32) {
    %c0_i32 = arith.constant 0 : i32
    %c0_i32_0 = arith.constant 0 : i32
    return %arg0, %c0_i32 : i32, i32
  }
}

</mosaic_0001>

<llo_original>
// kernel: gat_layer_pallas.2
$region0: #{gat_layer_pallas.2}
  #allocation0 [shape = 'u32[]', space=smem, size = 0x4, offset = 0x4, fixed_abs, tag = 'smem constant byte address 0x4 - core index']
  #allocation1 [shape = 'u32[144,128]{1,0:T(1,128)}', space=vmem, size = 0x12000, scoped, tag = 'internal scratch']
  %s0 = inlined_call_operand.vmem [shape: f32[128,16], index: 0, kind: input, shape index: {}]
  %s1 = inlined_call_operand.vmem [shape: bf16[16,96], index: 1, kind: input, shape index: {}]
  %s2 = inlined_call_operand.vmem [shape: f32[1,96], index: 2, kind: input, shape index: {}]
  %s3 = inlined_call_operand.vmem [shape: bf16[4,128,8], index: 3, kind: output, shape index: {0}]
  %s4 = inlined_call_operand.vmem [shape: bf16[4,128,8], index: 4, kind: output, shape index: {1}]
  %s5 = inlined_call_operand.vmem [shape: f32[4,128,8], index: 5, kind: output, shape index: {2}]
  %6 = xla_tuple %s3, %s4, %s5
  %s7 = sld [smem:[#allocation0]]
  $region38: #{gat_layer_pallas.2} parent=0
    _
  %s9 = ssub.s32 1, %s7
  %s10 = scalar_select 0, %s9, %s7
  // Predicated region
  $region2: #{gat_layer_pallas.2} parent=0 // pred_check
    _
  $region3: #{gat_layer_pallas.2} parent=0 // pred_check_branch
    %12 = sbr.rel (0) target = $region5
  $region4: #{gat_layer_pallas.2} parent=0 // pred_region
    _
  $region5: #{gat_layer_pallas.2} parent=0 // pred_fallthru
    _
  // Predicated region
  $region6: #{gat_layer_pallas.2} parent=0 // pred_check
    _
  $region7: #{gat_layer_pallas.2} parent=0 // pred_check_branch
    %14 = sbr.rel (0) target = $region9
  $region8: #{gat_layer_pallas.2} parent=0 // pred_region
    _
  $region9: #{gat_layer_pallas.2} parent=0 // pred_fallthru
    _
  // Predicated region
  $region10: #{gat_layer_pallas.2} parent=0 // pred_check
    _
  $region11: #{gat_layer_pallas.2} parent=0 // pred_check_branch
    %16 = sbr.rel (0) target = $region13
  $region12: #{gat_layer_pallas.2} parent=0 // pred_region
    _
  $region13: #{gat_layer_pallas.2} parent=0 // pred_fallthru
    _
  %v18 = vld [vmem:[%s0] sm:$0xff]
  %v19 = vld [vmem:[%s0 + $0x8] sm:$0xff]
  %v20 = vld [vmem:[%s0 + $0x10] sm:$0xff]
  %v21 = vld [vmem:[%s0 + $0x18] sm:$0xff]
  %v22 = vld [vmem:[%s0 + $0x20] sm:$0xff]
  %v23 = vld [vmem:[%s0 + $0x28] sm:$0xff]
  %v24 = vld [vmem:[%s0 + $0x30] sm:$0xff]
  %v25 = vld [vmem:[%s0 + $0x38] sm:$0xff]
  %v26 = vld [vmem:[%s0 + $0x40] sm:$0xff]
  %v27 = vld [vmem:[%s0 + $0x48] sm:$0xff]
  %v28 = vld [vmem:[%s0 + $0x50] sm:$0xff]
  %v29 = vld [vmem:[%s0 + $0x58] sm:$0xff]
  %v30 = vld [vmem:[%s0 + $0x60] sm:$0xff]
  %v31 = vld [vmem:[%s0 + $0x68] sm:$0xff]
  %v32 = vld [vmem:[%s0 + $0x70] sm:$0xff]
  %v33 = vld [vmem:[%s0 + $0x78] sm:$0xff]
  %v34 = vpack.c.bf16 %v19, %v18
  %v35 = vpack.c.bf16 %v21, %v20
  %v36 = vpack.c.bf16 %v23, %v22
  %v37 = vpack.c.bf16 %v25, %v24
  %v38 = vpack.c.bf16 %v27, %v26
  %v39 = vpack.c.bf16 %v29, %v28
  %v40 = vpack.c.bf16 %v31, %v30
  %v41 = vpack.c.bf16 %v33, %v32
  %v42 = vld [vmem:[%s1] sm:$0xf]
  %v43 = vld [vmem:[%s1 + $0x4] sm:$0xf]
  %v44 = vld [vmem:[%s2] sm:$0x1]
  %v46 = vlaneseq
  %v47 = vshrl.u32 %v46, 7
  %v48 = vsub.s32 0, %v47
  %v49 = vrot.slane %v44, %v48
  %v53 = vunpack.c.l.b16 %v42
  %v54 = vunpack.c.l.b16 %v43
  %v55 = vpack.c.b16 %v54, %v53
  %vm57 = vcmask 130048
  %v59 = vsel %vm57, %v34, 0
  %v62 = vsel %vm57, %v35, 0
  %v65 = vsel %vm57, %v36, 0
  %v68 = vsel %vm57, %v37, 0
  %v71 = vsel %vm57, %v38, 0
  %v74 = vsel %vm57, %v39, 0
  %v77 = vsel %vm57, %v40, 0
  %v80 = vsel %vm57, %v41, 0
  %82 = vmatprep.subr.bf16.mxu0 0
  %83 = vmatpush1.bf16.msra.mxu0 %v55
  %84 = vmatprep.subr.bf16.mxu0 0
  %85 = vmatpush1.bf16.msra.mxu0 0
  %86 = vmatprep.subr.bf16.mxu0 0
  %87 = vmatpush1.bf16.msra.mxu0 0
  %88 = vmatprep.subr.bf16.mxu0 0
  %89 = vmatpush1.bf16.msra.mxu0 0
  %90 = vmatprep.subr.bf16.mxu0 0
  %91 = vmatpush1.bf16.msra.mxu0 0
  %92 = vmatprep.subr.bf16.mxu0 0
  %93 = vmatpush1.bf16.msra.mxu0 0
  %94 = vmatprep.subr.bf16.mxu0 0
  %95 = vmatpush1.bf16.msra.mxu0 0
  %96 = vmatprep.subr.bf16.mxu0 0
  %97 = vmatpush1.bf16.msra.mxu0 0
  %98 = vmatprep.subr.bf16.mxu0 0
  %99 = vmatpush1.bf16.msra.mxu0 0
  %100 = vmatprep.subr.bf16.mxu0 0
  %101 = vmatpush1.bf16.msra.mxu0 0
  %102 = vmatprep.subr.bf16.mxu0 0
  %103 = vmatpush1.bf16.msra.mxu0 0
  %104 = vmatprep.subr.bf16.mxu0 0
  %105 = vmatpush1.bf16.msra.mxu0 0
  %106 = vmatprep.subr.bf16.mxu0 0
  %107 = vmatpush1.bf16.msra.mxu0 0
  %108 = vmatprep.subr.bf16.mxu0 0
  %109 = vmatpush1.bf16.msra.mxu0 0
  %110 = vmatprep.subr.bf16.mxu0 0
  %111 = vmatpush1.bf16.msra.mxu0 0
  %112 = vmatprep.subr.bf16.mxu0 0
  %113 = vmatpush1.bf16.msra.mxu0 0
  %114 = vmatprep.mubr.bf16.mxu0 0
  %115 = vmatmul.mubr.bf16.gmra.mrb[0].mxu0 %v59
  %v116 = vpop.f32.mrb[0].mxu0
  %v117 = vadd.f32 %v49, %v116
  %v118 = vpop.f32.mrb[0].mxu0
  %v119 = vpop.f32.mrb[0].mxu0
  %v120 = vadd.f32 %v49, %v119
  %v121 = vpop.f32.mrb[0].mxu0
  %122 = vmatprep.mubr.bf16.mxu0 0
  %123 = vmatmul.mubr.bf16.gmra.mrb[0].mxu0 %v62
  %v124 = vpop.f32.mrb[0].mxu0
  %v125 = vadd.f32 %v49, %v124
  %v126 = vpop.f32.mrb[0].mxu0
  %v127 = vpop.f32.mrb[0].mxu0
  %v128 = vadd.f32 %v49, %v127
  %v129 = vpop.f32.mrb[0].mxu0
  %130 = vmatprep.mubr.bf16.mxu0 0
  %131 = vmatmul.mubr.bf16.gmra.mrb[0].mxu0 %v65
  %v132 = vpop.f32.mrb[0].mxu0
  %v133 = vadd.f32 %v49, %v132
  %v134 = vpop.f32.mrb[0].mxu0
  %v135 = vpop.f32.mrb[0].mxu0
  %v136 = vadd.f32 %v49, %v135
  %v137 = vpop.f32.mrb[0].mxu0
  %138 = vmatprep.mubr.bf16.mxu0 0
  %139 = vmatmul.mubr.bf16.gmra.mrb[0].mxu0 %v68
  %v140 = vpop.f32.mrb[0].mxu0
  %v141 = vadd.f32 %v49, %v140
  %v142 = vpop.f32.mrb[0].mxu0
  %v143 = vpop.f32.mrb[0].mxu0
  %v144 = vadd.f32 %v49, %v143
  %v145 = vpop.f32.mrb[0].mxu0
  %146 = vmatprep.mubr.bf16.mxu0 0
  %147 = vmatmul.mubr.bf16.gmra.mrb[0].mxu0 %v71
  %v148 = vpop.f32.mrb[0].mxu0
  %v149 = vadd.f32 %v49, %v148
  %v150 = vpop.f32.mrb[0].mxu0
  %v151 = vpop.f32.mrb[0].mxu0
  %v152 = vadd.f32 %v49, %v151
  %v153 = vpop.f32.mrb[0].mxu0
  %154 = vmatprep.mubr.bf16.mxu0 0
  %155 = vmatmul.mubr.bf16.gmra.mrb[0].mxu0 %v74
  %v156 = vpop.f32.mrb[0].mxu0
  %v157 = vadd.f32 %v49, %v156
  %v158 = vpop.f32.mrb[0].mxu0
  %v159 = vpop.f32.mrb[0].mxu0
  %v160 = vadd.f32 %v49, %v159
  %v161 = vpop.f32.mrb[0].mxu0
  %162 = vmatprep.mubr.bf16.mxu0 0
  %163 = vmatmul.mubr.bf16.gmra.mrb[0].mxu0 %v77
  %v164 = vpop.f32.mrb[0].mxu0
  %v165 = vadd.f32 %v49, %v164
  %v166 = vpop.f32.mrb[0].mxu0
  %v167 = vpop.f32.mrb[0].mxu0
  %v168 = vadd.f32 %v49, %v167
  %v169 = vpop.f32.mrb[0].mxu0
  %170 = vmatprep.mubr.bf16.mxu0 0
  %171 = vmatmul.mubr.bf16.gmra.mrb[0].mxu0 %v80
  %v172 = vpop.f32.mrb[0].mxu0
  %v173 = vadd.f32 %v49, %v172
  %v174 = vpop.f32.mrb[0].mxu0
  %v175 = vpop.f32.mrb[0].mxu0
  %v176 = vadd.f32 %v49, %v175
  %v177 = vpop.f32.mrb[0].mxu0
  %178 = vdwg.mxu0
  %v179 = vpack.c.bf16 %v120, %v117
  %v180 = vpack.c.bf16 %v128, %v125
  %v181 = vpack.c.bf16 %v136, %v133
  %v182 = vpack.c.bf16 %v144, %v141
  %v183 = vpack.c.bf16 %v152, %v149
  %v184 = vpack.c.bf16 %v160, %v157
  %v185 = vpack.c.bf16 %v168, %v165
  %v186 = vpack.c.bf16 %v176, %v173
  %v195 = vunpack.c.l.b16 %v179
  %v196 = vunpack.c.h.b16 %v179
  %v197 = vunpack.c.l.b16 %v180
  %v198 = vunpack.c.h.b16 %v180
  %v199 = vunpack.c.l.b16 %v181
  %v200 = vunpack.c.h.b16 %v181
  %v201 = vunpack.c.l.b16 %v182
  %v202 = vunpack.c.h.b16 %v182
  %v203 = vunpack.c.l.b16 %v183
  %v204 = vunpack.c.h.b16 %v183
  %v205 = vunpack.c.l.b16 %v184
  %v206 = vunpack.c.h.b16 %v184
  %v207 = vunpack.c.l.b16 %v185
  %v208 = vunpack.c.h.b16 %v185
  %v209 = vunpack.c.l.b16 %v186
  %v210 = vunpack.c.h.b16 %v186
  %v211 = vpack.c.b16 %v195, %v195
  %v212 = vpack.c.b16 %v196, %v196
  %v213 = vpack.c.b16 %v197, %v197
  %v214 = vpack.c.b16 %v198, %v198
  %v215 = vpack.c.b16 %v199, %v199
  %v216 = vpack.c.b16 %v200, %v200
  %v217 = vpack.c.b16 %v201, %v201
  %v218 = vpack.c.b16 %v202, %v202
  %v219 = vpack.c.b16 %v203, %v203
  %v220 = vpack.c.b16 %v204, %v204
  %v221 = vpack.c.b16 %v205, %v205
  %v222 = vpack.c.b16 %v206, %v206
  %v223 = vpack.c.b16 %v207, %v207
  %v224 = vpack.c.b16 %v208, %v208
  %v225 = vpack.c.b16 %v209, %v209
  %v226 = vpack.c.b16 %v210, %v210
  %vm243 = vcmask 60416
  %244 = vst.msk [vmem:[%s3] sm:$0xf] %vm243, %v211
  %245 = vst.msk [vmem:[%s3 + $0x4] sm:$0xf] %vm243, %v212
  %246 = vst.msk [vmem:[%s3 + $0x8] sm:$0xf] %vm243, %v213
  %247 = vst.msk [vmem:[%s3 + $0xc] sm:$0xf] %vm243, %v214
  %248 = vst.msk [vmem:[%s3 + $0x10] sm:$0xf] %vm243, %v215
  %249 = vst.msk [vmem:[%s3 + $0x14] sm:$0xf] %vm243, %v216
  %250 = vst.msk [vmem:[%s3 + $0x18] sm:$0xf] %vm243, %v217
  %251 = vst.msk [vmem:[%s3 + $0x1c] sm:$0xf] %vm243, %v218
  %252 = vst.msk [vmem:[%s3 + $0x20] sm:$0xf] %vm243, %v219
  %253 = vst.msk [vmem:[%s3 + $0x24] sm:$0xf] %vm243, %v220
  %254 = vst.msk [vmem:[%s3 + $0x28] sm:$0xf] %vm243, %v221
  %255 = vst.msk [vmem:[%s3 + $0x2c] sm:$0xf] %vm243, %v222
  %256 = vst.msk [vmem:[%s3 + $0x30] sm:$0xf] %vm243, %v223
  %257 = vst.msk [vmem:[%s3 + $0x34] sm:$0xf] %vm243, %v224
  %258 = vst.msk [vmem:[%s3 + $0x38] sm:$0xf] %vm243, %v225
  %259 = vst.msk [vmem:[%s3 + $0x3c] sm:$0xf] %vm243, %v226
  %260 = vrot.lane.b32.xlu0 %v211, 96
  %v261 = vpop.permute.xlu0 %260
  %262 = vrot.lane.b32.xlu0 %v212, 96
  %v263 = vpop.permute.xlu0 %262
  %264 = vrot.lane.b32.xlu0 %v213, 96
  %v265 = vpop.permute.xlu0 %264
  %266 = vrot.lane.b32.xlu0 %v214, 96
  %v267 = vpop.permute.xlu0 %266
  %268 = vrot.lane.b32.xlu0 %v215, 96
  %v269 = vpop.permute.xlu0 %268
  %270 = vrot.lane.b32.xlu0 %v216, 96
  %v271 = vpop.permute.xlu0 %270
  %272 = vrot.lane.b32.xlu0 %v217, 96
  %v273 = vpop.permute.xlu0 %272
  %274 = vrot.lane.b32.xlu0 %v218, 96
  %v275 = vpop.permute.xlu0 %274
  %276 = vrot.lane.b32.xlu0 %v219, 96
  %v277 = vpop.permute.xlu0 %276
  %278 = vrot.lane.b32.xlu0 %v220, 96
  %v279 = vpop.permute.xlu0 %278
  %280 = vrot.lane.b32.xlu0 %v221, 96
  %v281 = vpop.permute.xlu0 %280
  %282 = vrot.lane.b32.xlu0 %v222, 96
  %v283 = vpop.permute.xlu0 %282
  %284 = vrot.lane.b32.xlu0 %v223, 96
  %v285 = vpop.permute.xlu0 %284
  %286 = vrot.lane.b32.xlu0 %v224, 96
  %v287 = vpop.permute.xlu0 %286
  %288 = vrot.lane.b32.xlu0 %v225, 96
  %v289 = vpop.permute.xlu0 %288
  %290 = vrot.lane.b32.xlu0 %v226, 96
  %v291 = vpop.permute.xlu0 %290
  %308 = vst.msk [vmem:[%s4] sm:$0xf] %vm243, %v261
  %309 = vst.msk [vmem:[%s4 + $0x4] sm:$0xf] %vm243, %v263
  %310 = vst.msk [vmem:[%s4 + $0x8] sm:$0xf] %vm243, %v265
  %311 = vst.msk [vmem:[%s4 + $0xc] sm:$0xf] %vm243, %v267
  %312 = vst.msk [vmem:[%s4 + $0x10] sm:$0xf] %vm243, %v269
  %313 = vst.msk [vmem:[%s4 + $0x14] sm:$0xf] %vm243, %v271
  %314 = vst.msk [vmem:[%s4 + $0x18] sm:$0xf] %vm243, %v273
  %315 = vst.msk [vmem:[%s4 + $0x1c] sm:$0xf] %vm243, %v275
  %316 = vst.msk [vmem:[%s4 + $0x20] sm:$0xf] %vm243, %v277
  %317 = vst.msk [vmem:[%s4 + $0x24] sm:$0xf] %vm243, %v279
  %318 = vst.msk [vmem:[%s4 + $0x28] sm:$0xf] %vm243, %v281
  %319 = vst.msk [vmem:[%s4 + $0x2c] sm:$0xf] %vm243, %v283
  %320 = vst.msk [vmem:[%s4 + $0x30] sm:$0xf] %vm243, %v285
  %321 = vst.msk [vmem:[%s4 + $0x34] sm:$0xf] %vm243, %v287
  %322 = vst.msk [vmem:[%s4 + $0x38] sm:$0xf] %vm243, %v289
  %323 = vst.msk [vmem:[%s4 + $0x3c] sm:$0xf] %vm243, %v291
  %340 = vrot.lane.b32.xlu0 %v117, 64
  %v341 = vpop.permute.xlu0 %340
  %342 = vrot.lane.b32.xlu0 %v120, 64
  %v343 = vpop.permute.xlu0 %342
  %344 = vrot.lane.b32.xlu0 %v125, 64
  %v345 = vpop.permute.xlu0 %344
  %346 = vrot.lane.b32.xlu0 %v128, 64
  %v347 = vpop.permute.xlu0 %346
  %348 = vrot.lane.b32.xlu0 %v133, 64
  %v349 = vpop.permute.xlu0 %348
  %350 = vrot.lane.b32.xlu0 %v136, 64
  %v351 = vpop.permute.xlu0 %350
  %352 = vrot.lane.b32.xlu0 %v141, 64
  %v353 = vpop.permute.xlu0 %352
  %354 = vrot.lane.b32.xlu0 %v144, 64
  %v355 = vpop.permute.xlu0 %354
  %356 = vrot.lane.b32.xlu0 %v149, 64
  %v357 = vpop.permute.xlu0 %356
  %358 = vrot.lane.b32.xlu0 %v152, 64
  %v359 = vpop.permute.xlu0 %358
  %360 = vrot.lane.b32.xlu0 %v157, 64
  %v361 = vpop.permute.xlu0 %360
  %362 = vrot.lane.b32.xlu0 %v160, 64
  %v363 = vpop.permute.xlu0 %362
  %364 = vrot.lane.b32.xlu0 %v165, 64
  %v365 = vpop.permute.xlu0 %364
  %366 = vrot.lane.b32.xlu0 %v168, 64
  %v367 = vpop.permute.xlu0 %366
  %368 = vrot.lane.b32.xlu0 %v173, 64
  %v369 = vpop.permute.xlu0 %368
  %370 = vrot.lane.b32.xlu0 %v176, 64
  %v371 = vpop.permute.xlu0 %370
  %vm388 = vcmask 64512
  %389 = vst.msk [vmem:[%s5] sm:$0xff] %vm388, %v341
  %390 = vst.msk [vmem:[%s5 + $0x8] sm:$0xff] %vm388, %v343
  %391 = vst.msk [vmem:[%s5 + $0x10] sm:$0xff] %vm388, %v345
  %392 = vst.msk [vmem:[%s5 + $0x18] sm:$0xff] %vm388, %v347
  %393 = vst.msk [vmem:[%s5 + $0x20] sm:$0xff] %vm388, %v349
  %394 = vst.msk [vmem:[%s5 + $0x28] sm:$0xff] %vm388, %v351
  %395 = vst.msk [vmem:[%s5 + $0x30] sm:$0xff] %vm388, %v353
  %396 = vst.msk [vmem:[%s5 + $0x38] sm:$0xff] %vm388, %v355
  %397 = vst.msk [vmem:[%s5 + $0x40] sm:$0xff] %vm388, %v357
  %398 = vst.msk [vmem:[%s5 + $0x48] sm:$0xff] %vm388, %v359
  %399 = vst.msk [vmem:[%s5 + $0x50] sm:$0xff] %vm388, %v361
  %400 = vst.msk [vmem:[%s5 + $0x58] sm:$0xff] %vm388, %v363
  %401 = vst.msk [vmem:[%s5 + $0x60] sm:$0xff] %vm388, %v365
  %402 = vst.msk [vmem:[%s5 + $0x68] sm:$0xff] %vm388, %v367
  %403 = vst.msk [vmem:[%s5 + $0x70] sm:$0xff] %vm388, %v369
  %404 = vst.msk [vmem:[%s5 + $0x78] sm:$0xff] %vm388, %v371
  %405 = vrot.lane.b32.xlu0 %v211, 120
  %v406 = vpop.permute.xlu0 %405
  %407 = vrot.lane.b32.xlu0 %v212, 120
  %v408 = vpop.permute.xlu0 %407
  %409 = vrot.lane.b32.xlu0 %v213, 120
  %v410 = vpop.permute.xlu0 %409
  %411 = vrot.lane.b32.xlu0 %v214, 120
  %v412 = vpop.permute.xlu0 %411
  %413 = vrot.lane.b32.xlu0 %v215, 120
  %v414 = vpop.permute.xlu0 %413
  %415 = vrot.lane.b32.xlu0 %v216, 120
  %v416 = vpop.permute.xlu0 %415
  %417 = vrot.lane.b32.xlu0 %v217, 120
  %v418 = vpop.permute.xlu0 %417
  %419 = vrot.lane.b32.xlu0 %v218, 120
  %v420 = vpop.permute.xlu0 %419
  %421 = vrot.lane.b32.xlu0 %v219, 120
  %v422 = vpop.permute.xlu0 %421
  %423 = vrot.lane.b32.xlu0 %v220, 120
  %v424 = vpop.permute.xlu0 %423
  %425 = vrot.lane.b32.xlu0 %v221, 120
  %v426 = vpop.permute.xlu0 %425
  %427 = vrot.lane.b32.xlu0 %v222, 120
  %v428 = vpop.permute.xlu0 %427
  %429 = vrot.lane.b32.xlu0 %v223, 120
  %v430 = vpop.permute.xlu0 %429
  %431 = vrot.lane.b32.xlu0 %v224, 120
  %v432 = vpop.permute.xlu0 %431
  %433 = vrot.lane.b32.xlu0 %v225, 120
  %v434 = vpop.permute.xlu0 %433
  %435 = vrot.lane.b32.xlu0 %v226, 120
  %v436 = vpop.permute.xlu0 %435
  %s453 = scalar_lea.vmem %s3, 64
  %454 = vst.msk [vmem:[%s453] sm:$0xf] %vm243, %v406
  %455 = vst.msk [vmem:[%s453 + $0x4] sm:$0xf] %vm243, %v408
  %456 = vst.msk [vmem:[%s453 + $0x8] sm:$0xf] %vm243, %v410
  %457 = vst.msk [vmem:[%s453 + $0xc] sm:$0xf] %vm243, %v412
  %458 = vst.msk [vmem:[%s453 + $0x10] sm:$0xf] %vm243, %v414
  %459 = vst.msk [vmem:[%s453 + $0x14] sm:$0xf] %vm243, %v416
  %460 = vst.msk [vmem:[%s453 + $0x18] sm:$0xf] %vm243, %v418
  %461 = vst.msk [vmem:[%s453 + $0x1c] sm:$0xf] %vm243, %v420
  %462 = vst.msk [vmem:[%s453 + $0x20] sm:$0xf] %vm243, %v422
  %463 = vst.msk [vmem:[%s453 + $0x24] sm:$0xf] %vm243, %v424
  %464 = vst.msk [vmem:[%s453 + $0x28] sm:$0xf] %vm243, %v426
  %465 = vst.msk [vmem:[%s453 + $0x2c] sm:$0xf] %vm243, %v428
  %466 = vst.msk [vmem:[%s453 + $0x30] sm:$0xf] %vm243, %v430
  %467 = vst.msk [vmem:[%s453 + $0x34] sm:$0xf] %vm243, %v432
  %468 = vst.msk [vmem:[%s453 + $0x38] sm:$0xf] %vm243, %v434
  %469 = vst.msk [vmem:[%s453 + $0x3c] sm:$0xf] %vm243, %v436
  %470 = vrot.lane.b32.xlu0 %v211, 88
  %v471 = vpop.permute.xlu0 %470
  %472 = vrot.lane.b32.xlu0 %v212, 88
  %v473 = vpop.permute.xlu0 %472
  %474 = vrot.lane.b32.xlu0 %v213, 88
  %v475 = vpop.permute.xlu0 %474
  %476 = vrot.lane.b32.xlu0 %v214, 88
  %v477 = vpop.permute.xlu0 %476
  %478 = vrot.lane.b32.xlu0 %v215, 88
  %v479 = vpop.permute.xlu0 %478
  %480 = vrot.lane.b32.xlu0 %v216, 88
  %v481 = vpop.permute.xlu0 %480
  %482 = vrot.lane.b32.xlu0 %v217, 88
  %v483 = vpop.permute.xlu0 %482
  %484 = vrot.lane.b32.xlu0 %v218, 88
  %v485 = vpop.permute.xlu0 %484
  %486 = vrot.lane.b32.xlu0 %v219, 88
  %v487 = vpop.permute.xlu0 %486
  %488 = vrot.lane.b32.xlu0 %v220, 88
  %v489 = vpop.permute.xlu0 %488
  %490 = vrot.lane.b32.xlu0 %v221, 88
  %v491 = vpop.permute.xlu0 %490
  %492 = vrot.lane.b32.xlu0 %v222, 88
  %v493 = vpop.permute.xlu0 %492
  %494 = vrot.lane.b32.xlu0 %v223, 88
  %v495 = vpop.permute.xlu0 %494
  %496 = vrot.lane.b32.xlu0 %v224, 88
  %v497 = vpop.permute.xlu0 %496
  %498 = vrot.lane.b32.xlu0 %v225, 88
  %v499 = vpop.permute.xlu0 %498
  %500 = vrot.lane.b32.xlu0 %v226, 88
  %v501 = vpop.permute.xlu0 %500
  %s518 = scalar_lea.vmem %s4, 64
  %519 = vst.msk [vmem:[%s518] sm:$0xf] %vm243, %v471
  %520 = vst.msk [vmem:[%s518 + $0x4] sm:$0xf] %vm243, %v473
  %521 = vst.msk [vmem:[%s518 + $0x8] sm:$0xf] %vm243, %v475
  %522 = vst.msk [vmem:[%s518 + $0xc] sm:$0xf] %vm243, %v477
  %523 = vst.msk [vmem:[%s518 + $0x10] sm:$0xf] %vm243, %v479
  %524 = vst.msk [vmem:[%s518 + $0x14] sm:$0xf] %vm243, %v481
  %525 = vst.msk [vmem:[%s518 + $0x18] sm:$0xf] %vm243, %v483
  %526 = vst.msk [vmem:[%s518 + $0x1c] sm:$0xf] %vm243, %v485
  %527 = vst.msk [vmem:[%s518 + $0x20] sm:$0xf] %vm243, %v487
  %528 = vst.msk [vmem:[%s518 + $0x24] sm:$0xf] %vm243, %v489
  %529 = vst.msk [vmem:[%s518 + $0x28] sm:$0xf] %vm243, %v491
  %530 = vst.msk [vmem:[%s518 + $0x2c] sm:$0xf] %vm243, %v493
  %531 = vst.msk [vmem:[%s518 + $0x30] sm:$0xf] %vm243, %v495
  %532 = vst.msk [vmem:[%s518 + $0x34] sm:$0xf] %vm243, %v497
  %533 = vst.msk [vmem:[%s518 + $0x38] sm:$0xf] %vm243, %v499
  %534 = vst.msk [vmem:[%s518 + $0x3c] sm:$0xf] %vm243, %v501
  %535 = vrot.lane.b32.xlu0 %v117, 56
  %v536 = vpop.permute.xlu0 %535
  %537 = vrot.lane.b32.xlu0 %v120, 56
  %v538 = vpop.permute.xlu0 %537
  %539 = vrot.lane.b32.xlu0 %v125, 56
  %v540 = vpop.permute.xlu0 %539
  %541 = vrot.lane.b32.xlu0 %v128, 56
  %v542 = vpop.permute.xlu0 %541
  %543 = vrot.lane.b32.xlu0 %v133, 56
  %v544 = vpop.permute.xlu0 %543
  %545 = vrot.lane.b32.xlu0 %v136, 56
  %v546 = vpop.permute.xlu0 %545
  %547 = vrot.lane.b32.xlu0 %v141, 56
  %v548 = vpop.permute.xlu0 %547
  %549 = vrot.lane.b32.xlu0 %v144, 56
  %v550 = vpop.permute.xlu0 %549
  %551 = vrot.lane.b32.xlu0 %v149, 56
  %v552 = vpop.permute.xlu0 %551
  %553 = vrot.lane.b32.xlu0 %v152, 56
  %v554 = vpop.permute.xlu0 %553
  %555 = vrot.lane.b32.xlu0 %v157, 56
  %v556 = vpop.permute.xlu0 %555
  %557 = vrot.lane.b32.xlu0 %v160, 56
  %v558 = vpop.permute.xlu0 %557
  %559 = vrot.lane.b32.xlu0 %v165, 56
  %v560 = vpop.permute.xlu0 %559
  %561 = vrot.lane.b32.xlu0 %v168, 56
  %v562 = vpop.permute.xlu0 %561
  %563 = vrot.lane.b32.xlu0 %v173, 56
  %v564 = vpop.permute.xlu0 %563
  %565 = vrot.lane.b32.xlu0 %v176, 56
  %v566 = vpop.permute.xlu0 %565
  %s583 = scalar_lea.vmem %s5, 128
  %584 = vst.msk [vmem:[%s583] sm:$0xff] %vm388, %v536
  %585 = vst.msk [vmem:[%s583 + $0x8] sm:$0xff] %vm388, %v538
  %586 = vst.msk [vmem:[%s583 + $0x10] sm:$0xff] %vm388, %v540
  %587 = vst.msk [vmem:[%s583 + $0x18] sm:$0xff] %vm388, %v542
  %588 = vst.msk [vmem:[%s583 + $0x20] sm:$0xff] %vm388, %v544
  %589 = vst.msk [vmem:[%s583 + $0x28] sm:$0xff] %vm388, %v546
  %590 = vst.msk [vmem:[%s583 + $0x30] sm:$0xff] %vm388, %v548
  %591 = vst.msk [vmem:[%s583 + $0x38] sm:$0xff] %vm388, %v550
  %592 = vst.msk [vmem:[%s583 + $0x40] sm:$0xff] %vm388, %v552
  %593 = vst.msk [vmem:[%s583 + $0x48] sm:$0xff] %vm388, %v554
  %594 = vst.msk [vmem:[%s583 + $0x50] sm:$0xff] %vm388, %v556
  %595 = vst.msk [vmem:[%s583 + $0x58] sm:$0xff] %vm388, %v558
  %596 = vst.msk [vmem:[%s583 + $0x60] sm:$0xff] %vm388, %v560
  %597 = vst.msk [vmem:[%s583 + $0x68] sm:$0xff] %vm388, %v562
  %598 = vst.msk [vmem:[%s583 + $0x70] sm:$0xff] %vm388, %v564
  %599 = vst.msk [vmem:[%s583 + $0x78] sm:$0xff] %vm388, %v566
  %600 = vrot.lane.b32.xlu0 %v211, 112
  %v601 = vpop.permute.xlu0 %600
  %602 = vrot.lane.b32.xlu0 %v212, 112
  %v603 = vpop.permute.xlu0 %602
  %604 = vrot.lane.b32.xlu0 %v213, 112
  %v605 = vpop.permute.xlu0 %604
  %606 = vrot.lane.b32.xlu0 %v214, 112
  %v607 = vpop.permute.xlu0 %606
  %608 = vrot.lane.b32.xlu0 %v215, 112
  %v609 = vpop.permute.xlu0 %608
  %610 = vrot.lane.b32.xlu0 %v216, 112
  %v611 = vpop.permute.xlu0 %610
  %612 = vrot.lane.b32.xlu0 %v217, 112
  %v613 = vpop.permute.xlu0 %612
  %614 = vrot.lane.b32.xlu0 %v218, 112
  %v615 = vpop.permute.xlu0 %614
  %616 = vrot.lane.b32.xlu0 %v219, 112
  %v617 = vpop.permute.xlu0 %616
  %618 = vrot.lane.b32.xlu0 %v220, 112
  %v619 = vpop.permute.xlu0 %618
  %620 = vrot.lane.b32.xlu0 %v221, 112
  %v621 = vpop.permute.xlu0 %620
  %622 = vrot.lane.b32.xlu0 %v222, 112
  %v623 = vpop.permute.xlu0 %622
  %624 = vrot.lane.b32.xlu0 %v223, 112
  %v625 = vpop.permute.xlu0 %624
  %626 = vrot.lane.b32.xlu0 %v224, 112
  %v627 = vpop.permute.xlu0 %626
  %628 = vrot.lane.b32.xlu0 %v225, 112
  %v629 = vpop.permute.xlu0 %628
  %630 = vrot.lane.b32.xlu0 %v226, 112
  %v631 = vpop.permute.xlu0 %630
  %s648 = scalar_lea.vmem %s3, 128
  %649 = vst.msk [vmem:[%s648] sm:$0xf] %vm243, %v601
  %650 = vst.msk [vmem:[%s648 + $0x4] sm:$0xf] %vm243, %v603
  %651 = vst.msk [vmem:[%s648 + $0x8] sm:$0xf] %vm243, %v605
  %652 = vst.msk [vmem:[%s648 + $0xc] sm:$0xf] %vm243, %v607
  %653 = vst.msk [vmem:[%s648 + $0x10] sm:$0xf] %vm243, %v609
  %654 = vst.msk [vmem:[%s648 + $0x14] sm:$0xf] %vm243, %v611
  %655 = vst.msk [vmem:[%s648 + $0x18] sm:$0xf] %vm243, %v613
  %656 = vst.msk [vmem:[%s648 + $0x1c] sm:$0xf] %vm243, %v615
  %657 = vst.msk [vmem:[%s648 + $0x20] sm:$0xf] %vm243, %v617
  %658 = vst.msk [vmem:[%s648 + $0x24] sm:$0xf] %vm243, %v619
  %659 = vst.msk [vmem:[%s648 + $0x28] sm:$0xf] %vm243, %v621
  %660 = vst.msk [vmem:[%s648 + $0x2c] sm:$0xf] %vm243, %v623
  %661 = vst.msk [vmem:[%s648 + $0x30] sm:$0xf] %vm243, %v625
  %662 = vst.msk [vmem:[%s648 + $0x34] sm:$0xf] %vm243, %v627
  %663 = vst.msk [vmem:[%s648 + $0x38] sm:$0xf] %vm243, %v629
  %664 = vst.msk [vmem:[%s648 + $0x3c] sm:$0xf] %vm243, %v631
  %665 = vrot.lane.b32.xlu0 %v211, 80
  %v666 = vpop.permute.xlu0 %665
  %667 = vrot.lane.b32.xlu0 %v212, 80
  %v668 = vpop.permute.xlu0 %667
  %669 = vrot.lane.b32.xlu0 %v213, 80
  %v670 = vpop.permute.xlu0 %669
  %671 = vrot.lane.b32.xlu0 %v214, 80
  %v672 = vpop.permute.xlu0 %671
  %673 = vrot.lane.b32.xlu0 %v215, 80
  %v674 = vpop.permute.xlu0 %673
  %675 = vrot.lane.b32.xlu0 %v216, 80
  %v676 = vpop.permute.xlu0 %675
  %677 = vrot.lane.b32.xlu0 %v217, 80
  %v678 = vpop.permute.xlu0 %677
  %679 = vrot.lane.b32.xlu0 %v218, 80
  %v680 = vpop.permute.xlu0 %679
  %681 = vrot.lane.b32.xlu0 %v219, 80
  %v682 = vpop.permute.xlu0 %681
  %683 = vrot.lane.b32.xlu0 %v220, 80
  %v684 = vpop.permute.xlu0 %683
  %685 = vrot.lane.b32.xlu0 %v221, 80
  %v686 = vpop.permute.xlu0 %685
  %687 = vrot.lane.b32.xlu0 %v222, 80
  %v688 = vpop.permute.xlu0 %687
  %689 = vrot.lane.b32.xlu0 %v223, 80
  %v690 = vpop.permute.xlu0 %689
  %691 = vrot.lane.b32.xlu0 %v224, 80
  %v692 = vpop.permute.xlu0 %691
  %693 = vrot.lane.b32.xlu0 %v225, 80
  %v694 = vpop.permute.xlu0 %693
  %695 = vrot.lane.b32.xlu0 %v226, 80
  %v696 = vpop.permute.xlu0 %695
  %s713 = scalar_lea.vmem %s4, 128
  %714 = vst.msk [vmem:[%s713] sm:$0xf] %vm243, %v666
  %715 = vst.msk [vmem:[%s713 + $0x4] sm:$0xf] %vm243, %v668
  %716 = vst.msk [vmem:[%s713 + $0x8] sm:$0xf] %vm243, %v670
  %717 = vst.msk [vmem:[%s713 + $0xc] sm:$0xf] %vm243, %v672
  %718 = vst.msk [vmem:[%s713 + $0x10] sm:$0xf] %vm243, %v674
  %719 = vst.msk [vmem:[%s713 + $0x14] sm:$0xf] %vm243, %v676
  %720 = vst.msk [vmem:[%s713 + $0x18] sm:$0xf] %vm243, %v678
  %721 = vst.msk [vmem:[%s713 + $0x1c] sm:$0xf] %vm243, %v680
  %722 = vst.msk [vmem:[%s713 + $0x20] sm:$0xf] %vm243, %v682
  %723 = vst.msk [vmem:[%s713 + $0x24] sm:$0xf] %vm243, %v684
  %724 = vst.msk [vmem:[%s713 + $0x28] sm:$0xf] %vm243, %v686
  %725 = vst.msk [vmem:[%s713 + $0x2c] sm:$0xf] %vm243, %v688
  %726 = vst.msk [vmem:[%s713 + $0x30] sm:$0xf] %vm243, %v690
  %727 = vst.msk [vmem:[%s713 + $0x34] sm:$0xf] %vm243, %v692
  %728 = vst.msk [vmem:[%s713 + $0x38] sm:$0xf] %vm243, %v694
  %729 = vst.msk [vmem:[%s713 + $0x3c] sm:$0xf] %vm243, %v696
  %730 = vrot.lane.b32.xlu0 %v117, 48
  %v731 = vpop.permute.xlu0 %730
  %732 = vrot.lane.b32.xlu0 %v120, 48
  %v733 = vpop.permute.xlu0 %732
  %734 = vrot.lane.b32.xlu0 %v125, 48
  %v735 = vpop.permute.xlu0 %734
  %736 = vrot.lane.b32.xlu0 %v128, 48
  %v737 = vpop.permute.xlu0 %736
  %738 = vrot.lane.b32.xlu0 %v133, 48
  %v739 = vpop.permute.xlu0 %738
  %740 = vrot.lane.b32.xlu0 %v136, 48
  %v741 = vpop.permute.xlu0 %740
  %742 = vrot.lane.b32.xlu0 %v141, 48
  %v743 = vpop.permute.xlu0 %742
  %744 = vrot.lane.b32.xlu0 %v144, 48
  %v745 = vpop.permute.xlu0 %744
  %746 = vrot.lane.b32.xlu0 %v149, 48
  %v747 = vpop.permute.xlu0 %746
  %748 = vrot.lane.b32.xlu0 %v152, 48
  %v749 = vpop.permute.xlu0 %748
  %750 = vrot.lane.b32.xlu0 %v157, 48
  %v751 = vpop.permute.xlu0 %750
  %752 = vrot.lane.b32.xlu0 %v160, 48
  %v753 = vpop.permute.xlu0 %752
  %754 = vrot.lane.b32.xlu0 %v165, 48
  %v755 = vpop.permute.xlu0 %754
  %756 = vrot.lane.b32.xlu0 %v168, 48
  %v757 = vpop.permute.xlu0 %756
  %758 = vrot.lane.b32.xlu0 %v173, 48
  %v759 = vpop.permute.xlu0 %758
  %760 = vrot.lane.b32.xlu0 %v176, 48
  %v761 = vpop.permute.xlu0 %760
  %s778 = scalar_lea.vmem %s5, 256
  %779 = vst.msk [vmem:[%s778] sm:$0xff] %vm388, %v731
  %780 = vst.msk [vmem:[%s778 + $0x8] sm:$0xff] %vm388, %v733
  %781 = vst.msk [vmem:[%s778 + $0x10] sm:$0xff] %vm388, %v735
  %782 = vst.msk [vmem:[%s778 + $0x18] sm:$0xff] %vm388, %v737
  %783 = vst.msk [vmem:[%s778 + $0x20] sm:$0xff] %vm388, %v739
  %784 = vst.msk [vmem:[%s778 + $0x28] sm:$0xff] %vm388, %v741
  %785 = vst.msk [vmem:[%s778 + $0x30] sm:$0xff] %vm388, %v743
  %786 = vst.msk [vmem:[%s778 + $0x38] sm:$0xff] %vm388, %v745
  %787 = vst.msk [vmem:[%s778 + $0x40] sm:$0xff] %vm388, %v747
  %788 = vst.msk [vmem:[%s778 + $0x48] sm:$0xff] %vm388, %v749
  %789 = vst.msk [vmem:[%s778 + $0x50] sm:$0xff] %vm388, %v751
  %790 = vst.msk [vmem:[%s778 + $0x58] sm:$0xff] %vm388, %v753
  %791 = vst.msk [vmem:[%s778 + $0x60] sm:$0xff] %vm388, %v755
  %792 = vst.msk [vmem:[%s778 + $0x68] sm:$0xff] %vm388, %v757
  %793 = vst.msk [vmem:[%s778 + $0x70] sm:$0xff] %vm388, %v759
  %794 = vst.msk [vmem:[%s778 + $0x78] sm:$0xff] %vm388, %v761
  %795 = vrot.lane.b32.xlu0 %v211, 104
  %v796 = vpop.permute.xlu0 %795
  %797 = vrot.lane.b32.xlu0 %v212, 104
  %v798 = vpop.permute.xlu0 %797
  %799 = vrot.lane.b32.xlu0 %v213, 104
  %v800 = vpop.permute.xlu0 %799
  %801 = vrot.lane.b32.xlu0 %v214, 104
  %v802 = vpop.permute.xlu0 %801
  %803 = vrot.lane.b32.xlu0 %v215, 104
  %v804 = vpop.permute.xlu0 %803
  %805 = vrot.lane.b32.xlu0 %v216, 104
  %v806 = vpop.permute.xlu0 %805
  %807 = vrot.lane.b32.xlu0 %v217, 104
  %v808 = vpop.permute.xlu0 %807
  %809 = vrot.lane.b32.xlu0 %v218, 104
  %v810 = vpop.permute.xlu0 %809
  %811 = vrot.lane.b32.xlu0 %v219, 104
  %v812 = vpop.permute.xlu0 %811
  %813 = vrot.lane.b32.xlu0 %v220, 104
  %v814 = vpop.permute.xlu0 %813
  %815 = vrot.lane.b32.xlu0 %v221, 104
  %v816 = vpop.permute.xlu0 %815
  %817 = vrot.lane.b32.xlu0 %v222, 104
  %v818 = vpop.permute.xlu0 %817
  %819 = vrot.lane.b32.xlu0 %v223, 104
  %v820 = vpop.permute.xlu0 %819
  %821 = vrot.lane.b32.xlu0 %v224, 104
  %v822 = vpop.permute.xlu0 %821
  %823 = vrot.lane.b32.xlu0 %v225, 104
  %v824 = vpop.permute.xlu0 %823
  %825 = vrot.lane.b32.xlu0 %v226, 104
  %v826 = vpop.permute.xlu0 %825
  %s843 = scalar_lea.vmem %s3, 192
  %844 = vst.msk [vmem:[%s843] sm:$0xf] %vm243, %v796
  %845 = vst.msk [vmem:[%s843 + $0x4] sm:$0xf] %vm243, %v798
  %846 = vst.msk [vmem:[%s843 + $0x8] sm:$0xf] %vm243, %v800
  %847 = vst.msk [vmem:[%s843 + $0xc] sm:$0xf] %vm243, %v802
  %848 = vst.msk [vmem:[%s843 + $0x10] sm:$0xf] %vm243, %v804
  %849 = vst.msk [vmem:[%s843 + $0x14] sm:$0xf] %vm243, %v806
  %850 = vst.msk [vmem:[%s843 + $0x18] sm:$0xf] %vm243, %v808
  %851 = vst.msk [vmem:[%s843 + $0x1c] sm:$0xf] %vm243, %v810
  %852 = vst.msk [vmem:[%s843 + $0x20] sm:$0xf] %vm243, %v812
  %853 = vst.msk [vmem:[%s843 + $0x24] sm:$0xf] %vm243, %v814
  %854 = vst.msk [vmem:[%s843 + $0x28] sm:$0xf] %vm243, %v816
  %855 = vst.msk [vmem:[%s843 + $0x2c] sm:$0xf] %vm243, %v818
  %856 = vst.msk [vmem:[%s843 + $0x30] sm:$0xf] %vm243, %v820
  %857 = vst.msk [vmem:[%s843 + $0x34] sm:$0xf] %vm243, %v822
  %858 = vst.msk [vmem:[%s843 + $0x38] sm:$0xf] %vm243, %v824
  %859 = vst.msk [vmem:[%s843 + $0x3c] sm:$0xf] %vm243, %v826
  %860 = vrot.lane.b32.xlu0 %v211, 72
  %v861 = vpop.permute.xlu0 %860
  %862 = vrot.lane.b32.xlu0 %v212, 72
  %v863 = vpop.permute.xlu0 %862
  %864 = vrot.lane.b32.xlu0 %v213, 72
  %v865 = vpop.permute.xlu0 %864
  %866 = vrot.lane.b32.xlu0 %v214, 72
  %v867 = vpop.permute.xlu0 %866
  %868 = vrot.lane.b32.xlu0 %v215, 72
  %v869 = vpop.permute.xlu0 %868
  %870 = vrot.lane.b32.xlu0 %v216, 72
  %v871 = vpop.permute.xlu0 %870
  %872 = vrot.lane.b32.xlu0 %v217, 72
  %v873 = vpop.permute.xlu0 %872
  %874 = vrot.lane.b32.xlu0 %v218, 72
  %v875 = vpop.permute.xlu0 %874
  %876 = vrot.lane.b32.xlu0 %v219, 72
  %v877 = vpop.permute.xlu0 %876
  %878 = vrot.lane.b32.xlu0 %v220, 72
  %v879 = vpop.permute.xlu0 %878
  %880 = vrot.lane.b32.xlu0 %v221, 72
  %v881 = vpop.permute.xlu0 %880
  %882 = vrot.lane.b32.xlu0 %v222, 72
  %v883 = vpop.permute.xlu0 %882
  %884 = vrot.lane.b32.xlu0 %v223, 72
  %v885 = vpop.permute.xlu0 %884
  %886 = vrot.lane.b32.xlu0 %v224, 72
  %v887 = vpop.permute.xlu0 %886
  %888 = vrot.lane.b32.xlu0 %v225, 72
  %v889 = vpop.permute.xlu0 %888
  %890 = vrot.lane.b32.xlu0 %v226, 72
  %v891 = vpop.permute.xlu0 %890
  %s908 = scalar_lea.vmem %s4, 192
  %909 = vst.msk [vmem:[%s908] sm:$0xf] %vm243, %v861
  %910 = vst.msk [vmem:[%s908 + $0x4] sm:$0xf] %vm243, %v863
  %911 = vst.msk [vmem:[%s908 + $0x8] sm:$0xf] %vm243, %v865
  %912 = vst.msk [vmem:[%s908 + $0xc] sm:$0xf] %vm243, %v867
  %913 = vst.msk [vmem:[%s908 + $0x10] sm:$0xf] %vm243, %v869
  %914 = vst.msk [vmem:[%s908 + $0x14] sm:$0xf] %vm243, %v871
  %915 = vst.msk [vmem:[%s908 + $0x18] sm:$0xf] %vm243, %v873
  %916 = vst.msk [vmem:[%s908 + $0x1c] sm:$0xf] %vm243, %v875
  %917 = vst.msk [vmem:[%s908 + $0x20] sm:$0xf] %vm243, %v877
  %918 = vst.msk [vmem:[%s908 + $0x24] sm:$0xf] %vm243, %v879
  %919 = vst.msk [vmem:[%s908 + $0x28] sm:$0xf] %vm243, %v881
  %920 = vst.msk [vmem:[%s908 + $0x2c] sm:$0xf] %vm243, %v883
  %921 = vst.msk [vmem:[%s908 + $0x30] sm:$0xf] %vm243, %v885
  %922 = vst.msk [vmem:[%s908 + $0x34] sm:$0xf] %vm243, %v887
  %923 = vst.msk [vmem:[%s908 + $0x38] sm:$0xf] %vm243, %v889
  %924 = vst.msk [vmem:[%s908 + $0x3c] sm:$0xf] %vm243, %v891
  %925 = vrot.lane.b32.xlu0 %v117, 40
  %v926 = vpop.permute.xlu0 %925
  %927 = vrot.lane.b32.xlu0 %v120, 40
  %v928 = vpop.permute.xlu0 %927
  %929 = vrot.lane.b32.xlu0 %v125, 40
  %v930 = vpop.permute.xlu0 %929
  %931 = vrot.lane.b32.xlu0 %v128, 40
  %v932 = vpop.permute.xlu0 %931
  %933 = vrot.lane.b32.xlu0 %v133, 40
  %v934 = vpop.permute.xlu0 %933
  %935 = vrot.lane.b32.xlu0 %v136, 40
  %v936 = vpop.permute.xlu0 %935
  %937 = vrot.lane.b32.xlu0 %v141, 40
  %v938 = vpop.permute.xlu0 %937
  %939 = vrot.lane.b32.xlu0 %v144, 40
  %v940 = vpop.permute.xlu0 %939
  %941 = vrot.lane.b32.xlu0 %v149, 40
  %v942 = vpop.permute.xlu0 %941
  %943 = vrot.lane.b32.xlu0 %v152, 40
  %v944 = vpop.permute.xlu0 %943
  %945 = vrot.lane.b32.xlu0 %v157, 40
  %v946 = vpop.permute.xlu0 %945
  %947 = vrot.lane.b32.xlu0 %v160, 40
  %v948 = vpop.permute.xlu0 %947
  %949 = vrot.lane.b32.xlu0 %v165, 40
  %v950 = vpop.permute.xlu0 %949
  %951 = vrot.lane.b32.xlu0 %v168, 40
  %v952 = vpop.permute.xlu0 %951
  %953 = vrot.lane.b32.xlu0 %v173, 40
  %v954 = vpop.permute.xlu0 %953
  %955 = vrot.lane.b32.xlu0 %v176, 40
  %v956 = vpop.permute.xlu0 %955
  %s973 = scalar_lea.vmem %s5, 384
  %974 = vst.msk [vmem:[%s973] sm:$0xff] %vm388, %v926
  %975 = vst.msk [vmem:[%s973 + $0x8] sm:$0xff] %vm388, %v928
  %976 = vst.msk [vmem:[%s973 + $0x10] sm:$0xff] %vm388, %v930
  %977 = vst.msk [vmem:[%s973 + $0x18] sm:$0xff] %vm388, %v932
  %978 = vst.msk [vmem:[%s973 + $0x20] sm:$0xff] %vm388, %v934
  %979 = vst.msk [vmem:[%s973 + $0x28] sm:$0xff] %vm388, %v936
  %980 = vst.msk [vmem:[%s973 + $0x30] sm:$0xff] %vm388, %v938
  %981 = vst.msk [vmem:[%s973 + $0x38] sm:$0xff] %vm388, %v940
  %982 = vst.msk [vmem:[%s973 + $0x40] sm:$0xff] %vm388, %v942
  %983 = vst.msk [vmem:[%s973 + $0x48] sm:$0xff] %vm388, %v944
  %984 = vst.msk [vmem:[%s973 + $0x50] sm:$0xff] %vm388, %v946
  %985 = vst.msk [vmem:[%s973 + $0x58] sm:$0xff] %vm388, %v948
  %986 = vst.msk [vmem:[%s973 + $0x60] sm:$0xff] %vm388, %v950
  %987 = vst.msk [vmem:[%s973 + $0x68] sm:$0xff] %vm388, %v952
  %988 = vst.msk [vmem:[%s973 + $0x70] sm:$0xff] %vm388, %v954
  %989 = vst.msk [vmem:[%s973 + $0x78] sm:$0xff] %vm388, %v956
  // Predicated region
  $region14: #{gat_layer_pallas.2} parent=0 // pred_check
    _
  $region15: #{gat_layer_pallas.2} parent=0 // pred_check_branch
    %991 = sbr.rel (0) target = $region17
  $region16: #{gat_layer_pallas.2} parent=0 // pred_region
    _
  $region17: #{gat_layer_pallas.2} parent=0 // pred_fallthru
    _
  // Predicated region
  $region18: #{gat_layer_pallas.2} parent=0 // pred_check
    _
  $region19: #{gat_layer_pallas.2} parent=0 // pred_check_branch
    %993 = sbr.rel (0) target = $region21
  $region20: #{gat_layer_pallas.2} parent=0 // pred_region
    _
  $region21: #{gat_layer_pallas.2} parent=0 // pred_fallthru
    _
  // Predicated region
  $region22: #{gat_layer_pallas.2} parent=0 // pred_check
    _
  $region23: #{gat_layer_pallas.2} parent=0 // pred_check_branch
    %995 = sbr.rel (0) target = $region25
  $region24: #{gat_layer_pallas.2} parent=0 // pred_region
    _
  $region25: #{gat_layer_pallas.2} parent=0 // pred_fallthru
    _
  // Predicated region
  $region26: #{gat_layer_pallas.2} parent=0 // pred_check
    _
  $region27: #{gat_layer_pallas.2} parent=0 // pred_check_branch
    %997 = sbr.rel (0) target = $region29
  $region28: #{gat_layer_pallas.2} parent=0 // pred_region
    _
  $region29: #{gat_layer_pallas.2} parent=0 // pred_fallthru
    _
  // Predicated region
  $region30: #{gat_layer_pallas.2} parent=0 // pred_check
    _
  $region31: #{gat_layer_pallas.2} parent=0 // pred_check_branch
    %999 = sbr.rel (0) target = $region33
  $region32: #{gat_layer_pallas.2} parent=0 // pred_region
    _
  $region33: #{gat_layer_pallas.2} parent=0 // pred_fallthru
    _
  // Predicated region
  $region34: #{gat_layer_pallas.2} parent=0 // pred_check
    _
  $region35: #{gat_layer_pallas.2} parent=0 // pred_check_branch
    %1001 = sbr.rel (0) target = $region37
  $region36: #{gat_layer_pallas.2} parent=0 // pred_region
    _
  $region37: #{gat_layer_pallas.2} parent=0 // pred_fallthru
    _

// kernel: gat_layer_pallas.3
$region0: #{gat_layer_pallas.3}
  #allocation0 [shape = 'u32[]', space=smem, size = 0x4, offset = 0x4, fixed_abs, tag = 'smem constant byte address 0x4 - core index']
  #allocation1 [shape = 'u32[144,128]{1,0:T(1,128)}', space=vmem, size = 0x12000, scoped, tag = 'internal scratch']
  #allocation2 [shape = 'f32[4,128,1]{2,1,0:T(8,128)}', space=vmem, size = 0x40000, scoped, tag = 'scratch operand']
  %s0 = inlined_call_operand.vmem [shape: bf16[4,128,8], index: 0, kind: input, shape index: {}]
  %s1 = inlined_call_operand.vmem [shape: bf16[4,128,8], index: 1, kind: input, shape index: {}]
  %s2 = inlined_call_operand.vmem [shape: f32[4,128,8], index: 2, kind: input, shape index: {}]
  %s3 = inlined_call_operand.vmem [shape: f32[4,128,128], index: 3, kind: input, shape index: {}]
  %s4 = inlined_call_operand.vmem [shape: bf16[8,32], index: 4, kind: input, shape index: {}]
  %s5 = inlined_call_operand.vmem [shape: f32[1,32], index: 5, kind: input, shape index: {}]
  %s6 = inlined_call_operand.vmem [shape: bf16[32,32], index: 6, kind: input, shape index: {}]
  %s7 = inlined_call_operand.vmem [shape: f32[1,32], index: 7, kind: input, shape index: {}]
  %s8 = inlined_call_operand.vmem [shape: f32[4,128,128], index: 8, kind: output, shape index: {0}]
  %s9 = inlined_call_operand.vmem [shape: f32[128,32], index: 9, kind: output, shape index: {1}]
  %10 = xla_tuple %s8, %s9
  %s11 = sld [smem:[#allocation0]]
  $region58: #{gat_layer_pallas.3} parent=0
    _
  %s13 = ssub.s32 1, %s11
  %s14 = scalar_select 0, %s13, %s11
  // Predicated region
  $region2: #{gat_layer_pallas.3} parent=0 // pred_check
    _
  $region3: #{gat_layer_pallas.3} parent=0 // pred_check_branch
    %16 = sbr.rel (0) target = $region5
  $region4: #{gat_layer_pallas.3} parent=0 // pred_region
    _
  $region5: #{gat_layer_pallas.3} parent=0 // pred_fallthru
    _
  // Predicated region
  $region6: #{gat_layer_pallas.3} parent=0 // pred_check
    _
  $region7: #{gat_layer_pallas.3} parent=0 // pred_check_branch
    %18 = sbr.rel (0) target = $region9
  $region8: #{gat_layer_pallas.3} parent=0 // pred_region
    _
  $region9: #{gat_layer_pallas.3} parent=0 // pred_fallthru
    _
  // Predicated region
  $region10: #{gat_layer_pallas.3} parent=0 // pred_check
    _
  $region11: #{gat_layer_pallas.3} parent=0 // pred_check_branch
    %20 = sbr.rel (0) target = $region13
  $region12: #{gat_layer_pallas.3} parent=0 // pred_region
    _
  $region13: #{gat_layer_pallas.3} parent=0 // pred_fallthru
    _
  // Predicated region
  $region14: #{gat_layer_pallas.3} parent=0 // pred_check
    _
  $region15: #{gat_layer_pallas.3} parent=0 // pred_check_branch
    %22 = sbr.rel (0) target = $region17
  $region16: #{gat_layer_pallas.3} parent=0 // pred_region
    _
  $region17: #{gat_layer_pallas.3} parent=0 // pred_fallthru
    _
  // Predicated region
  $region18: #{gat_layer_pallas.3} parent=0 // pred_check
    _
  $region19: #{gat_layer_pallas.3} parent=0 // pred_check_branch
    %24 = sbr.rel (0) target = $region21
  $region20: #{gat_layer_pallas.3} parent=0 // pred_region
    _
  $region21: #{gat_layer_pallas.3} parent=0 // pred_fallthru
    _
  // Predicated region
  $region22: #{gat_layer_pallas.3} parent=0 // pred_check
    _
  $region23: #{gat_layer_pallas.3} parent=0 // pred_check_branch
    %26 = sbr.rel (0) target = $region25
  $region24: #{gat_layer_pallas.3} parent=0 // pred_region
    _
  $region25: #{gat_layer_pallas.3} parent=0 // pred_fallthru
    _
  // Predicated region
  $region26: #{gat_layer_pallas.3} parent=0 // pred_check
    _
  $region27: #{gat_layer_pallas.3} parent=0 // pred_check_branch
    %28 = sbr.rel (0) target = $region29
  $region28: #{gat_layer_pallas.3} parent=0 // pred_region
    _
  $region29: #{gat_layer_pallas.3} parent=0 // pred_fallthru
    _
  // Predicated region
  $region30: #{gat_layer_pallas.3} parent=0 // pred_check
    _
  $region31: #{gat_layer_pallas.3} parent=0 // pred_check_branch
    %30 = sbr.rel (0) target = $region33
  $region32: #{gat_layer_pallas.3} parent=0 // pred_region
    _
  $region33: #{gat_layer_pallas.3} parent=0 // pred_fallthru
    _
  %p32 = scmp.eq.s32.totalorder 0, 0
  // Predicated region
  $region34: #{gat_layer_pallas.3} parent=0 // pred_check
    %p33 = pneg %p32
  $region35: #{gat_layer_pallas.3} parent=0 // pred_check_branch
    %35 = sbr.rel (%p33) target = $region37
  $region36: #{gat_layer_pallas.3} parent=0 // pred_region
    %vm36 = vcmask 7168
    %37 = vst.msk [vmem:[#allocation2] sm:$0xff] %vm36, 0.0
    %38 = vst.msk [vmem:[#allocation2 + $0x8] sm:$0xff] %vm36, 0.0
    %39 = vst.msk [vmem:[#allocation2 + $0x10] sm:$0xff] %vm36, 0.0
    %40 = vst.msk [vmem:[#allocation2 + $0x18] sm:$0xff] %vm36, 0.0
    %41 = vst.msk [vmem:[#allocation2 + $0x20] sm:$0xff] %vm36, 0.0
    %42 = vst.msk [vmem:[#allocation2 + $0x28] sm:$0xff] %vm36, 0.0
    %43 = vst.msk [vmem:[#allocation2 + $0x30] sm:$0xff] %vm36, 0.0
    %44 = vst.msk [vmem:[#allocation2 + $0x38] sm:$0xff] %vm36, 0.0
    %45 = vst.msk [vmem:[#allocation2 + $0x40] sm:$0xff] %vm36, 0.0
    %46 = vst.msk [vmem:[#allocation2 + $0x48] sm:$0xff] %vm36, 0.0
    %47 = vst.msk [vmem:[#allocation2 + $0x50] sm:$0xff] %vm36, 0.0
    %48 = vst.msk [vmem:[#allocation2 + $0x58] sm:$0xff] %vm36, 0.0
    %49 = vst.msk [vmem:[#allocation2 + $0x60] sm:$0xff] %vm36, 0.0
    %50 = vst.msk [vmem:[#allocation2 + $0x68] sm:$0xff] %vm36, 0.0
    %51 = vst.msk [vmem:[#allocation2 + $0x70] sm:$0xff] %vm36, 0.0
    %52 = vst.msk [vmem:[#allocation2 + $0x78] sm:$0xff] %vm36, 0.0
    %53 = vst.msk [vmem:[#allocation2 + $0x80] sm:$0xff] %vm36, 0.0
    %54 = vst.msk [vmem:[#allocation2 + $0x88] sm:$0xff] %vm36, 0.0
    %55 = vst.msk [vmem:[#allocation2 + $0x90] sm:$0xff] %vm36, 0.0
    %56 = vst.msk [vmem:[#allocation2 + $0x98] sm:$0xff] %vm36, 0.0
    %57 = vst.msk [vmem:[#allocation2 + $0xa0] sm:$0xff] %vm36, 0.0
    %58 = vst.msk [vmem:[#allocation2 + $0xa8] sm:$0xff] %vm36, 0.0
    %59 = vst.msk [vmem:[#allocation2 + $0xb0] sm:$0xff] %vm36, 0.0
    %60 = vst.msk [vmem:[#allocation2 + $0xb8] sm:$0xff] %vm36, 0.0
    %61 = vst.msk [vmem:[#allocation2 + $0xc0] sm:$0xff] %vm36, 0.0
    %62 = vst.msk [vmem:[#allocation2 + $0xc8] sm:$0xff] %vm36, 0.0
    %63 = vst.msk [vmem:[#allocation2 + $0xd0] sm:$0xff] %vm36, 0.0
    %64 = vst.msk [vmem:[#allocation2 + $0xd8] sm:$0xff] %vm36, 0.0
    %65 = vst.msk [vmem:[#allocation2 + $0xe0] sm:$0xff] %vm36, 0.0
    %66 = vst.msk [vmem:[#allocation2 + $0xe8] sm:$0xff] %vm36, 0.0
    %67 = vst.msk [vmem:[#allocation2 + $0xf0] sm:$0xff] %vm36, 0.0
    %68 = vst.msk [vmem:[#allocation2 + $0xf8] sm:$0xff] %vm36, 0.0
    %69 = vst.msk [vmem:[#allocation2 + $0x100] sm:$0xff] %vm36, 0.0
    %70 = vst.msk [vmem:[#allocation2 + $0x108] sm:$0xff] %vm36, 0.0
    %71 = vst.msk [vmem:[#allocation2 + $0x110] sm:$0xff] %vm36, 0.0
    %72 = vst.msk [vmem:[#allocation2 + $0x118] sm:$0xff] %vm36, 0.0
    %73 = vst.msk [vmem:[#allocation2 + $0x120] sm:$0xff] %vm36, 0.0
    %74 = vst.msk [vmem:[#allocation2 + $0x128] sm:$0xff] %vm36, 0.0
    %75 = vst.msk [vmem:[#allocation2 + $0x130] sm:$0xff] %vm36, 0.0
    %76 = vst.msk [vmem:[#allocation2 + $0x138] sm:$0xff] %vm36, 0.0
    %77 = vst.msk [vmem:[#allocation2 + $0x140] sm:$0xff] %vm36, 0.0
    %78 = vst.msk [vmem:[#allocation2 + $0x148] sm:$0xff] %vm36, 0.0
    %79 = vst.msk [vmem:[#allocation2 + $0x150] sm:$0xff] %vm36, 0.0
    %80 = vst.msk [vmem:[#allocation2 + $0x158] sm:$0xff] %vm36, 0.0
    %81 = vst.msk [vmem:[#allocation2 + $0x160] sm:$0xff] %vm36, 0.0
    %82 = vst.msk [vmem:[#allocation2 + $0x168] sm:$0xff] %vm36, 0.0
    %83 = vst.msk [vmem:[#allocation2 + $0x170] sm:$0xff] %vm36, 0.0
    %84 = vst.msk [vmem:[#allocation2 + $0x178] sm:$0xff] %vm36, 0.0
    %85 = vst.msk [vmem:[#allocation2 + $0x180] sm:$0xff] %vm36, 0.0
    %86 = vst.msk [vmem:[#allocation2 + $0x188] sm:$0xff] %vm36, 0.0
    %87 = vst.msk [vmem:[#allocation2 + $0x190] sm:$0xff] %vm36, 0.0
    %88 = vst.msk [vmem:[#allocation2 + $0x198] sm:$0xff] %vm36, 0.0
    %89 = vst.msk [vmem:[#allocation2 + $0x1a0] sm:$0xff] %vm36, 0.0
    %90 = vst.msk [vmem:[#allocation2 + $0x1a8] sm:$0xff] %vm36, 0.0
    %91 = vst.msk [vmem:[#allocation2 + $0x1b0] sm:$0xff] %vm36, 0.0
    %92 = vst.msk [vmem:[#allocation2 + $0x1b8] sm:$0xff] %vm36, 0.0
    %93 = vst.msk [vmem:[#allocation2 + $0x1c0] sm:$0xff] %vm36, 0.0
    %94 = vst.msk [vmem:[#allocation2 + $0x1c8] sm:$0xff] %vm36, 0.0
    %95 = vst.msk [vmem:[#allocation2 + $0x1d0] sm:$0xff] %vm36, 0.0
    %96 = vst.msk [vmem:[#allocation2 + $0x1d8] sm:$0xff] %vm36, 0.0
    %97 = vst.msk [vmem:[#allocation2 + $0x1e0] sm:$0xff] %vm36, 0.0
    %98 = vst.msk [vmem:[#allocation2 + $0x1e8] sm:$0xff] %vm36, 0.0
    %99 = vst.msk [vmem:[#allocation2 + $0x1f0] sm:$0xff] %vm36, 0.0
    %100 = vst.msk [vmem:[#allocation2 + $0x1f8] sm:$0xff] %vm36, 0.0
  $region37: #{gat_layer_pallas.3} parent=0 // pred_fallthru
    _
  %v101 = vld [vmem:[%s0] sm:$0xf]
  %v102 = vld [vmem:[%s0 + $0x4] sm:$0xf]
  %v103 = vld [vmem:[%s0 + $0x8] sm:$0xf]
  %v104 = vld [vmem:[%s0 + $0xc] sm:$0xf]
  %v105 = vld [vmem:[%s0 + $0x10] sm:$0xf]
  %v106 = vld [vmem:[%s0 + $0x14] sm:$0xf]
  %v107 = vld [vmem:[%s0 + $0x18] sm:$0xf]
  %v108 = vld [vmem:[%s0 + $0x1c] sm:$0xf]
  %v109 = vld [vmem:[%s0 + $0x20] sm:$0xf]
  %v110 = vld [vmem:[%s0 + $0x24] sm:$0xf]
  %v111 = vld [vmem:[%s0 + $0x28] sm:$0xf]
  %v112 = vld [vmem:[%s0 + $0x2c] sm:$0xf]
  %v113 = vld [vmem:[%s0 + $0x30] sm:$0xf]
  %v114 = vld [vmem:[%s0 + $0x34] sm:$0xf]
  %v115 = vld [vmem:[%s0 + $0x38] sm:$0xf]
  %v116 = vld [vmem:[%s0 + $0x3c] sm:$0xf]
  %v117 = vld [vmem:[%s0 + $0x40] sm:$0xf]
  %v118 = vld [vmem:[%s0 + $0x44] sm:$0xf]
  %v119 = vld [vmem:[%s0 + $0x48] sm:$0xf]
  %v120 = vld [vmem:[%s0 + $0x4c] sm:$0xf]
  %v121 = vld [vmem:[%s0 + $0x50] sm:$0xf]
  %v122 = vld [vmem:[%s0 + $0x54] sm:$0xf]
  %v123 = vld [vmem:[%s0 + $0x58] sm:$0xf]
  %v124 = vld [vmem:[%s0 + $0x5c] sm:$0xf]
  %v125 = vld [vmem:[%s0 + $0x60] sm:$0xf]
  %v126 = vld [vmem:[%s0 + $0x64] sm:$0xf]
  %v127 = vld [vmem:[%s0 + $0x68] sm:$0xf]
  %v128 = vld [vmem:[%s0 + $0x6c] sm:$0xf]
  %v129 = vld [vmem:[%s0 + $0x70] sm:$0xf]
  %v130 = vld [vmem:[%s0 + $0x74] sm:$0xf]
  %v131 = vld [vmem:[%s0 + $0x78] sm:$0xf]
  %v132 = vld [vmem:[%s0 + $0x7c] sm:$0xf]
  %v133 = vld [vmem:[%s0 + $0x80] sm:$0xf]
  %v134 = vld [vmem:[%s0 + $0x84] sm:$0xf]
  %v135 = vld [vmem:[%s0 + $0x88] sm:$0xf]
  %v136 = vld [vmem:[%s0 + $0x8c] sm:$0xf]
  %v137 = vld [vmem:[%s0 + $0x90] sm:$0xf]
  %v138 = vld [vmem:[%s0 + $0x94] sm:$0xf]
  %v139 = vld [vmem:[%s0 + $0x98] sm:$0xf]
  %v140 = vld [vmem:[%s0 + $0x9c] sm:$0xf]
  %v141 = vld [vmem:[%s0 + $0xa0] sm:$0xf]
  %v142 = vld [vmem:[%s0 + $0xa4] sm:$0xf]
  %v143 = vld [vmem:[%s0 + $0xa8] sm:$0xf]
  %v144 = vld [vmem:[%s0 + $0xac] sm:$0xf]
  %v145 = vld [vmem:[%s0 + $0xb0] sm:$0xf]
  %v146 = vld [vmem:[%s0 + $0xb4] sm:$0xf]
  %v147 = vld [vmem:[%s0 + $0xb8] sm:$0xf]
  %v148 = vld [vmem:[%s0 + $0xbc] sm:$0xf]
  %v149 = vld [vmem:[%s0 + $0xc0] sm:$0xf]
  %v150 = vld [vmem:[%s0 + $0xc4] sm:$0xf]
  %v151 = vld [vmem:[%s0 + $0xc8] sm:$0xf]
  %v152 = vld [vmem:[%s0 + $0xcc] sm:$0xf]
  %v153 = vld [vmem:[%s0 + $0xd0] sm:$0xf]
  %v154 = vld [vmem:[%s0 + $0xd4] sm:$0xf]
  %v155 = vld [vmem:[%s0 + $0xd8] sm:$0xf]
  %v156 = vld [vmem:[%s0 + $0xdc] sm:$0xf]
  %v157 = vld [vmem:[%s0 + $0xe0] sm:$0xf]
  %v158 = vld [vmem:[%s0 + $0xe4] sm:$0xf]
  %v159 = vld [vmem:[%s0 + $0xe8] sm:$0xf]
  %v160 = vld [vmem:[%s0 + $0xec] sm:$0xf]
  %v161 = vld [vmem:[%s0 + $0xf0] sm:$0xf]
  %v162 = vld [vmem:[%s0 + $0xf4] sm:$0xf]
  %v163 = vld [vmem:[%s0 + $0xf8] sm:$0xf]
  %v164 = vld [vmem:[%s0 + $0xfc] sm:$0xf]
  %v165 = vld [vmem:[%s1] sm:$0xf]
  %v166 = vld [vmem:[%s1 + $0x4] sm:$0xf]
  %v167 = vld [vmem:[%s1 + $0x8] sm:$0xf]
  %v168 = vld [vmem:[%s1 + $0xc] sm:$0xf]
  %v169 = vld [vmem:[%s1 + $0x10] sm:$0xf]
  %v170 = vld [vmem:[%s1 + $0x14] sm:$0xf]
  %v171 = vld [vmem:[%s1 + $0x18] sm:$0xf]
  %v172 = vld [vmem:[%s1 + $0x1c] sm:$0xf]
  %v173 = vld [vmem:[%s1 + $0x20] sm:$0xf]
  %v174 = vld [vmem:[%s1 + $0x24] sm:$0xf]
  %v175 = vld [vmem:[%s1 + $0x28] sm:$0xf]
  %v176 = vld [vmem:[%s1 + $0x2c] sm:$0xf]
  %v177 = vld [vmem:[%s1 + $0x30] sm:$0xf]
  %v178 = vld [vmem:[%s1 + $0x34] sm:$0xf]
  %v179 = vld [vmem:[%s1 + $0x38] sm:$0xf]
  %v180 = vld [vmem:[%s1 + $0x3c] sm:$0xf]
  %v181 = vld [vmem:[%s1 + $0x40] sm:$0xf]
  %v182 = vld [vmem:[%s1 + $0x44] sm:$0xf]
  %v183 = vld [vmem:[%s1 + $0x48] sm:$0xf]
  %v184 = vld [vmem:[%s1 + $0x4c] sm:$0xf]
  %v185 = vld [vmem:[%s1 + $0x50] sm:$0xf]
  %v186 = vld [vmem:[%s1 + $0x54] sm:$0xf]
  %v187 = vld [vmem:[%s1 + $0x58] sm:$0xf]
  %v188 = vld [vmem:[%s1 + $0x5c] sm:$0xf]
  %v189 = vld [vmem:[%s1 + $0x60] sm:$0xf]
  %v190 = vld [vmem:[%s1 + $0x64] sm:$0xf]
  %v191 = vld [vmem:[%s1 + $0x68] sm:$0xf]
  %v192 = vld [vmem:[%s1 + $0x6c] sm:$0xf]
  %v193 = vld [vmem:[%s1 + $0x70] sm:$0xf]
  %v194 = vld [vmem:[%s1 + $0x74] sm:$0xf]
  %v195 = vld [vmem:[%s1 + $0x78] sm:$0xf]
  %v196 = vld [vmem:[%s1 + $0x7c] sm:$0xf]
  %v197 = vld [vmem:[%s1 + $0x80] sm:$0xf]
  %v198 = vld [vmem:[%s1 + $0x84] sm:$0xf]
  %v199 = vld [vmem:[%s1 + $0x88] sm:$0xf]
  %v200 = vld [vmem:[%s1 + $0x8c] sm:$0xf]
  %v201 = vld [vmem:[%s1 + $0x90] sm:$0xf]
  %v202 = vld [vmem:[%s1 + $0x94] sm:$0xf]
  %v203 = vld [vmem:[%s1 + $0x98] sm:$0xf]
  %v204 = vld [vmem:[%s1 + $0x9c] sm:$0xf]
  %v205 = vld [vmem:[%s1 + $0xa0] sm:$0xf]
  %v206 = vld [vmem:[%s1 + $0xa4] sm:$0xf]
  %v207 = vld [vmem:[%s1 + $0xa8] sm:$0xf]
  %v208 = vld [vmem:[%s1 + $0xac] sm:$0xf]
  %v209 = vld [vmem:[%s1 + $0xb0] sm:$0xf]
  %v210 = vld [vmem:[%s1 + $0xb4] sm:$0xf]
  %v211 = vld [vmem:[%s1 + $0xb8] sm:$0xf]
  %v212 = vld [vmem:[%s1 + $0xbc] sm:$0xf]
  %v213 = vld [vmem:[%s1 + $0xc0] sm:$0xf]
  %v214 = vld [vmem:[%s1 + $0xc4] sm:$0xf]
  %v215 = vld [vmem:[%s1 + $0xc8] sm:$0xf]
  %v216 = vld [vmem:[%s1 + $0xcc] sm:$0xf]
  %v217 = vld [vmem:[%s1 + $0xd0] sm:$0xf]
  %v218 = vld [vmem:[%s1 + $0xd4] sm:$0xf]
  %v219 = vld [vmem:[%s1 + $0xd8] sm:$0xf]
  %v220 = vld [vmem:[%s1 + $0xdc] sm:$0xf]
  %v221 = vld [vmem:[%s1 + $0xe0] sm:$0xf]
  %v222 = vld [vmem:[%s1 + $0xe4] sm:$0xf]
  %v223 = vld [vmem:[%s1 + $0xe8] sm:$0xf]
  %v224 = vld [vmem:[%s1 + $0xec] sm:$0xf]
  %v225 = vld [vmem:[%s1 + $0xf0] sm:$0xf]
  %v226 = vld [vmem:[%s1 + $0xf4] sm:$0xf]
  %v227 = vld [vmem:[%s1 + $0xf8] sm:$0xf]
  %v228 = vld [vmem:[%s1 + $0xfc] sm:$0xf]
  %v229 = vld [vmem:[%s3] sm:$0xff]
  %v230 = vld [vmem:[%s3 + $0x8] sm:$0xff]
  %v231 = vld [vmem:[%s3 + $0x10] sm:$0xff]
  %v232 = vld [vmem:[%s3 + $0x18] sm:$0xff]
  %v233 = vld [vmem:[%s3 + $0x20] sm:$0xff]
  %v234 = vld [vmem:[%s3 + $0x28] sm:$0xff]
  %v235 = vld [vmem:[%s3 + $0x30] sm:$0xff]
  %v236 = vld [vmem:[%s3 + $0x38] sm:$0xff]
  %v237 = vld [vmem:[%s3 + $0x40] sm:$0xff]
  %v238 = vld [vmem:[%s3 + $0x48] sm:$0xff]
  %v239 = vld [vmem:[%s3 + $0x50] sm:$0xff]
  %v240 = vld [vmem:[%s3 + $0x58] sm:$0xff]
  %v241 = vld [vmem:[%s3 + $0x60] sm:$0xff]
  %v242 = vld [vmem:[%s3 + $0x68] sm:$0xff]
  %v243 = vld [vmem:[%s3 + $0x70] sm:$0xff]
  %v244 = vld [vmem:[%s3 + $0x78] sm:$0xff]
  %v245 = vld [vmem:[%s3 + $0x80] sm:$0xff]
  %v246 = vld [vmem:[%s3 + $0x88] sm:$0xff]
  %v247 = vld [vmem:[%s3 + $0x90] sm:$0xff]
  %v248 = vld [vmem:[%s3 + $0x98] sm:$0xff]
  %v249 = vld [vmem:[%s3 + $0xa0] sm:$0xff]
  %v250 = vld [vmem:[%s3 + $0xa8] sm:$0xff]
  %v251 = vld [vmem:[%s3 + $0xb0] sm:$0xff]
  %v252 = vld [vmem:[%s3 + $0xb8] sm:$0xff]
  %v253 = vld [vmem:[%s3 + $0xc0] sm:$0xff]
  %v254 = vld [vmem:[%s3 + $0xc8] sm:$0xff]
  %v255 = vld [vmem:[%s3 + $0xd0] sm:$0xff]
  %v256 = vld [vmem:[%s3 + $0xd8] sm:$0xff]
  %v257 = vld [vmem:[%s3 + $0xe0] sm:$0xff]
  %v258 = vld [vmem:[%s3 + $0xe8] sm:$0xff]
  %v259 = vld [vmem:[%s3 + $0xf0] sm:$0xff]
  %v260 = vld [vmem:[%s3 + $0xf8] sm:$0xff]
  %v261 = vld [vmem:[%s3 + $0x100] sm:$0xff]
  %v262 = vld [vmem:[%s3 + $0x108] sm:$0xff]
  %v263 = vld [vmem:[%s3 + $0x110] sm:$0xff]
  %v264 = vld [vmem:[%s3 + $0x118] sm:$0xff]
  %v265 = vld [vmem:[%s3 + $0x120] sm:$0xff]
  %v266 = vld [vmem:[%s3 + $0x128] sm:$0xff]
  %v267 = vld [vmem:[%s3 + $0x130] sm:$0xff]
  %v268 = vld [vmem:[%s3 + $0x138] sm:$0xff]
  %v269 = vld [vmem:[%s3 + $0x140] sm:$0xff]
  %v270 = vld [vmem:[%s3 + $0x148] sm:$0xff]
  %v271 = vld [vmem:[%s3 + $0x150] sm:$0xff]
  %v272 = vld [vmem:[%s3 + $0x158] sm:$0xff]
  %v273 = vld [vmem:[%s3 + $0x160] sm:$0xff]
  %v274 = vld [vmem:[%s3 + $0x168] sm:$0xff]
  %v275 = vld [vmem:[%s3 + $0x170] sm:$0xff]
  %v276 = vld [vmem:[%s3 + $0x178] sm:$0xff]
  %v277 = vld [vmem:[%s3 + $0x180] sm:$0xff]
  %v278 = vld [vmem:[%s3 + $0x188] sm:$0xff]
  %v279 = vld [vmem:[%s3 + $0x190] sm:$0xff]
  %v280 = vld [vmem:[%s3 + $0x198] sm:$0xff]
  %v281 = vld [vmem:[%s3 + $0x1a0] sm:$0xff]
  %v282 = vld [vmem:[%s3 + $0x1a8] sm:$0xff]
  %v283 = vld [vmem:[%s3 + $0x1b0] sm:$0xff]
  %v284 = vld [vmem:[%s3 + $0x1b8] sm:$0xff]
  %v285 = vld [vmem:[%s3 + $0x1c0] sm:$0xff]
  %v286 = vld [vmem:[%s3 + $0x1c8] sm:$0xff]
  %v287 = vld [vmem:[%s3 + $0x1d0] sm:$0xff]
  %v288 = vld [vmem:[%s3 + $0x1d8] sm:$0xff]
  %v289 = vld [vmem:[%s3 + $0x1e0] sm:$0xff]
  %v290 = vld [vmem:[%s3 + $0x1e8] sm:$0xff]
  %v291 = vld [vmem:[%s3 + $0x1f0] sm:$0xff]
  %v292 = vld [vmem:[%s3 + $0x1f8] sm:$0xff]
  %v309 = vunpack.c.l.b16 %v101
  %v310 = vunpack.c.l.b16 %v102
  %v311 = vunpack.c.l.b16 %v103
  %v312 = vunpack.c.l.b16 %v104
  %v313 = vunpack.c.l.b16 %v105
  %v314 = vunpack.c.l.b16 %v106
  %v315 = vunpack.c.l.b16 %v107
  %v316 = vunpack.c.l.b16 %v108
  %v317 = vunpack.c.l.b16 %v109
  %v318 = vunpack.c.l.b16 %v110
  %v319 = vunpack.c.l.b16 %v111
  %v320 = vunpack.c.l.b16 %v112
  %v321 = vunpack.c.l.b16 %v113
  %v322 = vunpack.c.l.b16 %v114
  %v323 = vunpack.c.l.b16 %v115
  %v324 = vunpack.c.l.b16 %v116
  %v325 = vpack.c.b16 %v310, %v309
  %v326 = vpack.c.b16 %v312, %v311
  %v327 = vpack.c.b16 %v314, %v313
  %v328 = vpack.c.b16 %v316, %v315
  %v329 = vpack.c.b16 %v318, %v317
  %v330 = vpack.c.b16 %v320, %v319
  %v331 = vpack.c.b16 %v322, %v321
  %v332 = vpack.c.b16 %v324, %v323
  %v349 = vunpack.c.l.b16 %v165
  %v350 = vunpack.c.l.b16 %v166
  %v351 = vunpack.c.l.b16 %v167
  %v352 = vunpack.c.l.b16 %v168
  %v353 = vunpack.c.l.b16 %v169
  %v354 = vunpack.c.l.b16 %v170
  %v355 = vunpack.c.l.b16 %v171
  %v356 = vunpack.c.l.b16 %v172
  %v357 = vunpack.c.l.b16 %v173
  %v358 = vunpack.c.l.b16 %v174
  %v359 = vunpack.c.l.b16 %v175
  %v360 = vunpack.c.l.b16 %v176
  %v361 = vunpack.c.l.b16 %v177
  %v362 = vunpack.c.l.b16 %v178
  %v363 = vunpack.c.l.b16 %v179
  %v364 = vunpack.c.l.b16 %v180
  %v365 = vpack.c.b16 %v350, %v349
  %v366 = vpack.c.b16 %v352, %v351
  %v367 = vpack.c.b16 %v354, %v353
  %v368 = vpack.c.b16 %v356, %v355
  %v369 = vpack.c.b16 %v358, %v357
  %v370 = vpack.c.b16 %v360, %v359
  %v371 = vpack.c.b16 %v362, %v361
  %v372 = vpack.c.b16 %v364, %v363
  %vm373 = vcmask 64512
  %v375 = vsel %vm373, %v325, 0
  %v378 = vsel %vm373, %v326, 0
  %v381 = vsel %vm373, %v327, 0
  %v384 = vsel %vm373, %v328, 0
  %v387 = vsel %vm373, %v329, 0
  %v390 = vsel %vm373, %v330, 0
  %v393 = vsel %vm373, %v331, 0
  %v396 = vsel %vm373, %v332, 0
  %v399 = vsel %vm373, %v365, 0
  %v402 = vsel %vm373, %v366, 0
  %v405 = vsel %vm373, %v367, 0
  %v408 = vsel %vm373, %v368, 0
  %v411 = vsel %vm373, %v369, 0
  %v414 = vsel %vm373, %v370, 0
  %v417 = vsel %vm373, %v371, 0
  %v420 = vsel %vm373, %v372, 0
  %422 = vmatprep.subr.bf16.mxu0 0
  %423 = vmatpush1.bf16.xpose.msra.mxu0 %v399
  %424 = vmatprep.subr.bf16.mxu0 0
  %425 = vmatpush1.bf16.xpose.msra.mxu0 %v402
  %426 = vmatprep.subr.bf16.mxu0 0
  %427 = vmatpush1.bf16.xpose.msra.mxu0 %v405
  %428 = vmatprep.subr.bf16.mxu0 0
  %429 = vmatpush1.bf16.xpose.msra.mxu0 %v408
  %430 = vmatprep.subr.bf16.mxu0 0
  %431 = vmatpush1.bf16.xpose.msra.mxu0 %v411
  %432 = vmatprep.subr.bf16.mxu0 0
  %433 = vmatpush1.bf16.xpose.msra.mxu0 %v414
  %434 = vmatprep.subr.bf16.mxu0 0
  %435 = vmatpush1.bf16.xpose.msra.mxu0 %v417
  %436 = vmatprep.subr.bf16.mxu0 0
  %437 = vmatpush1.bf16.xpose.msra.mxu0 %v420
  %438 = vmatprep.subr.bf16.mxu0 0
  %439 = vmatpush1.bf16.xpose.msra.mxu0 0
  %440 = vmatprep.subr.bf16.mxu0 0
  %441 = vmatpush1.bf16.xpose.msra.mxu0 0
  %442 = vmatprep.subr.bf16.mxu0 0
  %443 = vmatpush1.bf16.xpose.msra.mxu0 0
  %444 = vmatprep.subr.bf16.mxu0 0
  %445 = vmatpush1.bf16.xpose.msra.mxu0 0
  %446 = vmatprep.subr.bf16.mxu0 0
  %447 = vmatpush1.bf16.xpose.msra.mxu0 0
  %448 = vmatprep.subr.bf16.mxu0 0
  %449 = vmatpush1.bf16.xpose.msra.mxu0 0
  %450 = vmatprep.subr.bf16.mxu0 0
  %451 = vmatpush1.bf16.xpose.msra.mxu0 0
  %452 = vmatprep.subr.bf16.mxu0 0
  %453 = vmatpush1.bf16.xpose.msra.mxu0 0
  %454 = vmatprep.mubr.bf16.mxu0 0
  %455 = vmatmul.mubr.bf16.gmra.mrb[0].mxu0 %v375
  %v456 = vpop.f32.mrb[0].mxu0
  %v457 = vadd.f32 %v229, %v456
  %v458 = vpop.f32.mrb[0].mxu0
  %v459 = vpop.f32.mrb[0].mxu0
  %v460 = vadd.f32 %v230, %v459
  %v461 = vpop.f32.mrb[0].mxu0
  %462 = vmatprep.mubr.bf16.mxu0 0
  %463 = vmatmul.mubr.bf16.gmra.mrb[0].mxu0 %v378
  %v464 = vpop.f32.mrb[0].mxu0
  %v465 = vadd.f32 %v231, %v464
  %v466 = vpop.f32.mrb[0].mxu0
  %v467 = vpop.f32.mrb[0].mxu0
  %v468 = vadd.f32 %v232, %v467
  %v469 = vpop.f32.mrb[0].mxu0
  %470 = vmatprep.mubr.bf16.mxu0 0
  %471 = vmatmul.mubr.bf16.gmra.mrb[0].mxu0 %v381
  %v472 = vpop.f32.mrb[0].mxu0
  %v473 = vadd.f32 %v233, %v472
  %v474 = vpop.f32.mrb[0].mxu0
  %v475 = vpop.f32.mrb[0].mxu0
  %v476 = vadd.f32 %v234, %v475
  %v477 = vpop.f32.mrb[0].mxu0
  %478 = vmatprep.mubr.bf16.mxu0 0
  %479 = vmatmul.mubr.bf16.gmra.mrb[0].mxu0 %v384
  %v480 = vpop.f32.mrb[0].mxu0
  %v481 = vadd.f32 %v235, %v480
  %v482 = vpop.f32.mrb[0].mxu0
  %v483 = vpop.f32.mrb[0].mxu0
  %v484 = vadd.f32 %v236, %v483
  %v485 = vpop.f32.mrb[0].mxu0
  %486 = vmatprep.mubr.bf16.mxu0 0
  %487 = vmatmul.mubr.bf16.gmra.mrb[0].mxu0 %v387
  %v488 = vpop.f32.mrb[0].mxu0
  %v489 = vadd.f32 %v237, %v488
  %v490 = vpop.f32.mrb[0].mxu0
  %v491 = vpop.f32.mrb[0].mxu0
  %v492 = vadd.f32 %v238, %v491
  %v493 = vpop.f32.mrb[0].mxu0
  %494 = vmatprep.mubr.bf16.mxu0 0
  %495 = vmatmul.mubr.bf16.gmra.mrb[0].mxu0 %v390
  %v496 = vpop.f32.mrb[0].mxu0
  %v497 = vadd.f32 %v239, %v496
  %v498 = vpop.f32.mrb[0].mxu0
  %v499 = vpop.f32.mrb[0].mxu0
  %v500 = vadd.f32 %v240, %v499
  %v501 = vpop.f32.mrb[0].mxu0
  %502 = vmatprep.mubr.bf16.mxu0 0
  %503 = vmatmul.mubr.bf16.gmra.mrb[0].mxu0 %v393
  %v504 = vpop.f32.mrb[0].mxu0
  %v505 = vadd.f32 %v241, %v504
  %v506 = vpop.f32.mrb[0].mxu0
  %v507 = vpop.f32.mrb[0].mxu0
  %v508 = vadd.f32 %v242, %v507
  %v509 = vpop.f32.mrb[0].mxu0
  %510 = vmatprep.mubr.bf16.mxu0 0
  %511 = vmatmul.mubr.bf16.gmra.mrb[0].mxu0 %v396
  %v512 = vpop.f32.mrb[0].mxu0
  %v513 = vadd.f32 %v243, %v512
  %v514 = vpop.f32.mrb[0].mxu0
  %v515 = vpop.f32.mrb[0].mxu0
  %v516 = vadd.f32 %v244, %v515
  %v517 = vpop.f32.mrb[0].mxu0
  %518 = vdwg.mxu0
  %v535 = vunpack.c.l.b16 %v117
  %v536 = vunpack.c.l.b16 %v118
  %v537 = vunpack.c.l.b16 %v119
  %v538 = vunpack.c.l.b16 %v120
  %v539 = vunpack.c.l.b16 %v121
  %v540 = vunpack.c.l.b16 %v122
  %v541 = vunpack.c.l.b16 %v123
  %v542 = vunpack.c.l.b16 %v124
  %v543 = vunpack.c.l.b16 %v125
  %v544 = vunpack.c.l.b16 %v126
  %v545 = vunpack.c.l.b16 %v127
  %v546 = vunpack.c.l.b16 %v128
  %v547 = vunpack.c.l.b16 %v129
  %v548 = vunpack.c.l.b16 %v130
  %v549 = vunpack.c.l.b16 %v131
  %v550 = vunpack.c.l.b16 %v132
  %v551 = vpack.c.b16 %v536, %v535
  %v552 = vpack.c.b16 %v538, %v537
  %v553 = vpack.c.b16 %v540, %v539
  %v554 = vpack.c.b16 %v542, %v541
  %v555 = vpack.c.b16 %v544, %v543
  %v556 = vpack.c.b16 %v546, %v545
  %v557 = vpack.c.b16 %v548, %v547
  %v558 = vpack.c.b16 %v550, %v549
  %v575 = vunpack.c.l.b16 %v181
  %v576 = vunpack.c.l.b16 %v182
  %v577 = vunpack.c.l.b16 %v183
  %v578 = vunpack.c.l.b16 %v184
  %v579 = vunpack.c.l.b16 %v185
  %v580 = vunpack.c.l.b16 %v186
  %v581 = vunpack.c.l.b16 %v187
  %v582 = vunpack.c.l.b16 %v188
  %v583 = vunpack.c.l.b16 %v189
  %v584 = vunpack.c.l.b16 %v190
  %v585 = vunpack.c.l.b16 %v191
  %v586 = vunpack.c.l.b16 %v192
  %v587 = vunpack.c.l.b16 %v193
  %v588 = vunpack.c.l.b16 %v194
  %v589 = vunpack.c.l.b16 %v195
  %v590 = vunpack.c.l.b16 %v196
  %v591 = vpack.c.b16 %v576, %v575
  %v592 = vpack.c.b16 %v578, %v577
  %v593 = vpack.c.b16 %v580, %v579
  %v594 = vpack.c.b16 %v582, %v581
  %v595 = vpack.c.b16 %v584, %v583
  %v596 = vpack.c.b16 %v586, %v585
  %v597 = vpack.c.b16 %v588, %v587
  %v598 = vpack.c.b16 %v590, %v589
  %v600 = vsel %vm373, %v551, 0
  %v603 = vsel %vm373, %v552, 0
  %v606 = vsel %vm373, %v553, 0
  %v609 = vsel %vm373, %v554, 0
  %v612 = vsel %vm373, %v555, 0
  %v615 = vsel %vm373, %v556, 0
  %v618 = vsel %vm373, %v557, 0
  %v621 = vsel %vm373, %v558, 0
  %v624 = vsel %vm373, %v591, 0
  %v627 = vsel %vm373, %v592, 0
  %v630 = vsel %vm373, %v593, 0
  %v633 = vsel %vm373, %v594, 0
  %v636 = vsel %vm373, %v595, 0
  %v639 = vsel %vm373, %v596, 0
  %v642 = vsel %vm373, %v597, 0
  %v645 = vsel %vm373, %v598, 0
  %647 = vmatprep.subr.bf16.mxu0 0
  %648 = vmatpush1.bf16.xpose.msra.mxu0 %v624
  %649 = vmatprep.subr.bf16.mxu0 0
  %650 = vmatpush1.bf16.xpose.msra.mxu0 %v627
  %651 = vmatprep.subr.bf16.mxu0 0
  %652 = vmatpush1.bf16.xpose.msra.mxu0 %v630
  %653 = vmatprep.subr.bf16.mxu0 0
  %654 = vmatpush1.bf16.xpose.msra.mxu0 %v633
  %655 = vmatprep.subr.bf16.mxu0 0
  %656 = vmatpush1.bf16.xpose.msra.mxu0 %v636
  %657 = vmatprep.subr.bf16.mxu0 0
  %658 = vmatpush1.bf16.xpose.msra.mxu0 %v639
  %659 = vmatprep.subr.bf16.mxu0 0
  %660 = vmatpush1.bf16.xpose.msra.mxu0 %v642
  %661 = vmatprep.subr.bf16.mxu0 0
  %662 = vmatpush1.bf16.xpose.msra.mxu0 %v645
  %663 = vmatprep.subr.bf16.mxu0 0
  %664 = vmatpush1.bf16.xpose.msra.mxu0 0
  %665 = vmatprep.subr.bf16.mxu0 0
  %666 = vmatpush1.bf16.xpose.msra.mxu0 0
  %667 = vmatprep.subr.bf16.mxu0 0
  %668 = vmatpush1.bf16.xpose.msra.mxu0 0
  %669 = vmatprep.subr.bf16.mxu0 0
  %670 = vmatpush1.bf16.xpose.msra.mxu0 0
  %671 = vmatprep.subr.bf16.mxu0 0
  %672 = vmatpush1.bf16.xpose.msra.mxu0 0
  %673 = vmatprep.subr.bf16.mxu0 0
  %674 = vmatpush1.bf16.xpose.msra.mxu0 0
  %675 = vmatprep.subr.bf16.mxu0 0
  %676 = vmatpush1.bf16.xpose.msra.mxu0 0
  %677 = vmatprep.subr.bf16.mxu0 0
  %678 = vmatpush1.bf16.xpose.msra.mxu0 0
  %679 = vmatprep.mubr.bf16.mxu0 0
  %680 = vmatmul.mubr.bf16.gmra.mrb[0].mxu0 %v600
  %v681 = vpop.f32.mrb[0].mxu0
  %v682 = vadd.f32 %v245, %v681
  %v683 = vpop.f32.mrb[0].mxu0
  %v684 = vpop.f32.mrb[0].mxu0
  %v685 = vadd.f32 %v246, %v684
  %v686 = vpop.f32.mrb[0].mxu0
  %687 = vmatprep.mubr.bf16.mxu0 0
  %688 = vmatmul.mubr.bf16.gmra.mrb[0].mxu0 %v603
  %v689 = vpop.f32.mrb[0].mxu0
  %v690 = vadd.f32 %v247, %v689
  %v691 = vpop.f32.mrb[0].mxu0
  %v692 = vpop.f32.mrb[0].mxu0
  %v693 = vadd.f32 %v248, %v692
  %v694 = vpop.f32.mrb[0].mxu0
  %695 = vmatprep.mubr.bf16.mxu0 0
  %696 = vmatmul.mubr.bf16.gmra.mrb[0].mxu0 %v606
  %v697 = vpop.f32.mrb[0].mxu0
  %v698 = vadd.f32 %v249, %v697
  %v699 = vpop.f32.mrb[0].mxu0
  %v700 = vpop.f32.mrb[0].mxu0
  %v701 = vadd.f32 %v250, %v700
  %v702 = vpop.f32.mrb[0].mxu0
  %703 = vmatprep.mubr.bf16.mxu0 0
  %704 = vmatmul.mubr.bf16.gmra.mrb[0].mxu0 %v609
  %v705 = vpop.f32.mrb[0].mxu0
  %v706 = vadd.f32 %v251, %v705
  %v707 = vpop.f32.mrb[0].mxu0
  %v708 = vpop.f32.mrb[0].mxu0
  %v709 = vadd.f32 %v252, %v708
  %v710 = vpop.f32.mrb[0].mxu0
  %711 = vmatprep.mubr.bf16.mxu0 0
  %712 = vmatmul.mubr.bf16.gmra.mrb[0].mxu0 %v612
  %v713 = vpop.f32.mrb[0].mxu0
  %v714 = vadd.f32 %v253, %v713
  %v715 = vpop.f32.mrb[0].mxu0
  %v716 = vpop.f32.mrb[0].mxu0
  %v717 = vadd.f32 %v254, %v716
  %v718 = vpop.f32.mrb[0].mxu0
  %719 = vmatprep.mubr.bf16.mxu0 0
  %720 = vmatmul.mubr.bf16.gmra.mrb[0].mxu0 %v615
  %v721 = vpop.f32.mrb[0].mxu0
  %v722 = vadd.f32 %v255, %v721
  %v723 = vpop.f32.mrb[0].mxu0
  %v724 = vpop.f32.mrb[0].mxu0
  %v725 = vadd.f32 %v256, %v724
  %v726 = vpop.f32.mrb[0].mxu0
  %727 = vmatprep.mubr.bf16.mxu0 0
  %728 = vmatmul.mubr.bf16.gmra.mrb[0].mxu0 %v618
  %v729 = vpop.f32.mrb[0].mxu0
  %v730 = vadd.f32 %v257, %v729
  %v731 = vpop.f32.mrb[0].mxu0
  %v732 = vpop.f32.mrb[0].mxu0
  %v733 = vadd.f32 %v258, %v732
  %v734 = vpop.f32.mrb[0].mxu0
  %735 = vmatprep.mubr.bf16.mxu0 0
  %736 = vmatmul.mubr.bf16.gmra.mrb[0].mxu0 %v621
  %v737 = vpop.f32.mrb[0].mxu0
  %v738 = vadd.f32 %v259, %v737
  %v739 = vpop.f32.mrb[0].mxu0
  %v740 = vpop.f32.mrb[0].mxu0
  %v741 = vadd.f32 %v260, %v740
  %v742 = vpop.f32.mrb[0].mxu0
  %743 = vdwg.mxu0
  %v760 = vunpack.c.l.b16 %v133
  %v761 = vunpack.c.l.b16 %v134
  %v762 = vunpack.c.l.b16 %v135
  %v763 = vunpack.c.l.b16 %v136
  %v764 = vunpack.c.l.b16 %v137
  %v765 = vunpack.c.l.b16 %v138
  %v766 = vunpack.c.l.b16 %v139
  %v767 = vunpack.c.l.b16 %v140
  %v768 = vunpack.c.l.b16 %v141
  %v769 = vunpack.c.l.b16 %v142
  %v770 = vunpack.c.l.b16 %v143
  %v771 = vunpack.c.l.b16 %v144
  %v772 = vunpack.c.l.b16 %v145
  %v773 = vunpack.c.l.b16 %v146
  %v774 = vunpack.c.l.b16 %v147
  %v775 = vunpack.c.l.b16 %v148
  %v776 = vpack.c.b16 %v761, %v760
  %v777 = vpack.c.b16 %v763, %v762
  %v778 = vpack.c.b16 %v765, %v764
  %v779 = vpack.c.b16 %v767, %v766
  %v780 = vpack.c.b16 %v769, %v768
  %v781 = vpack.c.b16 %v771, %v770
  %v782 = vpack.c.b16 %v773, %v772
  %v783 = vpack.c.b16 %v775, %v774
  %v800 = vunpack.c.l.b16 %v197
  %v801 = vunpack.c.l.b16 %v198
  %v802 = vunpack.c.l.b16 %v199
  %v803 = vunpack.c.l.b16 %v200
  %v804 = vunpack.c.l.b16 %v201
  %v805 = vunpack.c.l.b16 %v202
  %v806 = vunpack.c.l.b16 %v203
  %v807 = vunpack.c.l.b16 %v204
  %v808 = vunpack.c.l.b16 %v205
  %v809 = vunpack.c.l.b16 %v206
  %v810 = vunpack.c.l.b16 %v207
  %v811 = vunpack.c.l.b16 %v208
  %v812 = vunpack.c.l.b16 %v209
  %v813 = vunpack.c.l.b16 %v210
  %v814 = vunpack.c.l.b16 %v211
  %v815 = vunpack.c.l.b16 %v212
  %v816 = vpack.c.b16 %v801, %v800
  %v817 = vpack.c.b16 %v803, %v802
  %v818 = vpack.c.b16 %v805, %v804
  %v819 = vpack.c.b16 %v807, %v806
  %v820 = vpack.c.b16 %v809, %v808
  %v821 = vpack.c.b16 %v811, %v810
  %v822 = vpack.c.b16 %v813, %v812
  %v823 = vpack.c.b16 %v815, %v814
  %v825 = vsel %vm373, %v776, 0
  %v828 = vsel %vm373, %v777, 0
  %v831 = vsel %vm373, %v778, 0
  %v834 = vsel %vm373, %v779, 0
  %v837 = vsel %vm373, %v780, 0
  %v840 = vsel %vm373, %v781, 0
  %v843 = vsel %vm373, %v782, 0
  %v846 = vsel %vm373, %v783, 0
  %v849 = vsel %vm373, %v816, 0
  %v852 = vsel %vm373, %v817, 0
  %v855 = vsel %vm373, %v818, 0
  %v858 = vsel %vm373, %v819, 0
  %v861 = vsel %vm373, %v820, 0
  %v864 = vsel %vm373, %v821, 0
  %v867 = vsel %vm373, %v822, 0
  %v870 = vsel %vm373, %v823, 0
  %872 = vmatprep.subr.bf16.mxu0 0
  %873 = vmatpush1.bf16.xpose.msra.mxu0 %v849
  %874 = vmatprep.subr.bf16.mxu0 0
  %875 = vmatpush1.bf16.xpose.msra.mxu0 %v852
  %876 = vmatprep.subr.bf16.mxu0 0
  %877 = vmatpush1.bf16.xpose.msra.mxu0 %v855
  %878 = vmatprep.subr.bf16.mxu0 0
  %879 = vmatpush1.bf16.xpose.msra.mxu0 %v858
  %880 = vmatprep.subr.bf16.mxu0 0
  %881 = vmatpush1.bf16.xpose.msra.mxu0 %v861
  %882 = vmatprep.subr.bf16.mxu0 0
  %883 = vmatpush1.bf16.xpose.msra.mxu0 %v864
  %884 = vmatprep.subr.bf16.mxu0 0
  %885 = vmatpush1.bf16.xpose.msra.mxu0 %v867
  %886 = vmatprep.subr.bf16.mxu0 0
  %887 = vmatpush1.bf16.xpose.msra.mxu0 %v870
  %888 = vmatprep.subr.bf16.mxu0 0
  %889 = vmatpush1.bf16.xpose.msra.mxu0 0
  %890 = vmatprep.subr.bf16.mxu0 0
  %891 = vmatpush1.bf16.xpose.msra.mxu0 0
  %892 = vmatprep.subr.bf16.mxu0 0
  %893 = vmatpush1.bf16.xpose.msra.mxu0 0
  %894 = vmatprep.subr.bf16.mxu0 0
  %895 = vmatpush1.bf16.xpose.msra.mxu0 0
  %896 = vmatprep.subr.bf16.mxu0 0
  %897 = vmatpush1.bf16.xpose.msra.mxu0 0
  %898 = vmatprep.subr.bf16.mxu0 0
  %899 = vmatpush1.bf16.xpose.msra.mxu0 0
  %900 = vmatprep.subr.bf16.mxu0 0
  %901 = vmatpush1.bf16.xpose.msra.mxu0 0
  %902 = vmatprep.subr.bf16.mxu0 0
  %903 = vmatpush1.bf16.xpose.msra.mxu0 0
  %904 = vmatprep.mubr.bf16.mxu0 0
  %905 = vmatmul.mubr.bf16.gmra.mrb[0].mxu0 %v825
  %v906 = vpop.f32.mrb[0].mxu0
  %v907 = vadd.f32 %v261, %v906
  %v908 = vpop.f32.mrb[0].mxu0
  %v909 = vpop.f32.mrb[0].mxu0
  %v910 = vadd.f32 %v262, %v909
  %v911 = vpop.f32.mrb[0].mxu0
  %912 = vmatprep.mubr.bf16.mxu0 0
  %913 = vmatmul.mubr.bf16.gmra.mrb[0].mxu0 %v828
  %v914 = vpop.f32.mrb[0].mxu0
  %v915 = vadd.f32 %v263, %v914
  %v916 = vpop.f32.mrb[0].mxu0
  %v917 = vpop.f32.mrb[0].mxu0
  %v918 = vadd.f32 %v264, %v917
  %v919 = vpop.f32.mrb[0].mxu0
  %920 = vmatprep.mubr.bf16.mxu0 0
  %921 = vmatmul.mubr.bf16.gmra.mrb[0].mxu0 %v831
  %v922 = vpop.f32.mrb[0].mxu0
  %v923 = vadd.f32 %v265, %v922
  %v924 = vpop.f32.mrb[0].mxu0
  %v925 = vpop.f32.mrb[0].mxu0
  %v926 = vadd.f32 %v266, %v925
  %v927 = vpop.f32.mrb[0].mxu0
  %928 = vmatprep.mubr.bf16.mxu0 0
  %929 = vmatmul.mubr.bf16.gmra.mrb[0].mxu0 %v834
  %v930 = vpop.f32.mrb[0].mxu0
  %v931 = vadd.f32 %v267, %v930
  %v932 = vpop.f32.mrb[0].mxu0
  %v933 = vpop.f32.mrb[0].mxu0
  %v934 = vadd.f32 %v268, %v933
  %v935 = vpop.f32.mrb[0].mxu0
  %936 = vmatprep.mubr.bf16.mxu0 0
  %937 = vmatmul.mubr.bf16.gmra.mrb[0].mxu0 %v837
  %v938 = vpop.f32.mrb[0].mxu0
  %v939 = vadd.f32 %v269, %v938
  %v940 = vpop.f32.mrb[0].mxu0
  %v941 = vpop.f32.mrb[0].mxu0
  %v942 = vadd.f32 %v270, %v941
  %v943 = vpop.f32.mrb[0].mxu0
  %944 = vmatprep.mubr.bf16.mxu0 0
  %945 = vmatmul.mubr.bf16.gmra.mrb[0].mxu0 %v840
  %v946 = vpop.f32.mrb[0].mxu0
  %v947 = vadd.f32 %v271, %v946
  %v948 = vpop.f32.mrb[0].mxu0
  %v949 = vpop.f32.mrb[0].mxu0
  %v950 = vadd.f32 %v272, %v949
  %v951 = vpop.f32.mrb[0].mxu0
  %952 = vmatprep.mubr.bf16.mxu0 0
  %953 = vmatmul.mubr.bf16.gmra.mrb[0].mxu0 %v843
  %v954 = vpop.f32.mrb[0].mxu0
  %v955 = vadd.f32 %v273, %v954
  %v956 = vpop.f32.mrb[0].mxu0
  %v957 = vpop.f32.mrb[0].mxu0
  %v958 = vadd.f32 %v274, %v957
  %v959 = vpop.f32.mrb[0].mxu0
  %960 = vmatprep.mubr.bf16.mxu0 0
  %961 = vmatmul.mubr.bf16.gmra.mrb[0].mxu0 %v846
  %v962 = vpop.f32.mrb[0].mxu0
  %v963 = vadd.f32 %v275, %v962
  %v964 = vpop.f32.mrb[0].mxu0
  %v965 = vpop.f32.mrb[0].mxu0
  %v966 = vadd.f32 %v276, %v965
  %v967 = vpop.f32.mrb[0].mxu0
  %968 = vdwg.mxu0
  %v985 = vunpack.c.l.b16 %v149
  %v986 = vunpack.c.l.b16 %v150
  %v987 = vunpack.c.l.b16 %v151
  %v988 = vunpack.c.l.b16 %v152
  %v989 = vunpack.c.l.b16 %v153
  %v990 = vunpack.c.l.b16 %v154
  %v991 = vunpack.c.l.b16 %v155
  %v992 = vunpack.c.l.b16 %v156
  %v993 = vunpack.c.l.b16 %v157
  %v994 = vunpack.c.l.b16 %v158
  %v995 = vunpack.c.l.b16 %v159
  %v996 = vunpack.c.l.b16 %v160
  %v997 = vunpack.c.l.b16 %v161
  %v998 = vunpack.c.l.b16 %v162
  %v999 = vunpack.c.l.b16 %v163
  %v1000 = vunpack.c.l.b16 %v164
  %v1001 = vpack.c.b16 %v986, %v985
  %v1002 = vpack.c.b16 %v988, %v987
  %v1003 = vpack.c.b16 %v990, %v989
  %v1004 = vpack.c.b16 %v992, %v991
  %v1005 = vpack.c.b16 %v994, %v993
  %v1006 = vpack.c.b16 %v996, %v995
  %v1007 = vpack.c.b16 %v998, %v997
  %v1008 = vpack.c.b16 %v1000, %v999
  %v1025 = vunpack.c.l.b16 %v213
  %v1026 = vunpack.c.l.b16 %v214
  %v1027 = vunpack.c.l.b16 %v215
  %v1028 = vunpack.c.l.b16 %v216
  %v1029 = vunpack.c.l.b16 %v217
  %v1030 = vunpack.c.l.b16 %v218
  %v1031 = vunpack.c.l.b16 %v219
  %v1032 = vunpack.c.l.b16 %v220
  %v1033 = vunpack.c.l.b16 %v221
  %v1034 = vunpack.c.l.b16 %v222
  %v1035 = vunpack.c.l.b16 %v223
  %v1036 = vunpack.c.l.b16 %v224
  %v1037 = vunpack.c.l.b16 %v225
  %v1038 = vunpack.c.l.b16 %v226
  %v1039 = vunpack.c.l.b16 %v227
  %v1040 = vunpack.c.l.b16 %v228
  %v1041 = vpack.c.b16 %v1026, %v1025
  %v1042 = vpack.c.b16 %v1028, %v1027
  %v1043 = vpack.c.b16 %v1030, %v1029
  %v1044 = vpack.c.b16 %v1032, %v1031
  %v1045 = vpack.c.b16 %v1034, %v1033
  %v1046 = vpack.c.b16 %v1036, %v1035
  %v1047 = vpack.c.b16 %v1038, %v1037
  %v1048 = vpack.c.b16 %v1040, %v1039
  %v1050 = vsel %vm373, %v1001, 0
  %v1053 = vsel %vm373, %v1002, 0
  %v1056 = vsel %vm373, %v1003, 0
  %v1059 = vsel %vm373, %v1004, 0
  %v1062 = vsel %vm373, %v1005, 0
  %v1065 = vsel %vm373, %v1006, 0
  %v1068 = vsel %vm373, %v1007, 0
  %v1071 = vsel %vm373, %v1008, 0
  %v1074 = vsel %vm373, %v1041, 0
  %v1077 = vsel %vm373, %v1042, 0
  %v1080 = vsel %vm373, %v1043, 0
  %v1083 = vsel %vm373, %v1044, 0
  %v1086 = vsel %vm373, %v1045, 0
  %v1089 = vsel %vm373, %v1046, 0
  %v1092 = vsel %vm373, %v1047, 0
  %v1095 = vsel %vm373, %v1048, 0
  %1097 = vmatprep.subr.bf16.mxu0 0
  %1098 = vmatpush1.bf16.xpose.msra.mxu0 %v1074
  %1099 = vmatprep.subr.bf16.mxu0 0
  %1100 = vmatpush1.bf16.xpose.msra.mxu0 %v1077
  %1101 = vmatprep.subr.bf16.mxu0 0
  %1102 = vmatpush1.bf16.xpose.msra.mxu0 %v1080
  %1103 = vmatprep.subr.bf16.mxu0 0
  %1104 = vmatpush1.bf16.xpose.msra.mxu0 %v1083
  %1105 = vmatprep.subr.bf16.mxu0 0
  %1106 = vmatpush1.bf16.xpose.msra.mxu0 %v1086
  %1107 = vmatprep.subr.bf16.mxu0 0
  %1108 = vmatpush1.bf16.xpose.msra.mxu0 %v1089
  %1109 = vmatprep.subr.bf16.mxu0 0
  %1110 = vmatpush1.bf16.xpose.msra.mxu0 %v1092
  %1111 = vmatprep.subr.bf16.mxu0 0
  %1112 = vmatpush1.bf16.xpose.msra.mxu0 %v1095
  %1113 = vmatprep.subr.bf16.mxu0 0
  %1114 = vmatpush1.bf16.xpose.msra.mxu0 0
  %1115 = vmatprep.subr.bf16.mxu0 0
  %1116 = vmatpush1.bf16.xpose.msra.mxu0 0
  %1117 = vmatprep.subr.bf16.mxu0 0
  %1118 = vmatpush1.bf16.xpose.msra.mxu0 0
  %1119 = vmatprep.subr.bf16.mxu0 0
  %1120 = vmatpush1.bf16.xpose.msra.mxu0 0
  %1121 = vmatprep.subr.bf16.mxu0 0
  %1122 = vmatpush1.bf16.xpose.msra.mxu0 0
  %1123 = vmatprep.subr.bf16.mxu0 0
  %1124 = vmatpush1.bf16.xpose.msra.mxu0 0
  %1125 = vmatprep.subr.bf16.mxu0 0
  %1126 = vmatpush1.bf16.xpose.msra.mxu0 0
  %1127 = vmatprep.subr.bf16.mxu0 0
  %1128 = vmatpush1.bf16.xpose.msra.mxu0 0
  %1129 = vmatprep.mubr.bf16.mxu0 0
  %1130 = vmatmul.mubr.bf16.gmra.mrb[0].mxu0 %v1050
  %v1131 = vpop.f32.mrb[0].mxu0
  %v1132 = vadd.f32 %v277, %v1131
  %v1133 = vpop.f32.mrb[0].mxu0
  %v1134 = vpop.f32.mrb[0].mxu0
  %v1135 = vadd.f32 %v278, %v1134
  %v1136 = vpop.f32.mrb[0].mxu0
  %1137 = vmatprep.mubr.bf16.mxu0 0
  %1138 = vmatmul.mubr.bf16.gmra.mrb[0].mxu0 %v1053
  %v1139 = vpop.f32.mrb[0].mxu0
  %v1140 = vadd.f32 %v279, %v1139
  %v1141 = vpop.f32.mrb[0].mxu0
  %v1142 = vpop.f32.mrb[0].mxu0
  %v1143 = vadd.f32 %v280, %v1142
  %v1144 = vpop.f32.mrb[0].mxu0
  %1145 = vmatprep.mubr.bf16.mxu0 0
  %1146 = vmatmul.mubr.bf16.gmra.mrb[0].mxu0 %v1056
  %v1147 = vpop.f32.mrb[0].mxu0
  %v1148 = vadd.f32 %v281, %v1147
  %v1149 = vpop.f32.mrb[0].mxu0
  %v1150 = vpop.f32.mrb[0].mxu0
  %v1151 = vadd.f32 %v282, %v1150
  %v1152 = vpop.f32.mrb[0].mxu0
  %1153 = vmatprep.mubr.bf16.mxu0 0
  %1154 = vmatmul.mubr.bf16.gmra.mrb[0].mxu0 %v1059
  %v1155 = vpop.f32.mrb[0].mxu0
  %v1156 = vadd.f32 %v283, %v1155
  %v1157 = vpop.f32.mrb[0].mxu0
  %v1158 = vpop.f32.mrb[0].mxu0
  %v1159 = vadd.f32 %v284, %v1158
  %v1160 = vpop.f32.mrb[0].mxu0
  %1161 = vmatprep.mubr.bf16.mxu0 0
  %1162 = vmatmul.mubr.bf16.gmra.mrb[0].mxu0 %v1062
  %v1163 = vpop.f32.mrb[0].mxu0
  %v1164 = vadd.f32 %v285, %v1163
  %v1165 = vpop.f32.mrb[0].mxu0
  %v1166 = vpop.f32.mrb[0].mxu0
  %v1167 = vadd.f32 %v286, %v1166
  %v1168 = vpop.f32.mrb[0].mxu0
  %1169 = vmatprep.mubr.bf16.mxu0 0
  %1170 = vmatmul.mubr.bf16.gmra.mrb[0].mxu0 %v1065
  %v1171 = vpop.f32.mrb[0].mxu0
  %v1172 = vadd.f32 %v287, %v1171
  %v1173 = vpop.f32.mrb[0].mxu0
  %v1174 = vpop.f32.mrb[0].mxu0
  %v1175 = vadd.f32 %v288, %v1174
  %v1176 = vpop.f32.mrb[0].mxu0
  %1177 = vmatprep.mubr.bf16.mxu0 0
  %1178 = vmatmul.mubr.bf16.gmra.mrb[0].mxu0 %v1068
  %v1179 = vpop.f32.mrb[0].mxu0
  %v1180 = vadd.f32 %v289, %v1179
  %v1181 = vpop.f32.mrb[0].mxu0
  %v1182 = vpop.f32.mrb[0].mxu0
  %v1183 = vadd.f32 %v290, %v1182
  %v1184 = vpop.f32.mrb[0].mxu0
  %1185 = vmatprep.mubr.bf16.mxu0 0
  %1186 = vmatmul.mubr.bf16.gmra.mrb[0].mxu0 %v1071
  %v1187 = vpop.f32.mrb[0].mxu0
  %v1188 = vadd.f32 %v291, %v1187
  %v1189 = vpop.f32.mrb[0].mxu0
  %v1190 = vpop.f32.mrb[0].mxu0
  %v1191 = vadd.f32 %v292, %v1190
  %v1192 = vpop.f32.mrb[0].mxu0
  %1193 = vdwg.mxu0
  %v1194 = vmax.f32 %v457, %v682
  %v1195 = vmax.f32 %v1194, %v907
  %v1196 = vmax.f32 %v1195, %v1132
  %v1197 = vmax.f32 %v460, %v685
  %v1198 = vmax.f32 %v1197, %v910
  %v1199 = vmax.f32 %v1198, %v1135
  %v1200 = vmax.f32 %v465, %v690
  %v1201 = vmax.f32 %v1200, %v915
  %v1202 = vmax.f32 %v1201, %v1140
  %v1203 = vmax.f32 %v468, %v693
  %v1204 = vmax.f32 %v1203, %v918
  %v1205 = vmax.f32 %v1204, %v1143
  %v1206 = vmax.f32 %v473, %v698
  %v1207 = vmax.f32 %v1206, %v923
  %v1208 = vmax.f32 %v1207, %v1148
  %v1209 = vmax.f32 %v476, %v701
  %v1210 = vmax.f32 %v1209, %v926
  %v1211 = vmax.f32 %v1210, %v1151
  %v1212 = vmax.f32 %v481, %v706
  %v1213 = vmax.f32 %v1212, %v931
  %v1214 = vmax.f32 %v1213, %v1156
  %v1215 = vmax.f32 %v484, %v709
  %v1216 = vmax.f32 %v1215, %v934
  %v1217 = vmax.f32 %v1216, %v1159
  %v1218 = vmax.f32 %v489, %v714
  %v1219 = vmax.f32 %v1218, %v939
  %v1220 = vmax.f32 %v1219, %v1164
  %v1221 = vmax.f32 %v492, %v717
  %v1222 = vmax.f32 %v1221, %v942
  %v1223 = vmax.f32 %v1222, %v1167
  %v1224 = vmax.f32 %v497, %v722
  %v1225 = vmax.f32 %v1224, %v947
  %v1226 = vmax.f32 %v1225, %v1172
  %v1227 = vmax.f32 %v500, %v725
  %v1228 = vmax.f32 %v1227, %v950
  %v1229 = vmax.f32 %v1228, %v1175
  %v1230 = vmax.f32 %v505, %v730
  %v1231 = vmax.f32 %v1230, %v955
  %v1232 = vmax.f32 %v1231, %v1180
  %v1233 = vmax.f32 %v508, %v733
  %v1234 = vmax.f32 %v1233, %v958
  %v1235 = vmax.f32 %v1234, %v1183
  %v1236 = vmax.f32 %v513, %v738
  %v1237 = vmax.f32 %v1236, %v963
  %v1238 = vmax.f32 %v1237, %v1188
  %v1239 = vmax.f32 %v516, %v741
  %v1240 = vmax.f32 %v1239, %v966
  %v1241 = vmax.f32 %v1240, %v1191
  %v1242 = vsub.f32 %v457, %v1196
  %v1243 = vsub.f32 %v460, %v1199
  %v1244 = vsub.f32 %v465, %v1202
  %v1245 = vsub.f32 %v468, %v1205
  %v1246 = vsub.f32 %v473, %v1208
  %v1247 = vsub.f32 %v476, %v1211
  %v1248 = vsub.f32 %v481, %v1214
  %v1249 = vsub.f32 %v484, %v1217
  %v1250 = vsub.f32 %v489, %v1220
  %v1251 = vsub.f32 %v492, %v1223
  %v1252 = vsub.f32 %v497, %v1226
  %v1253 = vsub.f32 %v500, %v1229
  %v1254 = vsub.f32 %v505, %v1232
  %v1255 = vsub.f32 %v508, %v1235
  %v1256 = vsub.f32 %v513, %v1238
  %v1257 = vsub.f32 %v516, %v1241
  %v1258 = vsub.f32 %v682, %v1196
  %v1259 = vsub.f32 %v685, %v1199
  %v1260 = vsub.f32 %v690, %v1202
  %v1261 = vsub.f32 %v693, %v1205
  %v1262 = vsub.f32 %v698, %v1208
  %v1263 = vsub.f32 %v701, %v1211
  %v1264 = vsub.f32 %v706, %v1214
  %v1265 = vsub.f32 %v709, %v1217
  %v1266 = vsub.f32 %v714, %v1220
  %v1267 = vsub.f32 %v717, %v1223
  %v1268 = vsub.f32 %v722, %v1226
  %v1269 = vsub.f32 %v725, %v1229
  %v1270 = vsub.f32 %v730, %v1232
  %v1271 = vsub.f32 %v733, %v1235
  %v1272 = vsub.f32 %v738, %v1238
  %v1273 = vsub.f32 %v741, %v1241
  %v1274 = vsub.f32 %v907, %v1196
  %v1275 = vsub.f32 %v910, %v1199
  %v1276 = vsub.f32 %v915, %v1202
  %v1277 = vsub.f32 %v918, %v1205
  %v1278 = vsub.f32 %v923, %v1208
  %v1279 = vsub.f32 %v926, %v1211
  %v1280 = vsub.f32 %v931, %v1214
  %v1281 = vsub.f32 %v934, %v1217
  %v1282 = vsub.f32 %v939, %v1220
  %v1283 = vsub.f32 %v942, %v1223
  %v1284 = vsub.f32 %v947, %v1226
  %v1285 = vsub.f32 %v950, %v1229
  %v1286 = vsub.f32 %v955, %v1232
  %v1287 = vsub.f32 %v958, %v1235
  %v1288 = vsub.f32 %v963, %v1238
  %v1289 = vsub.f32 %v966, %v1241
  %v1290 = vsub.f32 %v1132, %v1196
  %v1291 = vsub.f32 %v1135, %v1199
  %v1292 = vsub.f32 %v1140, %v1202
  %v1293 = vsub.f32 %v1143, %v1205
  %v1294 = vsub.f32 %v1148, %v1208
  %v1295 = vsub.f32 %v1151, %v1211
  %v1296 = vsub.f32 %v1156, %v1214
  %v1297 = vsub.f32 %v1159, %v1217
  %v1298 = vsub.f32 %v1164, %v1220
  %v1299 = vsub.f32 %v1167, %v1223
  %v1300 = vsub.f32 %v1172, %v1226
  %v1301 = vsub.f32 %v1175, %v1229
  %v1302 = vsub.f32 %v1180, %v1232
  %v1303 = vsub.f32 %v1183, %v1235
  %v1304 = vsub.f32 %v1188, %v1238
  %v1305 = vsub.f32 %v1191, %v1241
  %v1306 = vmul.f32 %v1242, 1.442695
  %v1307 = vpow.pop %v1306
  %v1308 = vmul.f32 %v1243, 1.442695
  %v1309 = vpow.pop %v1308
  %v1310 = vmul.f32 %v1244, 1.442695
  %v1311 = vpow.pop %v1310
  %v1312 = vmul.f32 %v1245, 1.442695
  %v1313 = vpow.pop %v1312
  %v1314 = vmul.f32 %v1246, 1.442695
  %v1315 = vpow.pop %v1314
  %v1316 = vmul.f32 %v1247, 1.442695
  %v1317 = vpow.pop %v1316
  %v1318 = vmul.f32 %v1248, 1.442695
  %v1319 = vpow.pop %v1318
  %v1320 = vmul.f32 %v1249, 1.442695
  %v1321 = vpow.pop %v1320
  %v1322 = vmul.f32 %v1250, 1.442695
  %v1323 = vpow.pop %v1322
  %v1324 = vmul.f32 %v1251, 1.442695
  %v1325 = vpow.pop %v1324
  %v1326 = vmul.f32 %v1252, 1.442695
  %v1327 = vpow.pop %v1326
  %v1328 = vmul.f32 %v1253, 1.442695
  %v1329 = vpow.pop %v1328
  %v1330 = vmul.f32 %v1254, 1.442695
  %v1331 = vpow.pop %v1330
  %v1332 = vmul.f32 %v1255, 1.442695
  %v1333 = vpow.pop %v1332
  %v1334 = vmul.f32 %v1256, 1.442695
  %v1335 = vpow.pop %v1334
  %v1336 = vmul.f32 %v1257, 1.442695
  %v1337 = vpow.pop %v1336
  %v1338 = vmul.f32 %v1258, 1.442695
  %v1339 = vpow.pop %v1338
  %v1340 = vmul.f32 %v1259, 1.442695
  %v1341 = vpow.pop %v1340
  %v1342 = vmul.f32 %v1260, 1.442695
  %v1343 = vpow.pop %v1342
  %v1344 = vmul.f32 %v1261, 1.442695
  %v1345 = vpow.pop %v1344
  %v1346 = vmul.f32 %v1262, 1.442695
  %v1347 = vpow.pop %v1346
  %v1348 = vmul.f32 %v1263, 1.442695
  %v1349 = vpow.pop %v1348
  %v1350 = vmul.f32 %v1264, 1.442695
  %v1351 = vpow.pop %v1350
  %v1352 = vmul.f32 %v1265, 1.442695
  %v1353 = vpow.pop %v1352
  %v1354 = vmul.f32 %v1266, 1.442695
  %v1355 = vpow.pop %v1354
  %v1356 = vmul.f32 %v1267, 1.442695
  %v1357 = vpow.pop %v1356
  %v1358 = vmul.f32 %v1268, 1.442695
  %v1359 = vpow.pop %v1358
  %v1360 = vmul.f32 %v1269, 1.442695
  %v1361 = vpow.pop %v1360
  %v1362 = vmul.f32 %v1270, 1.442695
  %v1363 = vpow.pop %v1362
  %v1364 = vmul.f32 %v1271, 1.442695
  %v1365 = vpow.pop %v1364
  %v1366 = vmul.f32 %v1272, 1.442695
  %v1367 = vpow.pop %v1366
  %v1368 = vmul.f32 %v1273, 1.442695
  %v1369 = vpow.pop %v1368
  %v1370 = vmul.f32 %v1274, 1.442695
  %v1371 = vpow.pop %v1370
  %v1372 = vmul.f32 %v1275, 1.442695
  %v1373 = vpow.pop %v1372
  %v1374 = vmul.f32 %v1276, 1.442695
  %v1375 = vpow.pop %v1374
  %v1376 = vmul.f32 %v1277, 1.442695
  %v1377 = vpow.pop %v1376
  %v1378 = vmul.f32 %v1278, 1.442695
  %v1379 = vpow.pop %v1378
  %v1380 = vmul.f32 %v1279, 1.442695
  %v1381 = vpow.pop %v1380
  %v1382 = vmul.f32 %v1280, 1.442695
  %v1383 = vpow.pop %v1382
  %v1384 = vmul.f32 %v1281, 1.442695
  %v1385 = vpow.pop %v1384
  %v1386 = vmul.f32 %v1282, 1.442695
  %v1387 = vpow.pop %v1386
  %v1388 = vmul.f32 %v1283, 1.442695
  %v1389 = vpow.pop %v1388
  %v1390 = vmul.f32 %v1284, 1.442695
  %v1391 = vpow.pop %v1390
  %v1392 = vmul.f32 %v1285, 1.442695
  %v1393 = vpow.pop %v1392
  %v1394 = vmul.f32 %v1286, 1.442695
  %v1395 = vpow.pop %v1394
  %v1396 = vmul.f32 %v1287, 1.442695
  %v1397 = vpow.pop %v1396
  %v1398 = vmul.f32 %v1288, 1.442695
  %v1399 = vpow.pop %v1398
  %v1400 = vmul.f32 %v1289, 1.442695
  %v1401 = vpow.pop %v1400
  %v1402 = vmul.f32 %v1290, 1.442695
  %v1403 = vpow.pop %v1402
  %v1404 = vmul.f32 %v1291, 1.442695
  %v1405 = vpow.pop %v1404
  %v1406 = vmul.f32 %v1292, 1.442695
  %v1407 = vpow.pop %v1406
  %v1408 = vmul.f32 %v1293, 1.442695
  %v1409 = vpow.pop %v1408
  %v1410 = vmul.f32 %v1294, 1.442695
  %v1411 = vpow.pop %v1410
  %v1412 = vmul.f32 %v1295, 1.442695
  %v1413 = vpow.pop %v1412
  %v1414 = vmul.f32 %v1296, 1.442695
  %v1415 = vpow.pop %v1414
  %v1416 = vmul.f32 %v1297, 1.442695
  %v1417 = vpow.pop %v1416
  %v1418 = vmul.f32 %v1298, 1.442695
  %v1419 = vpow.pop %v1418
  %v1420 = vmul.f32 %v1299, 1.442695
  %v1421 = vpow.pop %v1420
  %v1422 = vmul.f32 %v1300, 1.442695
  %v1423 = vpow.pop %v1422
  %v1424 = vmul.f32 %v1301, 1.442695
  %v1425 = vpow.pop %v1424
  %v1426 = vmul.f32 %v1302, 1.442695
  %v1427 = vpow.pop %v1426
  %v1428 = vmul.f32 %v1303, 1.442695
  %v1429 = vpow.pop %v1428
  %v1430 = vmul.f32 %v1304, 1.442695
  %v1431 = vpow.pop %v1430
  %v1432 = vmul.f32 %v1305, 1.442695
  %v1433 = vpow.pop %v1432
  %v1434 = vadd.f32 %v1307, %v1339
  %v1435 = vadd.f32 %v1434, %v1371
  %v1436 = vadd.f32 %v1435, %v1403
  %v1437 = vadd.f32 %v1309, %v1341
  %v1438 = vadd.f32 %v1437, %v1373
  %v1439 = vadd.f32 %v1438, %v1405
  %v1440 = vadd.f32 %v1311, %v1343
  %v1441 = vadd.f32 %v1440, %v1375
  %v1442 = vadd.f32 %v1441, %v1407
  %v1443 = vadd.f32 %v1313, %v1345
  %v1444 = vadd.f32 %v1443, %v1377
  %v1445 = vadd.f32 %v1444, %v1409
  %v1446 = vadd.f32 %v1315, %v1347
  %v1447 = vadd.f32 %v1446, %v1379
  %v1448 = vadd.f32 %v1447, %v1411
  %v1449 = vadd.f32 %v1317, %v1349
  %v1450 = vadd.f32 %v1449, %v1381
  %v1451 = vadd.f32 %v1450, %v1413
  %v1452 = vadd.f32 %v1319, %v1351
  %v1453 = vadd.f32 %v1452, %v1383
  %v1454 = vadd.f32 %v1453, %v1415
  %v1455 = vadd.f32 %v1321, %v1353
  %v1456 = vadd.f32 %v1455, %v1385
  %v1457 = vadd.f32 %v1456, %v1417
  %v1458 = vadd.f32 %v1323, %v1355
  %v1459 = vadd.f32 %v1458, %v1387
  %v1460 = vadd.f32 %v1459, %v1419
  %v1461 = vadd.f32 %v1325, %v1357
  %v1462 = vadd.f32 %v1461, %v1389
  %v1463 = vadd.f32 %v1462, %v1421
  %v1464 = vadd.f32 %v1327, %v1359
  %v1465 = vadd.f32 %v1464, %v1391
  %v1466 = vadd.f32 %v1465, %v1423
  %v1467 = vadd.f32 %v1329, %v1361
  %v1468 = vadd.f32 %v1467, %v1393
  %v1469 = vadd.f32 %v1468, %v1425
  %v1470 = vadd.f32 %v1331, %v1363
  %v1471 = vadd.f32 %v1470, %v1395
  %v1472 = vadd.f32 %v1471, %v1427
  %v1473 = vadd.f32 %v1333, %v1365
  %v1474 = vadd.f32 %v1473, %v1397
  %v1475 = vadd.f32 %v1474, %v1429
  %v1476 = vadd.f32 %v1335, %v1367
  %v1477 = vadd.f32 %v1476, %v1399
  %v1478 = vadd.f32 %v1477, %v1431
  %v1479 = vadd.f32 %v1337, %v1369
  %v1480 = vadd.f32 %v1479, %v1401
  %v1481 = vadd.f32 %v1480, %v1433
  %v1482 = vrcp.pop %v1436
  %v1483 = vrcp.pop %v1439
  %v1484 = vrcp.pop %v1442
  %v1485 = vrcp.pop %v1445
  %v1486 = vrcp.pop %v1448
  %v1487 = vrcp.pop %v1451
  %v1488 = vrcp.pop %v1454
  %v1489 = vrcp.pop %v1457
  %v1490 = vrcp.pop %v1460
  %v1491 = vrcp.pop %v1463
  %v1492 = vrcp.pop %v1466
  %v1493 = vrcp.pop %v1469
  %v1494 = vrcp.pop %v1472
  %v1495 = vrcp.pop %v1475
  %v1496 = vrcp.pop %v1478
  %v1497 = vrcp.pop %v1481
  %v1498 = vmul.f32 %v1307, %v1482
  %v1499 = vmul.f32 %v1309, %v1483
  %v1500 = vmul.f32 %v1311, %v1484
  %v1501 = vmul.f32 %v1313, %v1485
  %v1502 = vmul.f32 %v1315, %v1486
  %v1503 = vmul.f32 %v1317, %v1487
  %v1504 = vmul.f32 %v1319, %v1488
  %v1505 = vmul.f32 %v1321, %v1489
  %v1506 = vmul.f32 %v1323, %v1490
  %v1507 = vmul.f32 %v1325, %v1491
  %v1508 = vmul.f32 %v1327, %v1492
  %v1509 = vmul.f32 %v1329, %v1493
  %v1510 = vmul.f32 %v1331, %v1494
  %v1511 = vmul.f32 %v1333, %v1495
  %v1512 = vmul.f32 %v1335, %v1496
  %v1513 = vmul.f32 %v1337, %v1497
  %v1514 = vmul.f32 %v1339, %v1482
  %v1515 = vmul.f32 %v1341, %v1483
  %v1516 = vmul.f32 %v1343, %v1484
  %v1517 = vmul.f32 %v1345, %v1485
  %v1518 = vmul.f32 %v1347, %v1486
  %v1519 = vmul.f32 %v1349, %v1487
  %v1520 = vmul.f32 %v1351, %v1488
  %v1521 = vmul.f32 %v1353, %v1489
  %v1522 = vmul.f32 %v1355, %v1490
  %v1523 = vmul.f32 %v1357, %v1491
  %v1524 = vmul.f32 %v1359, %v1492
  %v1525 = vmul.f32 %v1361, %v1493
  %v1526 = vmul.f32 %v1363, %v1494
  %v1527 = vmul.f32 %v1365, %v1495
  %v1528 = vmul.f32 %v1367, %v1496
  %v1529 = vmul.f32 %v1369, %v1497
  %v1530 = vmul.f32 %v1371, %v1482
  %v1531 = vmul.f32 %v1373, %v1483
  %v1532 = vmul.f32 %v1375, %v1484
  %v1533 = vmul.f32 %v1377, %v1485
  %v1534 = vmul.f32 %v1379, %v1486
  %v1535 = vmul.f32 %v1381, %v1487
  %v1536 = vmul.f32 %v1383, %v1488
  %v1537 = vmul.f32 %v1385, %v1489
  %v1538 = vmul.f32 %v1387, %v1490
  %v1539 = vmul.f32 %v1389, %v1491
  %v1540 = vmul.f32 %v1391, %v1492
  %v1541 = vmul.f32 %v1393, %v1493
  %v1542 = vmul.f32 %v1395, %v1494
  %v1543 = vmul.f32 %v1397, %v1495
  %v1544 = vmul.f32 %v1399, %v1496
  %v1545 = vmul.f32 %v1401, %v1497
  %v1546 = vmul.f32 %v1403, %v1482
  %v1547 = vmul.f32 %v1405, %v1483
  %v1548 = vmul.f32 %v1407, %v1484
  %v1549 = vmul.f32 %v1409, %v1485
  %v1550 = vmul.f32 %v1411, %v1486
  %v1551 = vmul.f32 %v1413, %v1487
  %v1552 = vmul.f32 %v1415, %v1488
  %v1553 = vmul.f32 %v1417, %v1489
  %v1554 = vmul.f32 %v1419, %v1490
  %v1555 = vmul.f32 %v1421, %v1491
  %v1556 = vmul.f32 %v1423, %v1492
  %v1557 = vmul.f32 %v1425, %v1493
  %v1558 = vmul.f32 %v1427, %v1494
  %v1559 = vmul.f32 %v1429, %v1495
  %v1560 = vmul.f32 %v1431, %v1496
  %v1561 = vmul.f32 %v1433, %v1497
  %1562 = vst [vmem:[%s8] sm:$0xff] %v1498
  %1563 = vst [vmem:[%s8 + $0x8] sm:$0xff] %v1499
  %1564 = vst [vmem:[%s8 + $0x10] sm:$0xff] %v1500
  %1565 = vst [vmem:[%s8 + $0x18] sm:$0xff] %v1501
  %1566 = vst [vmem:[%s8 + $0x20] sm:$0xff] %v1502
  %1567 = vst [vmem:[%s8 + $0x28] sm:$0xff] %v1503
  %1568 = vst [vmem:[%s8 + $0x30] sm:$0xff] %v1504
  %1569 = vst [vmem:[%s8 + $0x38] sm:$0xff] %v1505
  %1570 = vst [vmem:[%s8 + $0x40] sm:$0xff] %v1506
  %1571 = vst [vmem:[%s8 + $0x48] sm:$0xff] %v1507
  %1572 = vst [vmem:[%s8 + $0x50] sm:$0xff] %v1508
  %1573 = vst [vmem:[%s8 + $0x58] sm:$0xff] %v1509
  %1574 = vst [vmem:[%s8 + $0x60] sm:$0xff] %v1510
  %1575 = vst [vmem:[%s8 + $0x68] sm:$0xff] %v1511
  %1576 = vst [vmem:[%s8 + $0x70] sm:$0xff] %v1512
  %1577 = vst [vmem:[%s8 + $0x78] sm:$0xff] %v1513
  %1578 = vst [vmem:[%s8 + $0x80] sm:$0xff] %v1514
  %1579 = vst [vmem:[%s8 + $0x88] sm:$0xff] %v1515
  %1580 = vst [vmem:[%s8 + $0x90] sm:$0xff] %v1516
  %1581 = vst [vmem:[%s8 + $0x98] sm:$0xff] %v1517
  %1582 = vst [vmem:[%s8 + $0xa0] sm:$0xff] %v1518
  %1583 = vst [vmem:[%s8 + $0xa8] sm:$0xff] %v1519
  %1584 = vst [vmem:[%s8 + $0xb0] sm:$0xff] %v1520
  %1585 = vst [vmem:[%s8 + $0xb8] sm:$0xff] %v1521
  %1586 = vst [vmem:[%s8 + $0xc0] sm:$0xff] %v1522
  %1587 = vst [vmem:[%s8 + $0xc8] sm:$0xff] %v1523
  %1588 = vst [vmem:[%s8 + $0xd0] sm:$0xff] %v1524
  %1589 = vst [vmem:[%s8 + $0xd8] sm:$0xff] %v1525
  %1590 = vst [vmem:[%s8 + $0xe0] sm:$0xff] %v1526
  %1591 = vst [vmem:[%s8 + $0xe8] sm:$0xff] %v1527
  %1592 = vst [vmem:[%s8 + $0xf0] sm:$0xff] %v1528
  %1593 = vst [vmem:[%s8 + $0xf8] sm:$0xff] %v1529
  %1594 = vst [vmem:[%s8 + $0x100] sm:$0xff] %v1530
  %1595 = vst [vmem:[%s8 + $0x108] sm:$0xff] %v1531
  %1596 = vst [vmem:[%s8 + $0x110] sm:$0xff] %v1532
  %1597 = vst [vmem:[%s8 + $0x118] sm:$0xff] %v1533
  %1598 = vst [vmem:[%s8 + $0x120] sm:$0xff] %v1534
  %1599 = vst [vmem:[%s8 + $0x128] sm:$0xff] %v1535
  %1600 = vst [vmem:[%s8 + $0x130] sm:$0xff] %v1536
  %1601 = vst [vmem:[%s8 + $0x138] sm:$0xff] %v1537
  %1602 = vst [vmem:[%s8 + $0x140] sm:$0xff] %v1538
  %1603 = vst [vmem:[%s8 + $0x148] sm:$0xff] %v1539
  %1604 = vst [vmem:[%s8 + $0x150] sm:$0xff] %v1540
  %1605 = vst [vmem:[%s8 + $0x158] sm:$0xff] %v1541
  %1606 = vst [vmem:[%s8 + $0x160] sm:$0xff] %v1542
  %1607 = vst [vmem:[%s8 + $0x168] sm:$0xff] %v1543
  %1608 = vst [vmem:[%s8 + $0x170] sm:$0xff] %v1544
  %1609 = vst [vmem:[%s8 + $0x178] sm:$0xff] %v1545
  %1610 = vst [vmem:[%s8 + $0x180] sm:$0xff] %v1546
  %1611 = vst [vmem:[%s8 + $0x188] sm:$0xff] %v1547
  %1612 = vst [vmem:[%s8 + $0x190] sm:$0xff] %v1548
  %1613 = vst [vmem:[%s8 + $0x198] sm:$0xff] %v1549
  %1614 = vst [vmem:[%s8 + $0x1a0] sm:$0xff] %v1550
  %1615 = vst [vmem:[%s8 + $0x1a8] sm:$0xff] %v1551
  %1616 = vst [vmem:[%s8 + $0x1b0] sm:$0xff] %v1552
  %1617 = vst [vmem:[%s8 + $0x1b8] sm:$0xff] %v1553
  %1618 = vst [vmem:[%s8 + $0x1c0] sm:$0xff] %v1554
  %1619 = vst [vmem:[%s8 + $0x1c8] sm:$0xff] %v1555
  %1620 = vst [vmem:[%s8 + $0x1d0] sm:$0xff] %v1556
  %1621 = vst [vmem:[%s8 + $0x1d8] sm:$0xff] %v1557
  %1622 = vst [vmem:[%s8 + $0x1e0] sm:$0xff] %v1558
  %1623 = vst [vmem:[%s8 + $0x1e8] sm:$0xff] %v1559
  %1624 = vst [vmem:[%s8 + $0x1f0] sm:$0xff] %v1560
  %1625 = vst [vmem:[%s8 + $0x1f8] sm:$0xff] %v1561
  %v1626 = vlaneseq
  %v1627 = vand.u32 %v1626, 127
  %s1628 = smul.u32 0, 128
  %v1629 = vstv %s1628
  %v1630 = vadd.s32 %v1627, %v1629
  %vm1631 = vcmp.lt.s32.totalorder %v1630, 8
  %v1632 = vsel %vm1631, 1, 0
  %vm1633 = vcmp.eq.s32.totalorder %v1632, 1
  %v1634 = vsel %vm1633, %v1498, 0.0
  %v1635 = vsel %vm1633, %v1499, 0.0
  %v1636 = vsel %vm1633, %v1500, 0.0
  %v1637 = vsel %vm1633, %v1501, 0.0
  %v1638 = vsel %vm1633, %v1502, 0.0
  %v1639 = vsel %vm1633, %v1503, 0.0
  %v1640 = vsel %vm1633, %v1504, 0.0
  %v1641 = vsel %vm1633, %v1505, 0.0
  %v1642 = vsel %vm1633, %v1506, 0.0
  %v1643 = vsel %vm1633, %v1507, 0.0
  %v1644 = vsel %vm1633, %v1508, 0.0
  %v1645 = vsel %vm1633, %v1509, 0.0
  %v1646 = vsel %vm1633, %v1510, 0.0
  %v1647 = vsel %vm1633, %v1511, 0.0
  %v1648 = vsel %vm1633, %v1512, 0.0
  %v1649 = vsel %vm1633, %v1513, 0.0
  %v1650 = vsel %vm1633, %v1514, 0.0
  %v1651 = vsel %vm1633, %v1515, 0.0
  %v1652 = vsel %vm1633, %v1516, 0.0
  %v1653 = vsel %vm1633, %v1517, 0.0
  %v1654 = vsel %vm1633, %v1518, 0.0
  %v1655 = vsel %vm1633, %v1519, 0.0
  %v1656 = vsel %vm1633, %v1520, 0.0
  %v1657 = vsel %vm1633, %v1521, 0.0
  %v1658 = vsel %vm1633, %v1522, 0.0
  %v1659 = vsel %vm1633, %v1523, 0.0
  %v1660 = vsel %vm1633, %v1524, 0.0
  %v1661 = vsel %vm1633, %v1525, 0.0
  %v1662 = vsel %vm1633, %v1526, 0.0
  %v1663 = vsel %vm1633, %v1527, 0.0
  %v1664 = vsel %vm1633, %v1528, 0.0
  %v1665 = vsel %vm1633, %v1529, 0.0
  %v1666 = vsel %vm1633, %v1530, 0.0
  %v1667 = vsel %vm1633, %v1531, 0.0
  %v1668 = vsel %vm1633, %v1532, 0.0
  %v1669 = vsel %vm1633, %v1533, 0.0
  %v1670 = vsel %vm1633, %v1534, 0.0
  %v1671 = vsel %vm1633, %v1535, 0.0
  %v1672 = vsel %vm1633, %v1536, 0.0
  %v1673 = vsel %vm1633, %v1537, 0.0
  %v1674 = vsel %vm1633, %v1538, 0.0
  %v1675 = vsel %vm1633, %v1539, 0.0
  %v1676 = vsel %vm1633, %v1540, 0.0
  %v1677 = vsel %vm1633, %v1541, 0.0
  %v1678 = vsel %vm1633, %v1542, 0.0
  %v1679 = vsel %vm1633, %v1543, 0.0
  %v1680 = vsel %vm1633, %v1544, 0.0
  %v1681 = vsel %vm1633, %v1545, 0.0
  %v1682 = vsel %vm1633, %v1546, 0.0
  %v1683 = vsel %vm1633, %v1547, 0.0
  %v1684 = vsel %vm1633, %v1548, 0.0
  %v1685 = vsel %vm1633, %v1549, 0.0
  %v1686 = vsel %vm1633, %v1550, 0.0
  %v1687 = vsel %vm1633, %v1551, 0.0
  %v1688 = vsel %vm1633, %v1552, 0.0
  %v1689 = vsel %vm1633, %v1553, 0.0
  %v1690 = vsel %vm1633, %v1554, 0.0
  %v1691 = vsel %vm1633, %v1555, 0.0
  %v1692 = vsel %vm1633, %v1556, 0.0
  %v1693 = vsel %vm1633, %v1557, 0.0
  %v1694 = vsel %vm1633, %v1558, 0.0
  %v1695 = vsel %vm1633, %v1559, 0.0
  %v1696 = vsel %vm1633, %v1560, 0.0
  %v1697 = vsel %vm1633, %v1561, 0.0
  %v1698 = vld [vmem:[#allocation2] sm:$0xff]
  %v1699 = vld [vmem:[#allocation2 + $0x8] sm:$0xff]
  %v1700 = vld [vmem:[#allocation2 + $0x10] sm:$0xff]
  %v1701 = vld [vmem:[#allocation2 + $0x18] sm:$0xff]
  %v1702 = vld [vmem:[#allocation2 + $0x20] sm:$0xff]
  %v1703 = vld [vmem:[#allocation2 + $0x28] sm:$0xff]
  %v1704 = vld [vmem:[#allocation2 + $0x30] sm:$0xff]
  %v1705 = vld [vmem:[#allocation2 + $0x38] sm:$0xff]
  %v1706 = vld [vmem:[#allocation2 + $0x40] sm:$0xff]
  %v1707 = vld [vmem:[#allocation2 + $0x48] sm:$0xff]
  %v1708 = vld [vmem:[#allocation2 + $0x50] sm:$0xff]
  %v1709 = vld [vmem:[#allocation2 + $0x58] sm:$0xff]
  %v1710 = vld [vmem:[#allocation2 + $0x60] sm:$0xff]
  %v1711 = vld [vmem:[#allocation2 + $0x68] sm:$0xff]
  %v1712 = vld [vmem:[#allocation2 + $0x70] sm:$0xff]
  %v1713 = vld [vmem:[#allocation2 + $0x78] sm:$0xff]
  %v1714 = vld [vmem:[#allocation2 + $0x80] sm:$0xff]
  %v1715 = vld [vmem:[#allocation2 + $0x88] sm:$0xff]
  %v1716 = vld [vmem:[#allocation2 + $0x90] sm:$0xff]
  %v1717 = vld [vmem:[#allocation2 + $0x98] sm:$0xff]
  %v1718 = vld [vmem:[#allocation2 + $0xa0] sm:$0xff]
  %v1719 = vld [vmem:[#allocation2 + $0xa8] sm:$0xff]
  %v1720 = vld [vmem:[#allocation2 + $0xb0] sm:$0xff]
  %v1721 = vld [vmem:[#allocation2 + $0xb8] sm:$0xff]
  %v1722 = vld [vmem:[#allocation2 + $0xc0] sm:$0xff]
  %v1723 = vld [vmem:[#allocation2 + $0xc8] sm:$0xff]
  %v1724 = vld [vmem:[#allocation2 + $0xd0] sm:$0xff]
  %v1725 = vld [vmem:[#allocation2 + $0xd8] sm:$0xff]
  %v1726 = vld [vmem:[#allocation2 + $0xe0] sm:$0xff]
  %v1727 = vld [vmem:[#allocation2 + $0xe8] sm:$0xff]
  %v1728 = vld [vmem:[#allocation2 + $0xf0] sm:$0xff]
  %v1729 = vld [vmem:[#allocation2 + $0xf8] sm:$0xff]
  %v1730 = vld [vmem:[#allocation2 + $0x100] sm:$0xff]
  %v1731 = vld [vmem:[#allocation2 + $0x108] sm:$0xff]
  %v1732 = vld [vmem:[#allocation2 + $0x110] sm:$0xff]
  %v1733 = vld [vmem:[#allocation2 + $0x118] sm:$0xff]
  %v1734 = vld [vmem:[#allocation2 + $0x120] sm:$0xff]
  %v1735 = vld [vmem:[#allocation2 + $0x128] sm:$0xff]
  %v1736 = vld [vmem:[#allocation2 + $0x130] sm:$0xff]
  %v1737 = vld [vmem:[#allocation2 + $0x138] sm:$0xff]
  %v1738 = vld [vmem:[#allocation2 + $0x140] sm:$0xff]
  %v1739 = vld [vmem:[#allocation2 + $0x148] sm:$0xff]
  %v1740 = vld [vmem:[#allocation2 + $0x150] sm:$0xff]
  %v1741 = vld [vmem:[#allocation2 + $0x158] sm:$0xff]
  %v1742 = vld [vmem:[#allocation2 + $0x160] sm:$0xff]
  %v1743 = vld [vmem:[#allocation2 + $0x168] sm:$0xff]
  %v1744 = vld [vmem:[#allocation2 + $0x170] sm:$0xff]
  %v1745 = vld [vmem:[#allocation2 + $0x178] sm:$0xff]
  %v1746 = vld [vmem:[#allocation2 + $0x180] sm:$0xff]
  %v1747 = vld [vmem:[#allocation2 + $0x188] sm:$0xff]
  %v1748 = vld [vmem:[#allocation2 + $0x190] sm:$0xff]
  %v1749 = vld [vmem:[#allocation2 + $0x198] sm:$0xff]
  %v1750 = vld [vmem:[#allocation2 + $0x1a0] sm:$0xff]
  %v1751 = vld [vmem:[#allocation2 + $0x1a8] sm:$0xff]
  %v1752 = vld [vmem:[#allocation2 + $0x1b0] sm:$0xff]
  %v1753 = vld [vmem:[#allocation2 + $0x1b8] sm:$0xff]
  %v1754 = vld [vmem:[#allocation2 + $0x1c0] sm:$0xff]
  %v1755 = vld [vmem:[#allocation2 + $0x1c8] sm:$0xff]
  %v1756 = vld [vmem:[#allocation2 + $0x1d0] sm:$0xff]
  %v1757 = vld [vmem:[#allocation2 + $0x1d8] sm:$0xff]
  %v1758 = vld [vmem:[#allocation2 + $0x1e0] sm:$0xff]
  %v1759 = vld [vmem:[#allocation2 + $0x1e8] sm:$0xff]
  %v1760 = vld [vmem:[#allocation2 + $0x1f0] sm:$0xff]
  %v1761 = vld [vmem:[#allocation2 + $0x1f8] sm:$0xff]
  %1762 = vadd.xlane.f32.xlu0 %v1634
  %v1763 = vpop.xlane.xlu0 %1762
  %1764 = vadd.xlane.f32.xlu0 %v1635
  %v1765 = vpop.xlane.xlu0 %1764
  %1766 = vadd.xlane.f32.xlu0 %v1636
  %v1767 = vpop.xlane.xlu0 %1766
  %1768 = vadd.xlane.f32.xlu0 %v1637
  %v1769 = vpop.xlane.xlu0 %1768
  %1770 = vadd.xlane.f32.xlu0 %v1638
  %v1771 = vpop.xlane.xlu0 %1770
  %1772 = vadd.xlane.f32.xlu0 %v1639
  %v1773 = vpop.xlane.xlu0 %1772
  %1774 = vadd.xlane.f32.xlu0 %v1640
  %v1775 = vpop.xlane.xlu0 %1774
  %1776 = vadd.xlane.f32.xlu0 %v1641
  %v1777 = vpop.xlane.xlu0 %1776
  %1778 = vadd.xlane.f32.xlu0 %v1642
  %v1779 = vpop.xlane.xlu0 %1778
  %1780 = vadd.xlane.f32.xlu0 %v1643
  %v1781 = vpop.xlane.xlu0 %1780
  %1782 = vadd.xlane.f32.xlu0 %v1644
  %v1783 = vpop.xlane.xlu0 %1782
  %1784 = vadd.xlane.f32.xlu0 %v1645
  %v1785 = vpop.xlane.xlu0 %1784
  %1786 = vadd.xlane.f32.xlu0 %v1646
  %v1787 = vpop.xlane.xlu0 %1786
  %1788 = vadd.xlane.f32.xlu0 %v1647
  %v1789 = vpop.xlane.xlu0 %1788
  %1790 = vadd.xlane.f32.xlu0 %v1648
  %v1791 = vpop.xlane.xlu0 %1790
  %1792 = vadd.xlane.f32.xlu0 %v1649
  %v1793 = vpop.xlane.xlu0 %1792
  %1794 = vadd.xlane.f32.xlu0 %v1650
  %v1795 = vpop.xlane.xlu0 %1794
  %1796 = vadd.xlane.f32.xlu0 %v1651
  %v1797 = vpop.xlane.xlu0 %1796
  %1798 = vadd.xlane.f32.xlu0 %v1652
  %v1799 = vpop.xlane.xlu0 %1798
  %1800 = vadd.xlane.f32.xlu0 %v1653
  %v1801 = vpop.xlane.xlu0 %1800
  %1802 = vadd.xlane.f32.xlu0 %v1654
  %v1803 = vpop.xlane.xlu0 %1802
  %1804 = vadd.xlane.f32.xlu0 %v1655
  %v1805 = vpop.xlane.xlu0 %1804
  %1806 = vadd.xlane.f32.xlu0 %v1656
  %v1807 = vpop.xlane.xlu0 %1806
  %1808 = vadd.xlane.f32.xlu0 %v1657
  %v1809 = vpop.xlane.xlu0 %1808
  %1810 = vadd.xlane.f32.xlu0 %v1658
  %v1811 = vpop.xlane.xlu0 %1810
  %1812 = vadd.xlane.f32.xlu0 %v1659
  %v1813 = vpop.xlane.xlu0 %1812
  %1814 = vadd.xlane.f32.xlu0 %v1660
  %v1815 = vpop.xlane.xlu0 %1814
  %1816 = vadd.xlane.f32.xlu0 %v1661
  %v1817 = vpop.xlane.xlu0 %1816
  %1818 = vadd.xlane.f32.xlu0 %v1662
  %v1819 = vpop.xlane.xlu0 %1818
  %1820 = vadd.xlane.f32.xlu0 %v1663
  %v1821 = vpop.xlane.xlu0 %1820
  %1822 = vadd.xlane.f32.xlu0 %v1664
  %v1823 = vpop.xlane.xlu0 %1822
  %1824 = vadd.xlane.f32.xlu0 %v1665
  %v1825 = vpop.xlane.xlu0 %1824
  %1826 = vadd.xlane.f32.xlu0 %v1666
  %v1827 = vpop.xlane.xlu0 %1826
  %1828 = vadd.xlane.f32.xlu0 %v1667
  %v1829 = vpop.xlane.xlu0 %1828
  %1830 = vadd.xlane.f32.xlu0 %v1668
  %v1831 = vpop.xlane.xlu0 %1830
  %1832 = vadd.xlane.f32.xlu0 %v1669
  %v1833 = vpop.xlane.xlu0 %1832
  %1834 = vadd.xlane.f32.xlu0 %v1670
  %v1835 = vpop.xlane.xlu0 %1834
  %1836 = vadd.xlane.f32.xlu0 %v1671
  %v1837 = vpop.xlane.xlu0 %1836
  %1838 = vadd.xlane.f32.xlu0 %v1672
  %v1839 = vpop.xlane.xlu0 %1838
  %1840 = vadd.xlane.f32.xlu0 %v1673
  %v1841 = vpop.xlane.xlu0 %1840
  %1842 = vadd.xlane.f32.xlu0 %v1674
  %v1843 = vpop.xlane.xlu0 %1842
  %1844 = vadd.xlane.f32.xlu0 %v1675
  %v1845 = vpop.xlane.xlu0 %1844
  %1846 = vadd.xlane.f32.xlu0 %v1676
  %v1847 = vpop.xlane.xlu0 %1846
  %1848 = vadd.xlane.f32.xlu0 %v1677
  %v1849 = vpop.xlane.xlu0 %1848
  %1850 = vadd.xlane.f32.xlu0 %v1678
  %v1851 = vpop.xlane.xlu0 %1850
  %1852 = vadd.xlane.f32.xlu0 %v1679
  %v1853 = vpop.xlane.xlu0 %1852
  %1854 = vadd.xlane.f32.xlu0 %v1680
  %v1855 = vpop.xlane.xlu0 %1854
  %1856 = vadd.xlane.f32.xlu0 %v1681
  %v1857 = vpop.xlane.xlu0 %1856
  %1858 = vadd.xlane.f32.xlu0 %v1682
  %v1859 = vpop.xlane.xlu0 %1858
  %1860 = vadd.xlane.f32.xlu0 %v1683
  %v1861 = vpop.xlane.xlu0 %1860
  %1862 = vadd.xlane.f32.xlu0 %v1684
  %v1863 = vpop.xlane.xlu0 %1862
  %1864 = vadd.xlane.f32.xlu0 %v1685
  %v1865 = vpop.xlane.xlu0 %1864
  %1866 = vadd.xlane.f32.xlu0 %v1686
  %v1867 = vpop.xlane.xlu0 %1866
  %1868 = vadd.xlane.f32.xlu0 %v1687
  %v1869 = vpop.xlane.xlu0 %1868
  %1870 = vadd.xlane.f32.xlu0 %v1688
  %v1871 = vpop.xlane.xlu0 %1870
  %1872 = vadd.xlane.f32.xlu0 %v1689
  %v1873 = vpop.xlane.xlu0 %1872
  %1874 = vadd.xlane.f32.xlu0 %v1690
  %v1875 = vpop.xlane.xlu0 %1874
  %1876 = vadd.xlane.f32.xlu0 %v1691
  %v1877 = vpop.xlane.xlu0 %1876
  %1878 = vadd.xlane.f32.xlu0 %v1692
  %v1879 = vpop.xlane.xlu0 %1878
  %1880 = vadd.xlane.f32.xlu0 %v1693
  %v1881 = vpop.xlane.xlu0 %1880
  %1882 = vadd.xlane.f32.xlu0 %v1694
  %v1883 = vpop.xlane.xlu0 %1882
  %1884 = vadd.xlane.f32.xlu0 %v1695
  %v1885 = vpop.xlane.xlu0 %1884
  %1886 = vadd.xlane.f32.xlu0 %v1696
  %v1887 = vpop.xlane.xlu0 %1886
  %1888 = vadd.xlane.f32.xlu0 %v1697
  %v1889 = vpop.xlane.xlu0 %1888
  %v1890 = vadd.f32 %v1698, %v1763
  %v1891 = vadd.f32 %v1699, %v1765
  %v1892 = vadd.f32 %v1700, %v1767
  %v1893 = vadd.f32 %v1701, %v1769
  %v1894 = vadd.f32 %v1702, %v1771
  %v1895 = vadd.f32 %v1703, %v1773
  %v1896 = vadd.f32 %v1704, %v1775
  %v1897 = vadd.f32 %v1705, %v1777
  %v1898 = vadd.f32 %v1706, %v1779
  %v1899 = vadd.f32 %v1707, %v1781
  %v1900 = vadd.f32 %v1708, %v1783
  %v1901 = vadd.f32 %v1709, %v1785
  %v1902 = vadd.f32 %v1710, %v1787
  %v1903 = vadd.f32 %v1711, %v1789
  %v1904 = vadd.f32 %v1712, %v1791
  %v1905 = vadd.f32 %v1713, %v1793
  %v1906 = vadd.f32 %v1714, %v1795
  %v1907 = vadd.f32 %v1715, %v1797
  %v1908 = vadd.f32 %v1716, %v1799
  %v1909 = vadd.f32 %v1717, %v1801
  %v1910 = vadd.f32 %v1718, %v1803
  %v1911 = vadd.f32 %v1719, %v1805
  %v1912 = vadd.f32 %v1720, %v1807
  %v1913 = vadd.f32 %v1721, %v1809
  %v1914 = vadd.f32 %v1722, %v1811
  %v1915 = vadd.f32 %v1723, %v1813
  %v1916 = vadd.f32 %v1724, %v1815
  %v1917 = vadd.f32 %v1725, %v1817
  %v1918 = vadd.f32 %v1726, %v1819
  %v1919 = vadd.f32 %v1727, %v1821
  %v1920 = vadd.f32 %v1728, %v1823
  %v1921 = vadd.f32 %v1729, %v1825
  %v1922 = vadd.f32 %v1730, %v1827
  %v1923 = vadd.f32 %v1731, %v1829
  %v1924 = vadd.f32 %v1732, %v1831
  %v1925 = vadd.f32 %v1733, %v1833
  %v1926 = vadd.f32 %v1734, %v1835
  %v1927 = vadd.f32 %v1735, %v1837
  %v1928 = vadd.f32 %v1736, %v1839
  %v1929 = vadd.f32 %v1737, %v1841
  %v1930 = vadd.f32 %v1738, %v1843
  %v1931 = vadd.f32 %v1739, %v1845
  %v1932 = vadd.f32 %v1740, %v1847
  %v1933 = vadd.f32 %v1741, %v1849
  %v1934 = vadd.f32 %v1742, %v1851
  %v1935 = vadd.f32 %v1743, %v1853
  %v1936 = vadd.f32 %v1744, %v1855
  %v1937 = vadd.f32 %v1745, %v1857
  %v1938 = vadd.f32 %v1746, %v1859
  %v1939 = vadd.f32 %v1747, %v1861
  %v1940 = vadd.f32 %v1748, %v1863
  %v1941 = vadd.f32 %v1749, %v1865
  %v1942 = vadd.f32 %v1750, %v1867
  %v1943 = vadd.f32 %v1751, %v1869
  %v1944 = vadd.f32 %v1752, %v1871
  %v1945 = vadd.f32 %v1753, %v1873
  %v1946 = vadd.f32 %v1754, %v1875
  %v1947 = vadd.f32 %v1755, %v1877
  %v1948 = vadd.f32 %v1756, %v1879
  %v1949 = vadd.f32 %v1757, %v1881
  %v1950 = vadd.f32 %v1758, %v1883
  %v1951 = vadd.f32 %v1759, %v1885
  %v1952 = vadd.f32 %v1760, %v1887
  %v1953 = vadd.f32 %v1761, %v1889
  %vm1954 = vcmask 7168
  %1955 = vst.msk [vmem:[#allocation2] sm:$0xff] %vm1954, %v1890
  %1956 = vst.msk [vmem:[#allocation2 + $0x8] sm:$0xff] %vm1954, %v1891
  %1957 = vst.msk [vmem:[#allocation2 + $0x10] sm:$0xff] %vm1954, %v1892
  %1958 = vst.msk [vmem:[#allocation2 + $0x18] sm:$0xff] %vm1954, %v1893
  %1959 = vst.msk [vmem:[#allocation2 + $0x20] sm:$0xff] %vm1954, %v1894
  %1960 = vst.msk [vmem:[#allocation2 + $0x28] sm:$0xff] %vm1954, %v1895
  %1961 = vst.msk [vmem:[#allocation2 + $0x30] sm:$0xff] %vm1954, %v1896
  %1962 = vst.msk [vmem:[#allocation2 + $0x38] sm:$0xff] %vm1954, %v1897
  %1963 = vst.msk [vmem:[#allocation2 + $0x40] sm:$0xff] %vm1954, %v1898
  %1964 = vst.msk [vmem:[#allocation2 + $0x48] sm:$0xff] %vm1954, %v1899
  %1965 = vst.msk [vmem:[#allocation2 + $0x50] sm:$0xff] %vm1954, %v1900
  %1966 = vst.msk [vmem:[#allocation2 + $0x58] sm:$0xff] %vm1954, %v1901
  %1967 = vst.msk [vmem:[#allocation2 + $0x60] sm:$0xff] %vm1954, %v1902
  %1968 = vst.msk [vmem:[#allocation2 + $0x68] sm:$0xff] %vm1954, %v1903
  %1969 = vst.msk [vmem:[#allocation2 + $0x70] sm:$0xff] %vm1954, %v1904
  %1970 = vst.msk [vmem:[#allocation2 + $0x78] sm:$0xff] %vm1954, %v1905
  %1971 = vst.msk [vmem:[#allocation2 + $0x80] sm:$0xff] %vm1954, %v1906
  %1972 = vst.msk [vmem:[#allocation2 + $0x88] sm:$0xff] %vm1954, %v1907
  %1973 = vst.msk [vmem:[#allocation2 + $0x90] sm:$0xff] %vm1954, %v1908
  %1974 = vst.msk [vmem:[#allocation2 + $0x98] sm:$0xff] %vm1954, %v1909
  %1975 = vst.msk [vmem:[#allocation2 + $0xa0] sm:$0xff] %vm1954, %v1910
  %1976 = vst.msk [vmem:[#allocation2 + $0xa8] sm:$0xff] %vm1954, %v1911
  %1977 = vst.msk [vmem:[#allocation2 + $0xb0] sm:$0xff] %vm1954, %v1912
  %1978 = vst.msk [vmem:[#allocation2 + $0xb8] sm:$0xff] %vm1954, %v1913
  %1979 = vst.msk [vmem:[#allocation2 + $0xc0] sm:$0xff] %vm1954, %v1914
  %1980 = vst.msk [vmem:[#allocation2 + $0xc8] sm:$0xff] %vm1954, %v1915
  %1981 = vst.msk [vmem:[#allocation2 + $0xd0] sm:$0xff] %vm1954, %v1916
  %1982 = vst.msk [vmem:[#allocation2 + $0xd8] sm:$0xff] %vm1954, %v1917
  %1983 = vst.msk [vmem:[#allocation2 + $0xe0] sm:$0xff] %vm1954, %v1918
  %1984 = vst.msk [vmem:[#allocation2 + $0xe8] sm:$0xff] %vm1954, %v1919
  %1985 = vst.msk [vmem:[#allocation2 + $0xf0] sm:$0xff] %vm1954, %v1920
  %1986 = vst.msk [vmem:[#allocation2 + $0xf8] sm:$0xff] %vm1954, %v1921
  %1987 = vst.msk [vmem:[#allocation2 + $0x100] sm:$0xff] %vm1954, %v1922
  %1988 = vst.msk [vmem:[#allocation2 + $0x108] sm:$0xff] %vm1954, %v1923
  %1989 = vst.msk [vmem:[#allocation2 + $0x110] sm:$0xff] %vm1954, %v1924
  %1990 = vst.msk [vmem:[#allocation2 + $0x118] sm:$0xff] %vm1954, %v1925
  %1991 = vst.msk [vmem:[#allocation2 + $0x120] sm:$0xff] %vm1954, %v1926
  %1992 = vst.msk [vmem:[#allocation2 + $0x128] sm:$0xff] %vm1954, %v1927
  %1993 = vst.msk [vmem:[#allocation2 + $0x130] sm:$0xff] %vm1954, %v1928
  %1994 = vst.msk [vmem:[#allocation2 + $0x138] sm:$0xff] %vm1954, %v1929
  %1995 = vst.msk [vmem:[#allocation2 + $0x140] sm:$0xff] %vm1954, %v1930
  %1996 = vst.msk [vmem:[#allocation2 + $0x148] sm:$0xff] %vm1954, %v1931
  %1997 = vst.msk [vmem:[#allocation2 + $0x150] sm:$0xff] %vm1954, %v1932
  %1998 = vst.msk [vmem:[#allocation2 + $0x158] sm:$0xff] %vm1954, %v1933
  %1999 = vst.msk [vmem:[#allocation2 + $0x160] sm:$0xff] %vm1954, %v1934
  %2000 = vst.msk [vmem:[#allocation2 + $0x168] sm:$0xff] %vm1954, %v1935
  %2001 = vst.msk [vmem:[#allocation2 + $0x170] sm:$0xff] %vm1954, %v1936
  %2002 = vst.msk [vmem:[#allocation2 + $0x178] sm:$0xff] %vm1954, %v1937
  %2003 = vst.msk [vmem:[#allocation2 + $0x180] sm:$0xff] %vm1954, %v1938
  %2004 = vst.msk [vmem:[#allocation2 + $0x188] sm:$0xff] %vm1954, %v1939
  %2005 = vst.msk [vmem:[#allocation2 + $0x190] sm:$0xff] %vm1954, %v1940
  %2006 = vst.msk [vmem:[#allocation2 + $0x198] sm:$0xff] %vm1954, %v1941
  %2007 = vst.msk [vmem:[#allocation2 + $0x1a0] sm:$0xff] %vm1954, %v1942
  %2008 = vst.msk [vmem:[#allocation2 + $0x1a8] sm:$0xff] %vm1954, %v1943
  %2009 = vst.msk [vmem:[#allocation2 + $0x1b0] sm:$0xff] %vm1954, %v1944
  %2010 = vst.msk [vmem:[#allocation2 + $0x1b8] sm:$0xff] %vm1954, %v1945
  %2011 = vst.msk [vmem:[#allocation2 + $0x1c0] sm:$0xff] %vm1954, %v1946
  %2012 = vst.msk [vmem:[#allocation2 + $0x1c8] sm:$0xff] %vm1954, %v1947
  %2013 = vst.msk [vmem:[#allocation2 + $0x1d0] sm:$0xff] %vm1954, %v1948
  %2014 = vst.msk [vmem:[#allocation2 + $0x1d8] sm:$0xff] %vm1954, %v1949
  %2015 = vst.msk [vmem:[#allocation2 + $0x1e0] sm:$0xff] %vm1954, %v1950
  %2016 = vst.msk [vmem:[#allocation2 + $0x1e8] sm:$0xff] %vm1954, %v1951
  %2017 = vst.msk [vmem:[#allocation2 + $0x1f0] sm:$0xff] %vm1954, %v1952
  %2018 = vst.msk [vmem:[#allocation2 + $0x1f8] sm:$0xff] %vm1954, %v1953
  // Predicated region
  $region38: #{gat_layer_pallas.3} parent=0 // pred_check
    %p2019 = pneg %p32
  $region39: #{gat_layer_pallas.3} parent=0 // pred_check_branch
    %2021 = sbr.rel (%p2019) target = $region41
  $region40: #{gat_layer_pallas.3} parent=0 // pred_region
    %v2022 = vld [vmem:[#allocation2] sm:$0xff]
    %v2023 = vld [vmem:[#allocation2 + $0x8] sm:$0xff]
    %v2024 = vld [vmem:[#allocation2 + $0x10] sm:$0xff]
    %v2025 = vld [vmem:[#allocation2 + $0x18] sm:$0xff]
    %v2026 = vld [vmem:[#allocation2 + $0x20] sm:$0xff]
    %v2027 = vld [vmem:[#allocation2 + $0x28] sm:$0xff]
    %v2028 = vld [vmem:[#allocation2 + $0x30] sm:$0xff]
    %v2029 = vld [vmem:[#allocation2 + $0x38] sm:$0xff]
    %v2030 = vld [vmem:[#allocation2 + $0x40] sm:$0xff]
    %v2031 = vld [vmem:[#allocation2 + $0x48] sm:$0xff]
    %v2032 = vld [vmem:[#allocation2 + $0x50] sm:$0xff]
    %v2033 = vld [vmem:[#allocation2 + $0x58] sm:$0xff]
    %v2034 = vld [vmem:[#allocation2 + $0x60] sm:$0xff]
    %v2035 = vld [vmem:[#allocation2 + $0x68] sm:$0xff]
    %v2036 = vld [vmem:[#allocation2 + $0x70] sm:$0xff]
    %v2037 = vld [vmem:[#allocation2 + $0x78] sm:$0xff]
    %v2038 = vld [vmem:[#allocation2 + $0x80] sm:$0xff]
    %v2039 = vld [vmem:[#allocation2 + $0x88] sm:$0xff]
    %v2040 = vld [vmem:[#allocation2 + $0x90] sm:$0xff]
    %v2041 = vld [vmem:[#allocation2 + $0x98] sm:$0xff]
    %v2042 = vld [vmem:[#allocation2 + $0xa0] sm:$0xff]
    %v2043 = vld [vmem:[#allocation2 + $0xa8] sm:$0xff]
    %v2044 = vld [vmem:[#allocation2 + $0xb0] sm:$0xff]
    %v2045 = vld [vmem:[#allocation2 + $0xb8] sm:$0xff]
    %v2046 = vld [vmem:[#allocation2 + $0xc0] sm:$0xff]
    %v2047 = vld [vmem:[#allocation2 + $0xc8] sm:$0xff]
    %v2048 = vld [vmem:[#allocation2 + $0xd0] sm:$0xff]
    %v2049 = vld [vmem:[#allocation2 + $0xd8] sm:$0xff]
    %v2050 = vld [vmem:[#allocation2 + $0xe0] sm:$0xff]
    %v2051 = vld [vmem:[#allocation2 + $0xe8] sm:$0xff]
    %v2052 = vld [vmem:[#allocation2 + $0xf0] sm:$0xff]
    %v2053 = vld [vmem:[#allocation2 + $0xf8] sm:$0xff]
    %v2054 = vld [vmem:[#allocation2 + $0x100] sm:$0xff]
    %v2055 = vld [vmem:[#allocation2 + $0x108] sm:$0xff]
    %v2056 = vld [vmem:[#allocation2 + $0x110] sm:$0xff]
    %v2057 = vld [vmem:[#allocation2 + $0x118] sm:$0xff]
    %v2058 = vld [vmem:[#allocation2 + $0x120] sm:$0xff]
    %v2059 = vld [vmem:[#allocation2 + $0x128] sm:$0xff]
    %v2060 = vld [vmem:[#allocation2 + $0x130] sm:$0xff]
    %v2061 = vld [vmem:[#allocation2 + $0x138] sm:$0xff]
    %v2062 = vld [vmem:[#allocation2 + $0x140] sm:$0xff]
    %v2063 = vld [vmem:[#allocation2 + $0x148] sm:$0xff]
    %v2064 = vld [vmem:[#allocation2 + $0x150] sm:$0xff]
    %v2065 = vld [vmem:[#allocation2 + $0x158] sm:$0xff]
    %v2066 = vld [vmem:[#allocation2 + $0x160] sm:$0xff]
    %v2067 = vld [vmem:[#allocation2 + $0x168] sm:$0xff]
    %v2068 = vld [vmem:[#allocation2 + $0x170] sm:$0xff]
    %v2069 = vld [vmem:[#allocation2 + $0x178] sm:$0xff]
    %v2070 = vld [vmem:[#allocation2 + $0x180] sm:$0xff]
    %v2071 = vld [vmem:[#allocation2 + $0x188] sm:$0xff]
    %v2072 = vld [vmem:[#allocation2 + $0x190] sm:$0xff]
    %v2073 = vld [vmem:[#allocation2 + $0x198] sm:$0xff]
    %v2074 = vld [vmem:[#allocation2 + $0x1a0] sm:$0xff]
    %v2075 = vld [vmem:[#allocation2 + $0x1a8] sm:$0xff]
    %v2076 = vld [vmem:[#allocation2 + $0x1b0] sm:$0xff]
    %v2077 = vld [vmem:[#allocation2 + $0x1b8] sm:$0xff]
    %v2078 = vld [vmem:[#allocation2 + $0x1c0] sm:$0xff]
    %v2079 = vld [vmem:[#allocation2 + $0x1c8] sm:$0xff]
    %v2080 = vld [vmem:[#allocation2 + $0x1d0] sm:$0xff]
    %v2081 = vld [vmem:[#allocation2 + $0x1d8] sm:$0xff]
    %v2082 = vld [vmem:[#allocation2 + $0x1e0] sm:$0xff]
    %v2083 = vld [vmem:[#allocation2 + $0x1e8] sm:$0xff]
    %v2084 = vld [vmem:[#allocation2 + $0x1f0] sm:$0xff]
    %v2085 = vld [vmem:[#allocation2 + $0x1f8] sm:$0xff]
    %v2086 = vld [vmem:[%s2] sm:$0xff]
    %v2087 = vld [vmem:[%s2 + $0x8] sm:$0xff]
    %v2088 = vld [vmem:[%s2 + $0x10] sm:$0xff]
    %v2089 = vld [vmem:[%s2 + $0x18] sm:$0xff]
    %v2090 = vld [vmem:[%s2 + $0x20] sm:$0xff]
    %v2091 = vld [vmem:[%s2 + $0x28] sm:$0xff]
    %v2092 = vld [vmem:[%s2 + $0x30] sm:$0xff]
    %v2093 = vld [vmem:[%s2 + $0x38] sm:$0xff]
    %v2094 = vld [vmem:[%s2 + $0x40] sm:$0xff]
    %v2095 = vld [vmem:[%s2 + $0x48] sm:$0xff]
    %v2096 = vld [vmem:[%s2 + $0x50] sm:$0xff]
    %v2097 = vld [vmem:[%s2 + $0x58] sm:$0xff]
    %v2098 = vld [vmem:[%s2 + $0x60] sm:$0xff]
    %v2099 = vld [vmem:[%s2 + $0x68] sm:$0xff]
    %v2100 = vld [vmem:[%s2 + $0x70] sm:$0xff]
    %v2101 = vld [vmem:[%s2 + $0x78] sm:$0xff]
    %v2102 = vld [vmem:[%s2 + $0x80] sm:$0xff]
    %v2103 = vld [vmem:[%s2 + $0x88] sm:$0xff]
    %v2104 = vld [vmem:[%s2 + $0x90] sm:$0xff]
    %v2105 = vld [vmem:[%s2 + $0x98] sm:$0xff]
    %v2106 = vld [vmem:[%s2 + $0xa0] sm:$0xff]
    %v2107 = vld [vmem:[%s2 + $0xa8] sm:$0xff]
    %v2108 = vld [vmem:[%s2 + $0xb0] sm:$0xff]
    %v2109 = vld [vmem:[%s2 + $0xb8] sm:$0xff]
    %v2110 = vld [vmem:[%s2 + $0xc0] sm:$0xff]
    %v2111 = vld [vmem:[%s2 + $0xc8] sm:$0xff]
    %v2112 = vld [vmem:[%s2 + $0xd0] sm:$0xff]
    %v2113 = vld [vmem:[%s2 + $0xd8] sm:$0xff]
    %v2114 = vld [vmem:[%s2 + $0xe0] sm:$0xff]
    %v2115 = vld [vmem:[%s2 + $0xe8] sm:$0xff]
    %v2116 = vld [vmem:[%s2 + $0xf0] sm:$0xff]
    %v2117 = vld [vmem:[%s2 + $0xf8] sm:$0xff]
    %v2118 = vld [vmem:[%s2 + $0x100] sm:$0xff]
    %v2119 = vld [vmem:[%s2 + $0x108] sm:$0xff]
    %v2120 = vld [vmem:[%s2 + $0x110] sm:$0xff]
    %v2121 = vld [vmem:[%s2 + $0x118] sm:$0xff]
    %v2122 = vld [vmem:[%s2 + $0x120] sm:$0xff]
    %v2123 = vld [vmem:[%s2 + $0x128] sm:$0xff]
    %v2124 = vld [vmem:[%s2 + $0x130] sm:$0xff]
    %v2125 = vld [vmem:[%s2 + $0x138] sm:$0xff]
    %v2126 = vld [vmem:[%s2 + $0x140] sm:$0xff]
    %v2127 = vld [vmem:[%s2 + $0x148] sm:$0xff]
    %v2128 = vld [vmem:[%s2 + $0x150] sm:$0xff]
    %v2129 = vld [vmem:[%s2 + $0x158] sm:$0xff]
    %v2130 = vld [vmem:[%s2 + $0x160] sm:$0xff]
    %v2131 = vld [vmem:[%s2 + $0x168] sm:$0xff]
    %v2132 = vld [vmem:[%s2 + $0x170] sm:$0xff]
    %v2133 = vld [vmem:[%s2 + $0x178] sm:$0xff]
    %v2134 = vld [vmem:[%s2 + $0x180] sm:$0xff]
    %v2135 = vld [vmem:[%s2 + $0x188] sm:$0xff]
    %v2136 = vld [vmem:[%s2 + $0x190] sm:$0xff]
    %v2137 = vld [vmem:[%s2 + $0x198] sm:$0xff]
    %v2138 = vld [vmem:[%s2 + $0x1a0] sm:$0xff]
    %v2139 = vld [vmem:[%s2 + $0x1a8] sm:$0xff]
    %v2140 = vld [vmem:[%s2 + $0x1b0] sm:$0xff]
    %v2141 = vld [vmem:[%s2 + $0x1b8] sm:$0xff]
    %v2142 = vld [vmem:[%s2 + $0x1c0] sm:$0xff]
    %v2143 = vld [vmem:[%s2 + $0x1c8] sm:$0xff]
    %v2144 = vld [vmem:[%s2 + $0x1d0] sm:$0xff]
    %v2145 = vld [vmem:[%s2 + $0x1d8] sm:$0xff]
    %v2146 = vld [vmem:[%s2 + $0x1e0] sm:$0xff]
    %v2147 = vld [vmem:[%s2 + $0x1e8] sm:$0xff]
    %v2148 = vld [vmem:[%s2 + $0x1f0] sm:$0xff]
    %v2149 = vld [vmem:[%s2 + $0x1f8] sm:$0xff]
    %2151 = vset.pattern.permute.xlu0 0
    %2152 = vperm.xlu0 %2151, %v2022
    %v2153 = vpop.permute.xlu0 %2152
    %2156 = vset.pattern.permute.xlu0 0
    %2157 = vperm.xlu0 %2156, %v2023
    %v2158 = vpop.permute.xlu0 %2157
    %2161 = vset.pattern.permute.xlu0 0
    %2162 = vperm.xlu0 %2161, %v2024
    %v2163 = vpop.permute.xlu0 %2162
    %2166 = vset.pattern.permute.xlu0 0
    %2167 = vperm.xlu0 %2166, %v2025
    %v2168 = vpop.permute.xlu0 %2167
    %2171 = vset.pattern.permute.xlu0 0
    %2172 = vperm.xlu0 %2171, %v2026
    %v2173 = vpop.permute.xlu0 %2172
    %2176 = vset.pattern.permute.xlu0 0
    %2177 = vperm.xlu0 %2176, %v2027
    %v2178 = vpop.permute.xlu0 %2177
    %2181 = vset.pattern.permute.xlu0 0
    %2182 = vperm.xlu0 %2181, %v2028
    %v2183 = vpop.permute.xlu0 %2182
    %2186 = vset.pattern.permute.xlu0 0
    %2187 = vperm.xlu0 %2186, %v2029
    %v2188 = vpop.permute.xlu0 %2187
    %2191 = vset.pattern.permute.xlu0 0
    %2192 = vperm.xlu0 %2191, %v2030
    %v2193 = vpop.permute.xlu0 %2192
    %2196 = vset.pattern.permute.xlu0 0
    %2197 = vperm.xlu0 %2196, %v2031
    %v2198 = vpop.permute.xlu0 %2197
    %2201 = vset.pattern.permute.xlu0 0
    %2202 = vperm.xlu0 %2201, %v2032
    %v2203 = vpop.permute.xlu0 %2202
    %2206 = vset.pattern.permute.xlu0 0
    %2207 = vperm.xlu0 %2206, %v2033
    %v2208 = vpop.permute.xlu0 %2207
    %2211 = vset.pattern.permute.xlu0 0
    %2212 = vperm.xlu0 %2211, %v2034
    %v2213 = vpop.permute.xlu0 %2212
    %2216 = vset.pattern.permute.xlu0 0
    %2217 = vperm.xlu0 %2216, %v2035
    %v2218 = vpop.permute.xlu0 %2217
    %2221 = vset.pattern.permute.xlu0 0
    %2222 = vperm.xlu0 %2221, %v2036
    %v2223 = vpop.permute.xlu0 %2222
    %2226 = vset.pattern.permute.xlu0 0
    %2227 = vperm.xlu0 %2226, %v2037
    %v2228 = vpop.permute.xlu0 %2227
    %2231 = vset.pattern.permute.xlu0 0
    %2232 = vperm.xlu0 %2231, %v2038
    %v2233 = vpop.permute.xlu0 %2232
    %2236 = vset.pattern.permute.xlu0 0
    %2237 = vperm.xlu0 %2236, %v2039
    %v2238 = vpop.permute.xlu0 %2237
    %2241 = vset.pattern.permute.xlu0 0
    %2242 = vperm.xlu0 %2241, %v2040
    %v2243 = vpop.permute.xlu0 %2242
    %2246 = vset.pattern.permute.xlu0 0
    %2247 = vperm.xlu0 %2246, %v2041
    %v2248 = vpop.permute.xlu0 %2247
    %2251 = vset.pattern.permute.xlu0 0
    %2252 = vperm.xlu0 %2251, %v2042
    %v2253 = vpop.permute.xlu0 %2252
    %2256 = vset.pattern.permute.xlu0 0
    %2257 = vperm.xlu0 %2256, %v2043
    %v2258 = vpop.permute.xlu0 %2257
    %2261 = vset.pattern.permute.xlu0 0
    %2262 = vperm.xlu0 %2261, %v2044
    %v2263 = vpop.permute.xlu0 %2262
    %2266 = vset.pattern.permute.xlu0 0
    %2267 = vperm.xlu0 %2266, %v2045
    %v2268 = vpop.permute.xlu0 %2267
    %2271 = vset.pattern.permute.xlu0 0
    %2272 = vperm.xlu0 %2271, %v2046
    %v2273 = vpop.permute.xlu0 %2272
    %2276 = vset.pattern.permute.xlu0 0
    %2277 = vperm.xlu0 %2276, %v2047
    %v2278 = vpop.permute.xlu0 %2277
    %2281 = vset.pattern.permute.xlu0 0
    %2282 = vperm.xlu0 %2281, %v2048
    %v2283 = vpop.permute.xlu0 %2282
    %2286 = vset.pattern.permute.xlu0 0
    %2287 = vperm.xlu0 %2286, %v2049
    %v2288 = vpop.permute.xlu0 %2287
    %2291 = vset.pattern.permute.xlu0 0
    %2292 = vperm.xlu0 %2291, %v2050
    %v2293 = vpop.permute.xlu0 %2292
    %2296 = vset.pattern.permute.xlu0 0
    %2297 = vperm.xlu0 %2296, %v2051
    %v2298 = vpop.permute.xlu0 %2297
    %2301 = vset.pattern.permute.xlu0 0
    %2302 = vperm.xlu0 %2301, %v2052
    %v2303 = vpop.permute.xlu0 %2302
    %2306 = vset.pattern.permute.xlu0 0
    %2307 = vperm.xlu0 %2306, %v2053
    %v2308 = vpop.permute.xlu0 %2307
    %2311 = vset.pattern.permute.xlu0 0
    %2312 = vperm.xlu0 %2311, %v2054
    %v2313 = vpop.permute.xlu0 %2312
    %2316 = vset.pattern.permute.xlu0 0
    %2317 = vperm.xlu0 %2316, %v2055
    %v2318 = vpop.permute.xlu0 %2317
    %2321 = vset.pattern.permute.xlu0 0
    %2322 = vperm.xlu0 %2321, %v2056
    %v2323 = vpop.permute.xlu0 %2322
    %2326 = vset.pattern.permute.xlu0 0
    %2327 = vperm.xlu0 %2326, %v2057
    %v2328 = vpop.permute.xlu0 %2327
    %2331 = vset.pattern.permute.xlu0 0
    %2332 = vperm.xlu0 %2331, %v2058
    %v2333 = vpop.permute.xlu0 %2332
    %2336 = vset.pattern.permute.xlu0 0
    %2337 = vperm.xlu0 %2336, %v2059
    %v2338 = vpop.permute.xlu0 %2337
    %2341 = vset.pattern.permute.xlu0 0
    %2342 = vperm.xlu0 %2341, %v2060
    %v2343 = vpop.permute.xlu0 %2342
    %2346 = vset.pattern.permute.xlu0 0
    %2347 = vperm.xlu0 %2346, %v2061
    %v2348 = vpop.permute.xlu0 %2347
    %2351 = vset.pattern.permute.xlu0 0
    %2352 = vperm.xlu0 %2351, %v2062
    %v2353 = vpop.permute.xlu0 %2352
    %2356 = vset.pattern.permute.xlu0 0
    %2357 = vperm.xlu0 %2356, %v2063
    %v2358 = vpop.permute.xlu0 %2357
    %2361 = vset.pattern.permute.xlu0 0
    %2362 = vperm.xlu0 %2361, %v2064
    %v2363 = vpop.permute.xlu0 %2362
    %2366 = vset.pattern.permute.xlu0 0
    %2367 = vperm.xlu0 %2366, %v2065
    %v2368 = vpop.permute.xlu0 %2367
    %2371 = vset.pattern.permute.xlu0 0
    %2372 = vperm.xlu0 %2371, %v2066
    %v2373 = vpop.permute.xlu0 %2372
    %2376 = vset.pattern.permute.xlu0 0
    %2377 = vperm.xlu0 %2376, %v2067
    %v2378 = vpop.permute.xlu0 %2377
    %2381 = vset.pattern.permute.xlu0 0
    %2382 = vperm.xlu0 %2381, %v2068
    %v2383 = vpop.permute.xlu0 %2382
    %2386 = vset.pattern.permute.xlu0 0
    %2387 = vperm.xlu0 %2386, %v2069
    %v2388 = vpop.permute.xlu0 %2387
    %2391 = vset.pattern.permute.xlu0 0
    %2392 = vperm.xlu0 %2391, %v2070
    %v2393 = vpop.permute.xlu0 %2392
    %2396 = vset.pattern.permute.xlu0 0
    %2397 = vperm.xlu0 %2396, %v2071
    %v2398 = vpop.permute.xlu0 %2397
    %2401 = vset.pattern.permute.xlu0 0
    %2402 = vperm.xlu0 %2401, %v2072
    %v2403 = vpop.permute.xlu0 %2402
    %2406 = vset.pattern.permute.xlu0 0
    %2407 = vperm.xlu0 %2406, %v2073
    %v2408 = vpop.permute.xlu0 %2407
    %2411 = vset.pattern.permute.xlu0 0
    %2412 = vperm.xlu0 %2411, %v2074
    %v2413 = vpop.permute.xlu0 %2412
    %2416 = vset.pattern.permute.xlu0 0
    %2417 = vperm.xlu0 %2416, %v2075
    %v2418 = vpop.permute.xlu0 %2417
    %2421 = vset.pattern.permute.xlu0 0
    %2422 = vperm.xlu0 %2421, %v2076
    %v2423 = vpop.permute.xlu0 %2422
    %2426 = vset.pattern.permute.xlu0 0
    %2427 = vperm.xlu0 %2426, %v2077
    %v2428 = vpop.permute.xlu0 %2427
    %2431 = vset.pattern.permute.xlu0 0
    %2432 = vperm.xlu0 %2431, %v2078
    %v2433 = vpop.permute.xlu0 %2432
    %2436 = vset.pattern.permute.xlu0 0
    %2437 = vperm.xlu0 %2436, %v2079
    %v2438 = vpop.permute.xlu0 %2437
    %2441 = vset.pattern.permute.xlu0 0
    %2442 = vperm.xlu0 %2441, %v2080
    %v2443 = vpop.permute.xlu0 %2442
    %2446 = vset.pattern.permute.xlu0 0
    %2447 = vperm.xlu0 %2446, %v2081
    %v2448 = vpop.permute.xlu0 %2447
    %2451 = vset.pattern.permute.xlu0 0
    %2452 = vperm.xlu0 %2451, %v2082
    %v2453 = vpop.permute.xlu0 %2452
    %2456 = vset.pattern.permute.xlu0 0
    %2457 = vperm.xlu0 %2456, %v2083
    %v2458 = vpop.permute.xlu0 %2457
    %2461 = vset.pattern.permute.xlu0 0
    %2462 = vperm.xlu0 %2461, %v2084
    %v2463 = vpop.permute.xlu0 %2462
    %2466 = vset.pattern.permute.xlu0 0
    %2467 = vperm.xlu0 %2466, %v2085
    %v2468 = vpop.permute.xlu0 %2467
    %v2470 = vmul.f32 %v2153, %v2086
    %v2471 = vmul.f32 %v2158, %v2087
    %v2472 = vmul.f32 %v2163, %v2088
    %v2473 = vmul.f32 %v2168, %v2089
    %v2474 = vmul.f32 %v2173, %v2090
    %v2475 = vmul.f32 %v2178, %v2091
    %v2476 = vmul.f32 %v2183, %v2092
    %v2477 = vmul.f32 %v2188, %v2093
    %v2478 = vmul.f32 %v2193, %v2094
    %v2479 = vmul.f32 %v2198, %v2095
    %v2480 = vmul.f32 %v2203, %v2096
    %v2481 = vmul.f32 %v2208, %v2097
    %v2482 = vmul.f32 %v2213, %v2098
    %v2483 = vmul.f32 %v2218, %v2099
    %v2484 = vmul.f32 %v2223, %v2100
    %v2485 = vmul.f32 %v2228, %v2101
    %v2486 = vmul.f32 %v2233, %v2102
    %v2487 = vmul.f32 %v2238, %v2103
    %v2488 = vmul.f32 %v2243, %v2104
    %v2489 = vmul.f32 %v2248, %v2105
    %v2490 = vmul.f32 %v2253, %v2106
    %v2491 = vmul.f32 %v2258, %v2107
    %v2492 = vmul.f32 %v2263, %v2108
    %v2493 = vmul.f32 %v2268, %v2109
    %v2494 = vmul.f32 %v2273, %v2110
    %v2495 = vmul.f32 %v2278, %v2111
    %v2496 = vmul.f32 %v2283, %v2112
    %v2497 = vmul.f32 %v2288, %v2113
    %v2498 = vmul.f32 %v2293, %v2114
    %v2499 = vmul.f32 %v2298, %v2115
    %v2500 = vmul.f32 %v2303, %v2116
    %v2501 = vmul.f32 %v2308, %v2117
    %v2502 = vmul.f32 %v2313, %v2118
    %v2503 = vmul.f32 %v2318, %v2119
    %v2504 = vmul.f32 %v2323, %v2120
    %v2505 = vmul.f32 %v2328, %v2121
    %v2506 = vmul.f32 %v2333, %v2122
    %v2507 = vmul.f32 %v2338, %v2123
    %v2508 = vmul.f32 %v2343, %v2124
    %v2509 = vmul.f32 %v2348, %v2125
    %v2510 = vmul.f32 %v2353, %v2126
    %v2511 = vmul.f32 %v2358, %v2127
    %v2512 = vmul.f32 %v2363, %v2128
    %v2513 = vmul.f32 %v2368, %v2129
    %v2514 = vmul.f32 %v2373, %v2130
    %v2515 = vmul.f32 %v2378, %v2131
    %v2516 = vmul.f32 %v2383, %v2132
    %v2517 = vmul.f32 %v2388, %v2133
    %v2518 = vmul.f32 %v2393, %v2134
    %v2519 = vmul.f32 %v2398, %v2135
    %v2520 = vmul.f32 %v2403, %v2136
    %v2521 = vmul.f32 %v2408, %v2137
    %v2522 = vmul.f32 %v2413, %v2138
    %v2523 = vmul.f32 %v2418, %v2139
    %v2524 = vmul.f32 %v2423, %v2140
    %v2525 = vmul.f32 %v2428, %v2141
    %v2526 = vmul.f32 %v2433, %v2142
    %v2527 = vmul.f32 %v2438, %v2143
    %v2528 = vmul.f32 %v2443, %v2144
    %v2529 = vmul.f32 %v2448, %v2145
    %v2530 = vmul.f32 %v2453, %v2146
    %v2531 = vmul.f32 %v2458, %v2147
    %v2532 = vmul.f32 %v2463, %v2148
    %v2533 = vmul.f32 %v2468, %v2149
    %v2534 = vsel %vm373, %v2470, 0.0
    %v2535 = vsel %vm373, %v2486, 0.0
    %v2536 = vadd.f32 %v2534, %v2535
    %v2537 = vsel %vm373, %v2502, 0.0
    %v2538 = vadd.f32 %v2536, %v2537
    %v2539 = vsel %vm373, %v2518, 0.0
    %v2540 = vadd.f32 %v2538, %v2539
    %v2541 = vsel %vm373, %v2471, 0.0
    %v2542 = vsel %vm373, %v2487, 0.0
    %v2543 = vadd.f32 %v2541, %v2542
    %v2544 = vsel %vm373, %v2503, 0.0
    %v2545 = vadd.f32 %v2543, %v2544
    %v2546 = vsel %vm373, %v2519, 0.0
    %v2547 = vadd.f32 %v2545, %v2546
    %v2548 = vsel %vm373, %v2472, 0.0
    %v2549 = vsel %vm373, %v2488, 0.0
    %v2550 = vadd.f32 %v2548, %v2549
    %v2551 = vsel %vm373, %v2504, 0.0
    %v2552 = vadd.f32 %v2550, %v2551
    %v2553 = vsel %vm373, %v2520, 0.0
    %v2554 = vadd.f32 %v2552, %v2553
    %v2555 = vsel %vm373, %v2473, 0.0
    %v2556 = vsel %vm373, %v2489, 0.0
    %v2557 = vadd.f32 %v2555, %v2556
    %v2558 = vsel %vm373, %v2505, 0.0
    %v2559 = vadd.f32 %v2557, %v2558
    %v2560 = vsel %vm373, %v2521, 0.0
    %v2561 = vadd.f32 %v2559, %v2560
    %v2562 = vsel %vm373, %v2474, 0.0
    %v2563 = vsel %vm373, %v2490, 0.0
    %v2564 = vadd.f32 %v2562, %v2563
    %v2565 = vsel %vm373, %v2506, 0.0
    %v2566 = vadd.f32 %v2564, %v2565
    %v2567 = vsel %vm373, %v2522, 0.0
    %v2568 = vadd.f32 %v2566, %v2567
    %v2569 = vsel %vm373, %v2475, 0.0
    %v2570 = vsel %vm373, %v2491, 0.0
    %v2571 = vadd.f32 %v2569, %v2570
    %v2572 = vsel %vm373, %v2507, 0.0
    %v2573 = vadd.f32 %v2571, %v2572
    %v2574 = vsel %vm373, %v2523, 0.0
    %v2575 = vadd.f32 %v2573, %v2574
    %v2576 = vsel %vm373, %v2476, 0.0
    %v2577 = vsel %vm373, %v2492, 0.0
    %v2578 = vadd.f32 %v2576, %v2577
    %v2579 = vsel %vm373, %v2508, 0.0
    %v2580 = vadd.f32 %v2578, %v2579
    %v2581 = vsel %vm373, %v2524, 0.0
    %v2582 = vadd.f32 %v2580, %v2581
    %v2583 = vsel %vm373, %v2477, 0.0
    %v2584 = vsel %vm373, %v2493, 0.0
    %v2585 = vadd.f32 %v2583, %v2584
    %v2586 = vsel %vm373, %v2509, 0.0
    %v2587 = vadd.f32 %v2585, %v2586
    %v2588 = vsel %vm373, %v2525, 0.0
    %v2589 = vadd.f32 %v2587, %v2588
    %v2590 = vsel %vm373, %v2478, 0.0
    %v2591 = vsel %vm373, %v2494, 0.0
    %v2592 = vadd.f32 %v2590, %v2591
    %v2593 = vsel %vm373, %v2510, 0.0
    %v2594 = vadd.f32 %v2592, %v2593
    %v2595 = vsel %vm373, %v2526, 0.0
    %v2596 = vadd.f32 %v2594, %v2595
    %v2597 = vsel %vm373, %v2479, 0.0
    %v2598 = vsel %vm373, %v2495, 0.0
    %v2599 = vadd.f32 %v2597, %v2598
    %v2600 = vsel %vm373, %v2511, 0.0
    %v2601 = vadd.f32 %v2599, %v2600
    %v2602 = vsel %vm373, %v2527, 0.0
    %v2603 = vadd.f32 %v2601, %v2602
    %v2604 = vsel %vm373, %v2480, 0.0
    %v2605 = vsel %vm373, %v2496, 0.0
    %v2606 = vadd.f32 %v2604, %v2605
    %v2607 = vsel %vm373, %v2512, 0.0
    %v2608 = vadd.f32 %v2606, %v2607
    %v2609 = vsel %vm373, %v2528, 0.0
    %v2610 = vadd.f32 %v2608, %v2609
    %v2611 = vsel %vm373, %v2481, 0.0
    %v2612 = vsel %vm373, %v2497, 0.0
    %v2613 = vadd.f32 %v2611, %v2612
    %v2614 = vsel %vm373, %v2513, 0.0
    %v2615 = vadd.f32 %v2613, %v2614
    %v2616 = vsel %vm373, %v2529, 0.0
    %v2617 = vadd.f32 %v2615, %v2616
    %v2618 = vsel %vm373, %v2482, 0.0
    %v2619 = vsel %vm373, %v2498, 0.0
    %v2620 = vadd.f32 %v2618, %v2619
    %v2621 = vsel %vm373, %v2514, 0.0
    %v2622 = vadd.f32 %v2620, %v2621
    %v2623 = vsel %vm373, %v2530, 0.0
    %v2624 = vadd.f32 %v2622, %v2623
    %v2625 = vsel %vm373, %v2483, 0.0
    %v2626 = vsel %vm373, %v2499, 0.0
    %v2627 = vadd.f32 %v2625, %v2626
    %v2628 = vsel %vm373, %v2515, 0.0
    %v2629 = vadd.f32 %v2627, %v2628
    %v2630 = vsel %vm373, %v2531, 0.0
    %v2631 = vadd.f32 %v2629, %v2630
    %v2632 = vsel %vm373, %v2484, 0.0
    %v2633 = vsel %vm373, %v2500, 0.0
    %v2634 = vadd.f32 %v2632, %v2633
    %v2635 = vsel %vm373, %v2516, 0.0
    %v2636 = vadd.f32 %v2634, %v2635
    %v2637 = vsel %vm373, %v2532, 0.0
    %v2638 = vadd.f32 %v2636, %v2637
    %v2639 = vsel %vm373, %v2485, 0.0
    %v2640 = vsel %vm373, %v2501, 0.0
    %v2641 = vadd.f32 %v2639, %v2640
    %v2642 = vsel %vm373, %v2517, 0.0
    %v2643 = vadd.f32 %v2641, %v2642
    %v2644 = vsel %vm373, %v2533, 0.0
    %v2645 = vadd.f32 %v2643, %v2644
    %v2646 = vpack.c.bf16 %v2547, %v2540
    %v2647 = vpack.c.bf16 %v2561, %v2554
    %v2648 = vpack.c.bf16 %v2575, %v2568
    %v2649 = vpack.c.bf16 %v2589, %v2582
    %v2650 = vpack.c.bf16 %v2603, %v2596
    %v2651 = vpack.c.bf16 %v2617, %v2610
    %v2652 = vpack.c.bf16 %v2631, %v2624
    %v2653 = vpack.c.bf16 %v2645, %v2638
    %v2654 = vld [vmem:[%s4] sm:$0xf]
    %v2655 = vld [vmem:[%s5] sm:$0x1]
    %v2657 = vlaneseq
    %v2658 = vshrl.u32 %v2657, 7
    %v2659 = vsub.s32 0, %v2658
    %v2660 = vrot.slane %v2655, %v2659
    %v2663 = vsel %vm373, %v2646, 0
    %v2666 = vsel %vm373, %v2647, 0
    %v2669 = vsel %vm373, %v2648, 0
    %v2672 = vsel %vm373, %v2649, 0
    %v2675 = vsel %vm373, %v2650, 0
    %v2678 = vsel %vm373, %v2651, 0
    %v2681 = vsel %vm373, %v2652, 0
    %v2684 = vsel %vm373, %v2653, 0
    %vm2686 = vcmask 1043456
    %v2688 = vsel %vm2686, %v2654, 0
    %2690 = vmatprep.subr.bf16.mxu0 0
    %2691 = vmatpush1.bf16.msra.mxu0 %v2688
    %2692 = vmatprep.subr.bf16.mxu0 0
    %2693 = vmatpush1.bf16.msra.mxu0 0
    %2694 = vmatprep.subr.bf16.mxu0 0
    %2695 = vmatpush1.bf16.msra.mxu0 0
    %2696 = vmatprep.subr.bf16.mxu0 0
    %2697 = vmatpush1.bf16.msra.mxu0 0
    %2698 = vmatprep.subr.bf16.mxu0 0
    %2699 = vmatpush1.bf16.msra.mxu0 0
    %2700 = vmatprep.subr.bf16.mxu0 0
    %2701 = vmatpush1.bf16.msra.mxu0 0
    %2702 = vmatprep.subr.bf16.mxu0 0
    %2703 = vmatpush1.bf16.msra.mxu0 0
    %2704 = vmatprep.subr.bf16.mxu0 0
    %2705 = vmatpush1.bf16.msra.mxu0 0
    %2706 = vmatprep.subr.bf16.mxu0 0
    %2707 = vmatpush1.bf16.msra.mxu0 0
    %2708 = vmatprep.subr.bf16.mxu0 0
    %2709 = vmatpush1.bf16.msra.mxu0 0
    %2710 = vmatprep.subr.bf16.mxu0 0
    %2711 = vmatpush1.bf16.msra.mxu0 0
    %2712 = vmatprep.subr.bf16.mxu0 0
    %2713 = vmatpush1.bf16.msra.mxu0 0
    %2714 = vmatprep.subr.bf16.mxu0 0
    %2715 = vmatpush1.bf16.msra.mxu0 0
    %2716 = vmatprep.subr.bf16.mxu0 0
    %2717 = vmatpush1.bf16.msra.mxu0 0
    %2718 = vmatprep.subr.bf16.mxu0 0
    %2719 = vmatpush1.bf16.msra.mxu0 0
    %2720 = vmatprep.subr.bf16.mxu0 0
    %2721 = vmatpush1.bf16.msra.mxu0 0
    %2722 = vmatprep.mubr.bf16.mxu0 0
    %2723 = vmatmul.mubr.bf16.gmra.mrb[0].mxu0 %v2663
    %v2724 = vpop.f32.mrb[0].mxu0
    %v2725 = vadd.f32 %v2660, %v2724
    %v2726 = vpop.f32.mrb[0].mxu0
    %v2727 = vpop.f32.mrb[0].mxu0
    %v2728 = vadd.f32 %v2660, %v2727
    %v2729 = vpop.f32.mrb[0].mxu0
    %2730 = vmatprep.mubr.bf16.mxu0 0
    %2731 = vmatmul.mubr.bf16.gmra.mrb[0].mxu0 %v2666
    %v2732 = vpop.f32.mrb[0].mxu0
    %v2733 = vadd.f32 %v2660, %v2732
    %v2734 = vpop.f32.mrb[0].mxu0
    %v2735 = vpop.f32.mrb[0].mxu0
    %v2736 = vadd.f32 %v2660, %v2735
    %v2737 = vpop.f32.mrb[0].mxu0
    %2738 = vmatprep.mubr.bf16.mxu0 0
    %2739 = vmatmul.mubr.bf16.gmra.mrb[0].mxu0 %v2669
    %v2740 = vpop.f32.mrb[0].mxu0
    %v2741 = vadd.f32 %v2660, %v2740
    %v2742 = vpop.f32.mrb[0].mxu0
    %v2743 = vpop.f32.mrb[0].mxu0
    %v2744 = vadd.f32 %v2660, %v2743
    %v2745 = vpop.f32.mrb[0].mxu0
    %2746 = vmatprep.mubr.bf16.mxu0 0
    %2747 = vmatmul.mubr.bf16.gmra.mrb[0].mxu0 %v2672
    %v2748 = vpop.f32.mrb[0].mxu0
    %v2749 = vadd.f32 %v2660, %v2748
    %v2750 = vpop.f32.mrb[0].mxu0
    %v2751 = vpop.f32.mrb[0].mxu0
    %v2752 = vadd.f32 %v2660, %v2751
    %v2753 = vpop.f32.mrb[0].mxu0
    %2754 = vmatprep.mubr.bf16.mxu0 0
    %2755 = vmatmul.mubr.bf16.gmra.mrb[0].mxu0 %v2675
    %v2756 = vpop.f32.mrb[0].mxu0
    %v2757 = vadd.f32 %v2660, %v2756
    %v2758 = vpop.f32.mrb[0].mxu0
    %v2759 = vpop.f32.mrb[0].mxu0
    %v2760 = vadd.f32 %v2660, %v2759
    %v2761 = vpop.f32.mrb[0].mxu0
    %2762 = vmatprep.mubr.bf16.mxu0 0
    %2763 = vmatmul.mubr.bf16.gmra.mrb[0].mxu0 %v2678
    %v2764 = vpop.f32.mrb[0].mxu0
    %v2765 = vadd.f32 %v2660, %v2764
    %v2766 = vpop.f32.mrb[0].mxu0
    %v2767 = vpop.f32.mrb[0].mxu0
    %v2768 = vadd.f32 %v2660, %v2767
    %v2769 = vpop.f32.mrb[0].mxu0
    %2770 = vmatprep.mubr.bf16.mxu0 0
    %2771 = vmatmul.mubr.bf16.gmra.mrb[0].mxu0 %v2681
    %v2772 = vpop.f32.mrb[0].mxu0
    %v2773 = vadd.f32 %v2660, %v2772
    %v2774 = vpop.f32.mrb[0].mxu0
    %v2775 = vpop.f32.mrb[0].mxu0
    %v2776 = vadd.f32 %v2660, %v2775
    %v2777 = vpop.f32.mrb[0].mxu0
    %2778 = vmatprep.mubr.bf16.mxu0 0
    %2779 = vmatmul.mubr.bf16.gmra.mrb[0].mxu0 %v2684
    %v2780 = vpop.f32.mrb[0].mxu0
    %v2781 = vadd.f32 %v2660, %v2780
    %v2782 = vpop.f32.mrb[0].mxu0
    %v2783 = vpop.f32.mrb[0].mxu0
    %v2784 = vadd.f32 %v2660, %v2783
    %v2785 = vpop.f32.mrb[0].mxu0
    %2786 = vdwg.mxu0
    %v2787 = vmax.f32 %v2725, 0.0
    %v2788 = vmax.f32 %v2728, 0.0
    %v2789 = vmax.f32 %v2733, 0.0
    %v2790 = vmax.f32 %v2736, 0.0
    %v2791 = vmax.f32 %v2741, 0.0
    %v2792 = vmax.f32 %v2744, 0.0
    %v2793 = vmax.f32 %v2749, 0.0
    %v2794 = vmax.f32 %v2752, 0.0
    %v2795 = vmax.f32 %v2757, 0.0
    %v2796 = vmax.f32 %v2760, 0.0
    %v2797 = vmax.f32 %v2765, 0.0
    %v2798 = vmax.f32 %v2768, 0.0
    %v2799 = vmax.f32 %v2773, 0.0
    %v2800 = vmax.f32 %v2776, 0.0
    %v2801 = vmax.f32 %v2781, 0.0
    %v2802 = vmax.f32 %v2784, 0.0
    %v2803 = vpack.c.bf16 %v2788, %v2787
    %v2804 = vpack.c.bf16 %v2790, %v2789
    %v2805 = vpack.c.bf16 %v2792, %v2791
    %v2806 = vpack.c.bf16 %v2794, %v2793
    %v2807 = vpack.c.bf16 %v2796, %v2795
    %v2808 = vpack.c.bf16 %v2798, %v2797
    %v2809 = vpack.c.bf16 %v2800, %v2799
    %v2810 = vpack.c.bf16 %v2802, %v2801
    %v2811 = vld [vmem:[%s6] sm:$0xf]
    %v2812 = vld [vmem:[%s6 + $0x4] sm:$0xf]
    %v2813 = vld [vmem:[%s6 + $0x8] sm:$0xf]
    %v2814 = vld [vmem:[%s6 + $0xc] sm:$0xf]
    %v2815 = vld [vmem:[%s7] sm:$0x1]
    %v2817 = vlaneseq
    %v2818 = vshrl.u32 %v2817, 7
    %v2819 = vsub.s32 0, %v2818
    %v2820 = vrot.slane %v2815, %v2819
    %v2826 = vunpack.c.l.b16 %v2811
    %v2827 = vunpack.c.l.b16 %v2812
    %v2828 = vunpack.c.l.b16 %v2813
    %v2829 = vunpack.c.l.b16 %v2814
    %v2830 = vpack.c.b16 %v2827, %v2826
    %v2831 = vpack.c.b16 %v2829, %v2828
    %vm2834 = vcmask 261120
    %v2836 = vsel %vm2834, %v2803, 0
    %v2839 = vsel %vm2834, %v2804, 0
    %v2842 = vsel %vm2834, %v2805, 0
    %v2845 = vsel %vm2834, %v2806, 0
    %v2848 = vsel %vm2834, %v2807, 0
    %v2851 = vsel %vm2834, %v2808, 0
    %v2854 = vsel %vm2834, %v2809, 0
    %v2857 = vsel %vm2834, %v2810, 0
    %2859 = vmatprep.subr.bf16.mxu0 0
    %2860 = vmatpush1.bf16.msra.mxu0 %v2830
    %2861 = vmatprep.subr.bf16.mxu0 0
    %2862 = vmatpush1.bf16.msra.mxu0 %v2831
    %2863 = vmatprep.subr.bf16.mxu0 0
    %2864 = vmatpush1.bf16.msra.mxu0 0
    %2865 = vmatprep.subr.bf16.mxu0 0
    %2866 = vmatpush1.bf16.msra.mxu0 0
    %2867 = vmatprep.subr.bf16.mxu0 0
    %2868 = vmatpush1.bf16.msra.mxu0 0
    %2869 = vmatprep.subr.bf16.mxu0 0
    %2870 = vmatpush1.bf16.msra.mxu0 0
    %2871 = vmatprep.subr.bf16.mxu0 0
    %2872 = vmatpush1.bf16.msra.mxu0 0
    %2873 = vmatprep.subr.bf16.mxu0 0
    %2874 = vmatpush1.bf16.msra.mxu0 0
    %2875 = vmatprep.subr.bf16.mxu0 0
    %2876 = vmatpush1.bf16.msra.mxu0 0
    %2877 = vmatprep.subr.bf16.mxu0 0
    %2878 = vmatpush1.bf16.msra.mxu0 0
    %2879 = vmatprep.subr.bf16.mxu0 0
    %2880 = vmatpush1.bf16.msra.mxu0 0
    %2881 = vmatprep.subr.bf16.mxu0 0
    %2882 = vmatpush1.bf16.msra.mxu0 0
    %2883 = vmatprep.subr.bf16.mxu0 0
    %2884 = vmatpush1.bf16.msra.mxu0 0
    %2885 = vmatprep.subr.bf16.mxu0 0
    %2886 = vmatpush1.bf16.msra.mxu0 0
    %2887 = vmatprep.subr.bf16.mxu0 0
    %2888 = vmatpush1.bf16.msra.mxu0 0
    %2889 = vmatprep.subr.bf16.mxu0 0
    %2890 = vmatpush1.bf16.msra.mxu0 0
    %2891 = vmatprep.mubr.bf16.mxu0 0
    %2892 = vmatmul.mubr.bf16.gmra.mrb[0].mxu0 %v2836
    %v2893 = vpop.f32.mrb[0].mxu0
    %v2894 = vadd.f32 %v2820, %v2893
    %v2895 = vpop.f32.mrb[0].mxu0
    %v2896 = vpop.f32.mrb[0].mxu0
    %v2897 = vadd.f32 %v2820, %v2896
    %v2898 = vpop.f32.mrb[0].mxu0
    %2899 = vmatprep.mubr.bf16.mxu0 0
    %2900 = vmatmul.mubr.bf16.gmra.mrb[0].mxu0 %v2839
    %v2901 = vpop.f32.mrb[0].mxu0
    %v2902 = vadd.f32 %v2820, %v2901
    %v2903 = vpop.f32.mrb[0].mxu0
    %v2904 = vpop.f32.mrb[0].mxu0
    %v2905 = vadd.f32 %v2820, %v2904
    %v2906 = vpop.f32.mrb[0].mxu0
    %2907 = vmatprep.mubr.bf16.mxu0 0
    %2908 = vmatmul.mubr.bf16.gmra.mrb[0].mxu0 %v2842
    %v2909 = vpop.f32.mrb[0].mxu0
    %v2910 = vadd.f32 %v2820, %v2909
    %v2911 = vpop.f32.mrb[0].mxu0
    %v2912 = vpop.f32.mrb[0].mxu0
    %v2913 = vadd.f32 %v2820, %v2912
    %v2914 = vpop.f32.mrb[0].mxu0
    %2915 = vmatprep.mubr.bf16.mxu0 0
    %2916 = vmatmul.mubr.bf16.gmra.mrb[0].mxu0 %v2845
    %v2917 = vpop.f32.mrb[0].mxu0
    %v2918 = vadd.f32 %v2820, %v2917
    %v2919 = vpop.f32.mrb[0].mxu0
    %v2920 = vpop.f32.mrb[0].mxu0
    %v2921 = vadd.f32 %v2820, %v2920
    %v2922 = vpop.f32.mrb[0].mxu0
    %2923 = vmatprep.mubr.bf16.mxu0 0
    %2924 = vmatmul.mubr.bf16.gmra.mrb[0].mxu0 %v2848
    %v2925 = vpop.f32.mrb[0].mxu0
    %v2926 = vadd.f32 %v2820, %v2925
    %v2927 = vpop.f32.mrb[0].mxu0
    %v2928 = vpop.f32.mrb[0].mxu0
    %v2929 = vadd.f32 %v2820, %v2928
    %v2930 = vpop.f32.mrb[0].mxu0
    %2931 = vmatprep.mubr.bf16.mxu0 0
    %2932 = vmatmul.mubr.bf16.gmra.mrb[0].mxu0 %v2851
    %v2933 = vpop.f32.mrb[0].mxu0
    %v2934 = vadd.f32 %v2820, %v2933
    %v2935 = vpop.f32.mrb[0].mxu0
    %v2936 = vpop.f32.mrb[0].mxu0
    %v2937 = vadd.f32 %v2820, %v2936
    %v2938 = vpop.f32.mrb[0].mxu0
    %2939 = vmatprep.mubr.bf16.mxu0 0
    %2940 = vmatmul.mubr.bf16.gmra.mrb[0].mxu0 %v2854
    %v2941 = vpop.f32.mrb[0].mxu0
    %v2942 = vadd.f32 %v2820, %v2941
    %v2943 = vpop.f32.mrb[0].mxu0
    %v2944 = vpop.f32.mrb[0].mxu0
    %v2945 = vadd.f32 %v2820, %v2944
    %v2946 = vpop.f32.mrb[0].mxu0
    %2947 = vmatprep.mubr.bf16.mxu0 0
    %2948 = vmatmul.mubr.bf16.gmra.mrb[0].mxu0 %v2857
    %v2949 = vpop.f32.mrb[0].mxu0
    %v2950 = vadd.f32 %v2820, %v2949
    %v2951 = vpop.f32.mrb[0].mxu0
    %v2952 = vpop.f32.mrb[0].mxu0
    %v2953 = vadd.f32 %v2820, %v2952
    %v2954 = vpop.f32.mrb[0].mxu0
    %2955 = vdwg.mxu0
    %2956 = vst.msk [vmem:[%s9] sm:$0xff] %vm2834, %v2894
    %2957 = vst.msk [vmem:[%s9 + $0x8] sm:$0xff] %vm2834, %v2897
    %2958 = vst.msk [vmem:[%s9 + $0x10] sm:$0xff] %vm2834, %v2902
    %2959 = vst.msk [vmem:[%s9 + $0x18] sm:$0xff] %vm2834, %v2905
    %2960 = vst.msk [vmem:[%s9 + $0x20] sm:$0xff] %vm2834, %v2910
    %2961 = vst.msk [vmem:[%s9 + $0x28] sm:$0xff] %vm2834, %v2913
    %2962 = vst.msk [vmem:[%s9 + $0x30] sm:$0xff] %vm2834, %v2918
    %2963 = vst.msk [vmem:[%s9 + $0x38] sm:$0xff] %vm2834, %v2921
    %2964 = vst.msk [vmem:[%s9 + $0x40] sm:$0xff] %vm2834, %v2926
    %2965 = vst.msk [vmem:[%s9 + $0x48] sm:$0xff] %vm2834, %v2929
    %2966 = vst.msk [vmem:[%s9 + $0x50] sm:$0xff] %vm2834, %v2934
    %2967 = vst.msk [vmem:[%s9 + $0x58] sm:$0xff] %vm2834, %v2937
    %2968 = vst.msk [vmem:[%s9 + $0x60] sm:$0xff] %vm2834, %v2942
    %2969 = vst.msk [vmem:[%s9 + $0x68] sm:$0xff] %vm2834, %v2945
    %2970 = vst.msk [vmem:[%s9 + $0x70] sm:$0xff] %vm2834, %v2950
    %2971 = vst.msk [vmem:[%s9 + $0x78] sm:$0xff] %vm2834, %v2953
  $region41: #{gat_layer_pallas.3} parent=0 // pred_fallthru
    _
  // Predicated region
  $region42: #{gat_layer_pallas.3} parent=0 // pred_check
    _
  $region43: #{gat_layer_pallas.3} parent=0 // pred_check_branch
    %2973 = sbr.rel (0) target = $region45
  $region44: #{gat_layer_pallas.3} parent=0 // pred_region
    _
  $region45: #{gat_layer_pallas.3} parent=0 // pred_fallthru
    _
  // Predicated region
  $region46: #{gat_layer_pallas.3} parent=0 // pred_check
    _
  $region47: #{gat_layer_pallas.3} parent=0 // pred_check_branch
    %2975 = sbr.rel (0) target = $region49
  $region48: #{gat_layer_pallas.3} parent=0 // pred_region
    _
  $region49: #{gat_layer_pallas.3} parent=0 // pred_fallthru
    _
  // Predicated region
  $region50: #{gat_layer_pallas.3} parent=0 // pred_check
    _
  $region51: #{gat_layer_pallas.3} parent=0 // pred_check_branch
    %2977 = sbr.rel (0) target = $region53
  $region52: #{gat_layer_pallas.3} parent=0 // pred_region
    _
  $region53: #{gat_layer_pallas.3} parent=0 // pred_fallthru
    _
  // Predicated region
  $region54: #{gat_layer_pallas.3} parent=0 // pred_check
    _
  $region55: #{gat_layer_pallas.3} parent=0 // pred_check_branch
    %2979 = sbr.rel (0) target = $region57
  $region56: #{gat_layer_pallas.3} parent=0 // pred_region
    _
  $region57: #{gat_layer_pallas.3} parent=0 // pred_fallthru
    _

</llo_original>
